<compile_context>
chip_gen: v6e
topology: v6e:2x2x1
jax: 0.10.0
libtpu: 0.0.40
codegen_flags: <defaults>
</compile_context>

<pallas_src>
import functools

import jax
import jax.numpy as jnp
from jax.experimental import pallas as pl
from jax.experimental.pallas import tpu as pltpu


def _round_up(x, m):
    return ((x + m - 1) // m) * m


def _lin_classifier_kernel(seq_len, vocab,
                           ids_ref,   # [TB, S] int32 (VMEM, per-tile)
                           emb_ref,   # [V, E]  embedding table (VMEM resident)
                           w_ref,     # [E, LP] weight (VMEM resident)
                           b_ref,     # [1, LP] bias   (VMEM resident)
                           out_ref):  # [TB, LP] log-probs tile
    tb = out_ref.shape[0]

    ids_v = ids_ref[...]                                           # [TB, S] int32
    vocab_iota = jax.lax.broadcasted_iota(jnp.int32, (tb, vocab), 1)

    # counts[b, v] = number of times token v appears in row b (exact in f32).
    counts = jnp.zeros((tb, vocab), jnp.float32)
    for s in range(seq_len):                                       # static unroll
        counts = counts + (ids_v[:, s:s + 1] == vocab_iota).astype(jnp.float32)

    # Embedding-bag mean as an MXU matmul, then the linear layer (MXU).
    pooled = jnp.dot(counts, emb_ref[...],
                     preferred_element_type=jnp.float32)           # [TB, E]
    pooled = pooled * jnp.float32(1.0 / seq_len)
    logits = jnp.dot(pooled, w_ref[...],
                     preferred_element_type=jnp.float32) + b_ref[...]  # [TB, LP]

    # log_softmax over the (padded) label axis; padded columns carry -1e30 bias.
    m = jnp.max(logits, axis=-1, keepdims=True)
    z = logits - m
    lse = jnp.log(jnp.sum(jnp.exp(z), axis=-1, keepdims=True))
    out_ref[...] = (z - lse).astype(out_ref.dtype)


def lin_classifier_forward(ids, emb_table, weight, bias, *, block_b=256):
    """ids: int32 [B, S]; emb_table: [V, E]; weight: [E, L]; bias: [L]."""
    B, S = ids.shape
    V, E = emb_table.shape
    L = bias.shape[0]

    # Lane-dense label padding: zero weight columns + very negative bias so the
    # padded logits contribute nothing to the softmax; sliced off after the call.
    # (On v6e/v7x, padding to a multiple of 256 is marginally better when L > 128.)
    LP = _round_up(max(L, 128), 128)
    w_pad = jnp.zeros((E, LP), dtype=weight.dtype).at[:, :L].set(weight)
    b_pad = jnp.full((1, LP), -1e30, dtype=jnp.float32).at[:, :L].set(
        bias.astype(jnp.float32))

    # Batch tile: as big as possible (feed full MXU rows), but guarantee >= 2
    # grid steps when B > 8 so dimension_semantics=("parallel",) can shard the
    # grid across both v7x TensorCores.
    block_b = _round_up(block_b, 8)
    if B <= 8:
        tb = _round_up(B, 8)
    else:
        tb = min(block_b, _round_up(pl.cdiv(B, 2), 8))
    n_bt = pl.cdiv(B, tb)
    B_pad = n_bt * tb

    # Padded batch rows use token id 0 and are sliced off afterwards.
    ids_pad = jnp.zeros((B_pad, S), dtype=jnp.int32).at[:B].set(ids.astype(jnp.int32))

    resident_bytes = (V * E + E * LP) * jnp.dtype(emb_table.dtype).itemsize
    if resident_bytes > 36 * 1024 * 1024:
        # TODO(synk): HBM double-buffered aggregated row-gather path for large
        # vocabularies (table does not fit the ~40 MiB v7x VMEM budget).
        raise NotImplementedError("embedding table too large for VMEM-resident path")

    kernel = functools.partial(_lin_classifier_kernel, S, V)

    grid_spec = pltpu.PrefetchScalarGridSpec(
        num_scalar_prefetch=0,
        grid=(n_bt,),
        in_specs=[
            pl.BlockSpec((tb, S), lambda bt: (bt, 0)),   # ids tile (VMEM, pipelined)
            pl.BlockSpec((V, E), lambda bt: (0, 0)),     # embedding table (resident)
            pl.BlockSpec((E, LP), lambda bt: (0, 0)),    # weight (resident)
            pl.BlockSpec((1, LP), lambda bt: (0, 0)),    # bias (resident)
        ],
        out_specs=pl.BlockSpec((tb, LP), lambda bt: (bt, 0)),
    )

    vmem_limit = min(64 * 1024 * 1024,
                     max(32 * 1024 * 1024, 3 * int(resident_bytes) + (8 << 20)))

    out = pl.pallas_call(
        kernel,
        out_shape=jax.ShapeDtypeStruct((B_pad, LP), jnp.float32),
        grid_spec=grid_spec,
        compiler_params=pltpu.CompilerParams(
            dimension_semantics=("parallel",),
            vmem_limit_bytes=vmem_limit),
    )(ids_pad, emb_table, w_pad, b_pad)

    return out[:B, :L]


if __name__ == "__main__":
    # Small synthetic shapes consistent with the module's forward; batch chosen
    # so the wrapper produces 2 batch tiles of 128 rows (real MXU-sized tiles).
    batch, seq_len = 256, 16
    vocab_size, emb_size, num_labels = 512, 128, 8

    key = jax.random.PRNGKey(0)
    k_emb, k_w, k_b, k_ids = jax.random.split(key, 4)

    # Deterministic "pretrained" embedding table and linear params.
    emb_table = jax.random.normal(k_emb, (vocab_size, emb_size), dtype=jnp.float32)
    weight = jax.random.normal(k_w, (emb_size, num_labels), dtype=jnp.float32) * 0.1
    bias = jax.random.normal(k_b, (num_labels,), dtype=jnp.float32) * 0.1

    ids = jax.random.randint(k_ids, (batch, seq_len), 0, vocab_size, dtype=jnp.int32)

    out = lin_classifier_forward(ids, emb_table, weight, bias)
    out = jax.block_until_ready(out)

    # Pure-JAX reference.
    e = emb_table[ids]                          # [B, S, E]
    pooled = e.sum(axis=1) / seq_len            # [B, E]
    ref = jax.nn.log_softmax(pooled @ weight + bias, axis=1)

    # Tolerance note: the kernel pools via an MXU counts-matmul while the
    # reference sums gathered rows in f32; MXU f32-emulation pass differences can
    # contribute up to ~1e-3 in the logits.  Real indexing/softmax bugs produce
    # errors orders of magnitude larger, so this check is still meaningful.
    err = float(jnp.abs(out - ref).max())
    assert jnp.allclose(out, ref, atol=5e-3, rtol=5e-3), err

    print("KERNEL_OK")
</pallas_src>

<mosaic_0001>
module attributes {stable_mosaic.version = 11 : i64} {
  func.func @_lin_classifier_kernel(%arg0: i32, %arg1: memref<128x16xi32, #tpu.memory_space<vmem>>, %arg2: memref<512x128xf32, #tpu.memory_space<vmem>>, %arg3: memref<128x128xf32, #tpu.memory_space<vmem>>, %arg4: memref<1x128xf32, #tpu.memory_space<vmem>>, %arg5: memref<128x128xf32, #tpu.memory_space<vmem>>) attributes {dimension_semantics = [#tpu.dimension_semantics<parallel>], iteration_bounds = array<i64: 2>, scalar_prefetch = 0 : i64, scratch_operands = 0 : i64, tpu.core_type = #tpu.core_type<tc>, window_params = [{transform_indices = @transform_0, window_bounds = array<i64: 128, 16>}, {pipeline_mode = #tpu.pipeline_mode<synchronous>, transform_indices = @transform_1, window_bounds = array<i64: 512, 128>}, {pipeline_mode = #tpu.pipeline_mode<synchronous>, transform_indices = @transform_2, window_bounds = array<i64: 128, 128>}, {pipeline_mode = #tpu.pipeline_mode<synchronous>, transform_indices = @transform_3, window_bounds = array<i64: 1, 128>}, {transform_indices = @transform_4, window_bounds = array<i64: 128, 128>}]} {
    %c0 = arith.constant 0 : index
    %c0_0 = arith.constant 0 : index
    %0 = vector.load %arg1[%c0, %c0_0] : memref<128x16xi32, #tpu.memory_space<vmem>>, vector<128x16xi32>
    %1 = tpu.iota {dimensions = array<i32: 1>} : vector<128x512xi32>
    %cst = arith.constant 0.000000e+00 : f32
    %2 = vector.broadcast %cst : f32 to vector<128x512xf32>
    %3 = vector.extract_strided_slice %0 {offsets = [0, 0], sizes = [128, 1], strides = [1, 1]} : vector<128x16xi32> to vector<128x1xi32>
    %4 = vector.broadcast %3 : vector<128x1xi32> to vector<128x512xi32>
    %5 = arith.cmpi eq, %4, %1 : vector<128x512xi32>
    %6 = arith.extui %5 : vector<128x512xi1> to vector<128x512xi32>
    %7 = arith.sitofp %6 : vector<128x512xi32> to vector<128x512xf32>
    %8 = arith.addf %2, %7 : vector<128x512xf32>
    %9 = vector.extract_strided_slice %0 {offsets = [0, 1], sizes = [128, 1], strides = [1, 1]} : vector<128x16xi32> to vector<128x1xi32>
    %10 = vector.broadcast %9 : vector<128x1xi32> to vector<128x512xi32>
    %11 = arith.cmpi eq, %10, %1 : vector<128x512xi32>
    %12 = arith.extui %11 : vector<128x512xi1> to vector<128x512xi32>
    %13 = arith.sitofp %12 : vector<128x512xi32> to vector<128x512xf32>
    %14 = arith.addf %8, %13 : vector<128x512xf32>
    %15 = vector.extract_strided_slice %0 {offsets = [0, 2], sizes = [128, 1], strides = [1, 1]} : vector<128x16xi32> to vector<128x1xi32>
    %16 = vector.broadcast %15 : vector<128x1xi32> to vector<128x512xi32>
    %17 = arith.cmpi eq, %16, %1 : vector<128x512xi32>
    %18 = arith.extui %17 : vector<128x512xi1> to vector<128x512xi32>
    %19 = arith.sitofp %18 : vector<128x512xi32> to vector<128x512xf32>
    %20 = arith.addf %14, %19 : vector<128x512xf32>
    %21 = vector.extract_strided_slice %0 {offsets = [0, 3], sizes = [128, 1], strides = [1, 1]} : vector<128x16xi32> to vector<128x1xi32>
    %22 = vector.broadcast %21 : vector<128x1xi32> to vector<128x512xi32>
    %23 = arith.cmpi eq, %22, %1 : vector<128x512xi32>
    %24 = arith.extui %23 : vector<128x512xi1> to vector<128x512xi32>
    %25 = arith.sitofp %24 : vector<128x512xi32> to vector<128x512xf32>
    %26 = arith.addf %20, %25 : vector<128x512xf32>
    %27 = vector.extract_strided_slice %0 {offsets = [0, 4], sizes = [128, 1], strides = [1, 1]} : vector<128x16xi32> to vector<128x1xi32>
    %28 = vector.broadcast %27 : vector<128x1xi32> to vector<128x512xi32>
    %29 = arith.cmpi eq, %28, %1 : vector<128x512xi32>
    %30 = arith.extui %29 : vector<128x512xi1> to vector<128x512xi32>
    %31 = arith.sitofp %30 : vector<128x512xi32> to vector<128x512xf32>
    %32 = arith.addf %26, %31 : vector<128x512xf32>
    %33 = vector.extract_strided_slice %0 {offsets = [0, 5], sizes = [128, 1], strides = [1, 1]} : vector<128x16xi32> to vector<128x1xi32>
    %34 = vector.broadcast %33 : vector<128x1xi32> to vector<128x512xi32>
    %35 = arith.cmpi eq, %34, %1 : vector<128x512xi32>
    %36 = arith.extui %35 : vector<128x512xi1> to vector<128x512xi32>
    %37 = arith.sitofp %36 : vector<128x512xi32> to vector<128x512xf32>
    %38 = arith.addf %32, %37 : vector<128x512xf32>
    %39 = vector.extract_strided_slice %0 {offsets = [0, 6], sizes = [128, 1], strides = [1, 1]} : vector<128x16xi32> to vector<128x1xi32>
    %40 = vector.broadcast %39 : vector<128x1xi32> to vector<128x512xi32>
    %41 = arith.cmpi eq, %40, %1 : vector<128x512xi32>
    %42 = arith.extui %41 : vector<128x512xi1> to vector<128x512xi32>
    %43 = arith.sitofp %42 : vector<128x512xi32> to vector<128x512xf32>
    %44 = arith.addf %38, %43 : vector<128x512xf32>
    %45 = vector.extract_strided_slice %0 {offsets = [0, 7], sizes = [128, 1], strides = [1, 1]} : vector<128x16xi32> to vector<128x1xi32>
    %46 = vector.broadcast %45 : vector<128x1xi32> to vector<128x512xi32>
    %47 = arith.cmpi eq, %46, %1 : vector<128x512xi32>
    %48 = arith.extui %47 : vector<128x512xi1> to vector<128x512xi32>
    %49 = arith.sitofp %48 : vector<128x512xi32> to vector<128x512xf32>
    %50 = arith.addf %44, %49 : vector<128x512xf32>
    %51 = vector.extract_strided_slice %0 {offsets = [0, 8], sizes = [128, 1], strides = [1, 1]} : vector<128x16xi32> to vector<128x1xi32>
    %52 = vector.broadcast %51 : vector<128x1xi32> to vector<128x512xi32>
    %53 = arith.cmpi eq, %52, %1 : vector<128x512xi32>
    %54 = arith.extui %53 : vector<128x512xi1> to vector<128x512xi32>
    %55 = arith.sitofp %54 : vector<128x512xi32> to vector<128x512xf32>
    %56 = arith.addf %50, %55 : vector<128x512xf32>
    %57 = vector.extract_strided_slice %0 {offsets = [0, 9], sizes = [128, 1], strides = [1, 1]} : vector<128x16xi32> to vector<128x1xi32>
    %58 = vector.broadcast %57 : vector<128x1xi32> to vector<128x512xi32>
    %59 = arith.cmpi eq, %58, %1 : vector<128x512xi32>
    %60 = arith.extui %59 : vector<128x512xi1> to vector<128x512xi32>
    %61 = arith.sitofp %60 : vector<128x512xi32> to vector<128x512xf32>
    %62 = arith.addf %56, %61 : vector<128x512xf32>
    %63 = vector.extract_strided_slice %0 {offsets = [0, 10], sizes = [128, 1], strides = [1, 1]} : vector<128x16xi32> to vector<128x1xi32>
    %64 = vector.broadcast %63 : vector<128x1xi32> to vector<128x512xi32>
    %65 = arith.cmpi eq, %64, %1 : vector<128x512xi32>
    %66 = arith.extui %65 : vector<128x512xi1> to vector<128x512xi32>
    %67 = arith.sitofp %66 : vector<128x512xi32> to vector<128x512xf32>
    %68 = arith.addf %62, %67 : vector<128x512xf32>
    %69 = vector.extract_strided_slice %0 {offsets = [0, 11], sizes = [128, 1], strides = [1, 1]} : vector<128x16xi32> to vector<128x1xi32>
    %70 = vector.broadcast %69 : vector<128x1xi32> to vector<128x512xi32>
    %71 = arith.cmpi eq, %70, %1 : vector<128x512xi32>
    %72 = arith.extui %71 : vector<128x512xi1> to vector<128x512xi32>
    %73 = arith.sitofp %72 : vector<128x512xi32> to vector<128x512xf32>
    %74 = arith.addf %68, %73 : vector<128x512xf32>
    %75 = vector.extract_strided_slice %0 {offsets = [0, 12], sizes = [128, 1], strides = [1, 1]} : vector<128x16xi32> to vector<128x1xi32>
    %76 = vector.broadcast %75 : vector<128x1xi32> to vector<128x512xi32>
    %77 = arith.cmpi eq, %76, %1 : vector<128x512xi32>
    %78 = arith.extui %77 : vector<128x512xi1> to vector<128x512xi32>
    %79 = arith.sitofp %78 : vector<128x512xi32> to vector<128x512xf32>
    %80 = arith.addf %74, %79 : vector<128x512xf32>
    %81 = vector.extract_strided_slice %0 {offsets = [0, 13], sizes = [128, 1], strides = [1, 1]} : vector<128x16xi32> to vector<128x1xi32>
    %82 = vector.broadcast %81 : vector<128x1xi32> to vector<128x512xi32>
    %83 = arith.cmpi eq, %82, %1 : vector<128x512xi32>
    %84 = arith.extui %83 : vector<128x512xi1> to vector<128x512xi32>
    %85 = arith.sitofp %84 : vector<128x512xi32> to vector<128x512xf32>
    %86 = arith.addf %80, %85 : vector<128x512xf32>
    %87 = vector.extract_strided_slice %0 {offsets = [0, 14], sizes = [128, 1], strides = [1, 1]} : vector<128x16xi32> to vector<128x1xi32>
    %88 = vector.broadcast %87 : vector<128x1xi32> to vector<128x512xi32>
    %89 = arith.cmpi eq, %88, %1 : vector<128x512xi32>
    %90 = arith.extui %89 : vector<128x512xi1> to vector<128x512xi32>
    %91 = arith.sitofp %90 : vector<128x512xi32> to vector<128x512xf32>
    %92 = arith.addf %86, %91 : vector<128x512xf32>
    %93 = vector.extract_strided_slice %0 {offsets = [0, 15], sizes = [128, 1], strides = [1, 1]} : vector<128x16xi32> to vector<128x1xi32>
    %94 = vector.broadcast %93 : vector<128x1xi32> to vector<128x512xi32>
    %95 = arith.cmpi eq, %94, %1 : vector<128x512xi32>
    %96 = arith.extui %95 : vector<128x512xi1> to vector<128x512xi32>
    %97 = arith.sitofp %96 : vector<128x512xi32> to vector<128x512xf32>
    %98 = arith.addf %92, %97 : vector<128x512xf32>
    %c0_1 = arith.constant 0 : index
    %c0_2 = arith.constant 0 : index
    %99 = vector.load %arg2[%c0_1, %c0_2] : memref<512x128xf32, #tpu.memory_space<vmem>>, vector<512x128xf32>
    %cst_3 = arith.constant dense<0.000000e+00> : vector<128x128xf32>
    %100 = tpu.matmul %98, %99, %cst_3 {dimension_numbers = #tpu.dot_dimension_numbers<[1], [0], [0], [1], [0, 0, 1, 1], [], []>} : vector<128x512xf32>, vector<512x128xf32>, vector<128x128xf32> -> vector<128x128xf32>
    %cst_4 = arith.constant 6.250000e-02 : f32
    %101 = vector.broadcast %cst_4 : f32 to vector<128x128xf32>
    %102 = arith.mulf %100, %101 : vector<128x128xf32>
    %c0_5 = arith.constant 0 : index
    %c0_6 = arith.constant 0 : index
    %103 = vector.load %arg3[%c0_5, %c0_6] : memref<128x128xf32, #tpu.memory_space<vmem>>, vector<128x128xf32>
    %cst_7 = arith.constant dense<0.000000e+00> : vector<128x128xf32>
    %104 = tpu.matmul %102, %103, %cst_7 {dimension_numbers = #tpu.dot_dimension_numbers<[1], [0], [0], [1], [0, 0, 1, 1], [], []>} : vector<128x128xf32>, vector<128x128xf32>, vector<128x128xf32> -> vector<128x128xf32>
    %c0_8 = arith.constant 0 : index
    %c0_9 = arith.constant 0 : index
    %105 = vector.load %arg4[%c0_8, %c0_9] : memref<1x128xf32, #tpu.memory_space<vmem>>, vector<1x128xf32>
    %106 = vector.broadcast %105 : vector<1x128xf32> to vector<128x128xf32>
    %107 = arith.addf %104, %106 : vector<128x128xf32>
    %cst_10 = arith.constant dense<0xFF800000> : vector<128xf32>
    %108 = vector.multi_reduction <maximumf>, %107, %cst_10 [1] : vector<128x128xf32> to vector<128xf32>
    %109 = vector.shape_cast %108 : vector<128xf32> to vector<128x1xf32>
    %110 = vector.broadcast %109 : vector<128x1xf32> to vector<128x128xf32>
    %111 = arith.subf %107, %110 : vector<128x128xf32>
    %112 = math.exp %111 : vector<128x128xf32>
    %cst_11 = arith.constant dense<0.000000e+00> : vector<128xf32>
    %113 = vector.multi_reduction <add>, %112, %cst_11 [1] : vector<128x128xf32> to vector<128xf32>
    %114 = vector.shape_cast %113 : vector<128xf32> to vector<128x1xf32>
    %115 = math.log %114 : vector<128x1xf32>
    %116 = vector.broadcast %115 : vector<128x1xf32> to vector<128x128xf32>
    %117 = arith.subf %111, %116 : vector<128x128xf32>
    %c0_12 = arith.constant 0 : index
    %c0_13 = arith.constant 0 : index
    %118 = vector.load %arg5[%c0_12, %c0_13] : memref<128x128xf32, #tpu.memory_space<vmem>>, vector<128x128xf32>
    tpu.vector_store %arg5[%c0_12, %c0_13], %117 {strides = array<i32>} : memref<128x128xf32, #tpu.memory_space<vmem>>, vector<128x128xf32>,
    return
  }
  func.func @transform_0(%arg0: i32) -> (i32, i32) {
    %c0_i32 = arith.constant 0 : i32
    %c0_i32_0 = arith.constant 0 : i32
    return %arg0, %c0_i32 : i32, i32
  }
  func.func @transform_1(%arg0: i32) -> (i32, i32) {
    %c0_i32 = arith.constant 0 : i32
    %c0_i32_0 = arith.constant 0 : i32
    %c0_i32_1 = arith.constant 0 : i32
    return %c0_i32, %c0_i32_0 : i32, i32
  }
  func.func @transform_2(%arg0: i32) -> (i32, i32) {
    %c0_i32 = arith.constant 0 : i32
    %c0_i32_0 = arith.constant 0 : i32
    %c0_i32_1 = arith.constant 0 : i32
    return %c0_i32, %c0_i32_0 : i32, i32
  }
  func.func @transform_3(%arg0: i32) -> (i32, i32) {
    %c0_i32 = arith.constant 0 : i32
    %c0_i32_0 = arith.constant 0 : i32
    %c0_i32_1 = arith.constant 0 : i32
    return %c0_i32, %c0_i32_0 : i32, i32
  }
  func.func @transform_4(%arg0: i32) -> (i32, i32) {
    %c0_i32 = arith.constant 0 : i32
    %c0_i32_0 = arith.constant 0 : i32
    return %arg0, %c0_i32 : i32, i32
  }
}

</mosaic_0001>

<llo_original>
// kernel: tpu_custom_call.1
$region0: #{tpu_custom_call.1}
  #allocation0 [shape = 'u32[]', space=smem, size = 0x4, offset = 0x4, fixed_abs, tag = 'smem constant byte address 0x4 - core index']
  #allocation1 [shape = 'u32[144,128]{1,0:T(1,128)}', space=vmem, size = 0x12000, scoped, tag = 'internal scratch']
  %s0 = inlined_call_operand.vmem [shape: s32[256,16], index: 0, kind: input, shape index: {}]
  %s1 = inlined_call_operand.hbm [shape: f32[512,128], index: 1, kind: input, shape index: {}]
  %s2 = inlined_call_operand.vmem [shape: f32[128,128], index: 2, kind: input, shape index: {}]
  %s3 = inlined_call_operand.vmem [shape: f32[1,128], index: 3, kind: input, shape index: {}]
  %s4 = inlined_call_operand.hbm [shape: f32[256,128], index: 4, kind: output, shape index: {}]
  %s5 = sld [smem:[#allocation0]]
  $region53: #{tpu_custom_call.1} parent=0
    _
  %s7 = ssub.s32 1, %s5
  %s8 = scalar_select 0, %s7, %s5
  $region1: #{tpu_custom_call.1} parent=0
    #allocation2 [shape = 'u8[262144]{0}', space=vmem, size = 0x40000, scoped, tag = 'input window, operand 1, single buffered']
    #allocation3 [shape = 's32[2]{0}', space=sflag, size = 0x8, scoped, tag = 'scoped memory for tpu_custom_call.1']
    #allocation4 [shape = 's32[2]{0}', space=sflag, size = 0x8, scoped, tag = 'scoped memory for tpu_custom_call.1']
    #allocation5 [shape = 'u8[131072]{0}', space=vmem, size = 0x20000, scoped, tag = 'output window, operand 0']
    %9 = vsyncpa [#allocation3], 0
    %10 = vsyncpa [#allocation4], 0
    %s11 = scalar_lea.sflag [#allocation4], 1
    %12 = vsyncpa %s11, 0
    loop: start=0, step=1, limit=4
    $region2: #{tpu_custom_call.1} parent=1 // loop_pre_header
      _
    $region3: #{tpu_custom_call.1} parent=1 // loop_header
      %s14 = sphi 0, %s18
      %p15 = scmp.ge.s32.totalorder %s14, 4
      %s24 = sphi 0, %s26
      %s27 = sphi 0, %s24
      %s28 = sphi 0, %s27
      %s44 = sphi 0, %s28
      %s48 = sphi 0, %s48
      %s50 = sphi 0, %s48
      %s51 = sphi 0, %s50
      %s65 = sphi 0, %s51
      %s69 = sphi 0, %s69
      %s71 = sphi 0, %s69
      %s72 = sphi 0, %s71
      %s86 = sphi 0, %s72
      %s90 = sphi 0, %s90
      %s92 = sphi 0, %s90
      %s93 = sphi 0, %s92
      %s107 = sphi 0, %s93
      %s113 = sphi 0, %s115
      %s116 = sphi 0, %s113
      %s117 = sphi 0, %s116
      %s133 = sphi 0, %s117
    $region4: #{tpu_custom_call.1} parent=1 // loop_header_branch
      %17 = sbr.rel (%p15) target = $region8
    $region5: #{tpu_custom_call.1} parent=1 // loop_body
      %s19 = ssub.s32 %s14, 1
      %s20 = ssub.s32 %s14, 2
      %s21 = sadd.s32 %s14, 1
      %s22 = ssub.s32 %s14, %s21
      %p23 = scmp.eq.s32.totalorder %s22, 0
      %s25 = sadd.s32 %s24, 1
      %s26 = scalar_select %p23, %s24, %s25
      %p29 = pneg %p23
      %p30 = scmp.eq.s32.totalorder %s14, 1
      %p31 = por %p29, %p30
      %p32 = scmp.ne.s32.totalorder %s24, %s27
      %p33 = scmp.eq.s32.totalorder %s14, 0
      %p34 = por %p32, %p33
      %p35 = scmp.ne.s32.totalorder %s24, %s27
      %p36 = scmp.eq.s32.totalorder %s19, 1
      %p37 = por %p35, %p36
      %p38 = scmp.ne.s32.totalorder %s27, %s28
      %p39 = scmp.eq.s32.totalorder %s19, 0
      %p40 = por %p38, %p39
      %p41 = scmp.ne.s32.totalorder %s27, %s28
      %p42 = scmp.eq.s32.totalorder %s20, 1
      %p43 = por %p41, %p42
      %p45 = scmp.ne.s32.totalorder %s28, %s44
      %p46 = scmp.eq.s32.totalorder %s20, 0
      %p47 = por %p45, %p46
      %s49 = sadd.s32 %s48, 1
      %p52 = scmp.eq.s32.totalorder %s14, 1
      %p53 = scmp.ne.s32.totalorder %s48, %s50
      %p54 = scmp.eq.s32.totalorder %s14, 0
      %p55 = por %p53, %p54
      %p56 = scmp.ne.s32.totalorder %s48, %s50
      %p57 = scmp.eq.s32.totalorder %s19, 1
      %p58 = por %p56, %p57
      %p59 = scmp.ne.s32.totalorder %s50, %s51
      %p60 = scmp.eq.s32.totalorder %s19, 0
      %p61 = por %p59, %p60
      %p62 = scmp.ne.s32.totalorder %s50, %s51
      %p63 = scmp.eq.s32.totalorder %s20, 1
      %p64 = por %p62, %p63
      %p66 = scmp.ne.s32.totalorder %s51, %s65
      %p67 = scmp.eq.s32.totalorder %s20, 0
      %p68 = por %p66, %p67
      %s70 = sadd.s32 %s69, 1
      %p73 = scmp.eq.s32.totalorder %s14, 1
      %p74 = scmp.ne.s32.totalorder %s69, %s71
      %p75 = scmp.eq.s32.totalorder %s14, 0
      %p76 = por %p74, %p75
      %p77 = scmp.ne.s32.totalorder %s69, %s71
      %p78 = scmp.eq.s32.totalorder %s19, 1
      %p79 = por %p77, %p78
      %p80 = scmp.ne.s32.totalorder %s71, %s72
      %p81 = scmp.eq.s32.totalorder %s19, 0
      %p82 = por %p80, %p81
      %p83 = scmp.ne.s32.totalorder %s71, %s72
      %p84 = scmp.eq.s32.totalorder %s20, 1
      %p85 = por %p83, %p84
      %p87 = scmp.ne.s32.totalorder %s72, %s86
      %p88 = scmp.eq.s32.totalorder %s20, 0
      %p89 = por %p87, %p88
      %s91 = sadd.s32 %s90, 1
      %p94 = scmp.eq.s32.totalorder %s14, 1
      %p95 = scmp.ne.s32.totalorder %s90, %s92
      %p96 = scmp.eq.s32.totalorder %s14, 0
      %p97 = por %p95, %p96
      %p98 = scmp.ne.s32.totalorder %s90, %s92
      %p99 = scmp.eq.s32.totalorder %s19, 1
      %p100 = por %p98, %p99
      %p101 = scmp.ne.s32.totalorder %s92, %s93
      %p102 = scmp.eq.s32.totalorder %s19, 0
      %p103 = por %p101, %p102
      %p104 = scmp.ne.s32.totalorder %s92, %s93
      %p105 = scmp.eq.s32.totalorder %s20, 1
      %p106 = por %p104, %p105
      %p108 = scmp.ne.s32.totalorder %s93, %s107
      %p109 = scmp.eq.s32.totalorder %s20, 0
      %p110 = por %p108, %p109
      %s111 = ssub.s32 %s14, %s21
      %p112 = scmp.eq.s32.totalorder %s111, 0
      %s114 = sadd.s32 %s113, 1
      %s115 = scalar_select %p112, %s113, %s114
      %p118 = pneg %p112
      %p119 = scmp.eq.s32.totalorder %s14, 1
      %p120 = por %p118, %p119
      %p121 = scmp.ne.s32.totalorder %s113, %s116
      %p122 = scmp.eq.s32.totalorder %s14, 0
      %p123 = por %p121, %p122
      %p124 = scmp.ne.s32.totalorder %s113, %s116
      %p125 = scmp.eq.s32.totalorder %s19, 1
      %p126 = por %p124, %p125
      %p127 = scmp.ne.s32.totalorder %s116, %s117
      %p128 = scmp.eq.s32.totalorder %s19, 0
      %p129 = por %p127, %p128
      %p130 = scmp.ne.s32.totalorder %s116, %s117
      %p131 = scmp.eq.s32.totalorder %s20, 1
      %p132 = por %p130, %p131
      %p134 = scmp.ne.s32.totalorder %s117, %s133
      %p135 = scmp.eq.s32.totalorder %s20, 0
      %p136 = por %p134, %p135
      %p137 = scmp.le.s32.totalorder 1, %s14
      %p138 = scmp.lt.s32.totalorder %s14, 3
      %p139 = pnand %p137, %p138
      %p140 = pneg %p139
      // Predicated region
      $region9: #{tpu_custom_call.1} parent=5 // pred_check
        _
      $region10: #{tpu_custom_call.1} parent=5 // pred_check_branch
        %142 = sbr.rel (%p139) target = $region12
      $region11: #{tpu_custom_call.1} parent=5 // pred_region
        %s143 = ssub.s32 %s14, 1
        // Predicated region
        $region13: #{tpu_custom_call.1} parent=11 // pred_check
          %p144 = pneg %p61
        $region14: #{tpu_custom_call.1} parent=11 // pred_check_branch
          %146 = sbr.rel (%p144) target = $region16
        $region15: #{tpu_custom_call.1} parent=11 // pred_region
          %s148 = ssub.s32 8192, 8192
          %149 = vsyncadd [#allocation3], %s148
          %s150 = sshll.u32 [#allocation2], 4
          %s151 = int_to_ptr.vmem [resolvable:$true] %s150
          %156 = dma.hbm_to_vmem [thread:$0]  %s1, 8192, %s151, [#allocation3], 128, 128, 8
        $region16: #{tpu_custom_call.1} parent=11 // pred_fallthru
          _
        // Predicated region
        $region17: #{tpu_custom_call.1} parent=11 // pred_check
          %p157 = pneg %p82
        $region18: #{tpu_custom_call.1} parent=11 // pred_check_branch
          %159 = sbr.rel (%p157) target = $region20
        $region19: #{tpu_custom_call.1} parent=11 // pred_region
          _
        $region20: #{tpu_custom_call.1} parent=11 // pred_fallthru
          _
        // Predicated region
        $region21: #{tpu_custom_call.1} parent=11 // pred_check
          %p160 = pneg %p103
        $region22: #{tpu_custom_call.1} parent=11 // pred_check_branch
          %162 = sbr.rel (%p160) target = $region24
        $region23: #{tpu_custom_call.1} parent=11 // pred_region
          _
        $region24: #{tpu_custom_call.1} parent=11 // pred_fallthru
          _
      $region12: #{tpu_custom_call.1} parent=5 // pred_fallthru
        _
      %p163 = scmp.lt.s32.totalorder %s14, 2
      // Predicated region
      $region25: #{tpu_custom_call.1} parent=5 // pred_check
        %p164 = pneg %p163
      $region26: #{tpu_custom_call.1} parent=5 // pred_check_branch
        %166 = sbr.rel (%p164) target = $region28
      $region27: #{tpu_custom_call.1} parent=5 // pred_region
        // Predicated region
        $region29: #{tpu_custom_call.1} parent=27 // pred_check
          %p167 = pneg %p34
        $region30: #{tpu_custom_call.1} parent=27 // pred_check_branch
          %169 = sbr.rel (%p167) target = $region32
        $region31: #{tpu_custom_call.1} parent=27 // pred_region
          %s170 = smul.u32 16, %s14
          %p171 = scmp.lt.s32.totalorder %s170, 31
          %s172 = scalar_select %p171, %s170, 31
          %s173 = smul.addr %s172, 8
          %s174 = scalar_lea.vmem %s0, %s173
          %s175 = smul.u32 16, %s14
        $region32: #{tpu_custom_call.1} parent=27 // pred_fallthru
          _
      $region28: #{tpu_custom_call.1} parent=5 // pred_fallthru
        _
      %p176 = scmp.le.s32.totalorder 1, %s14
      %p177 = scmp.lt.s32.totalorder %s14, 3
      %p178 = pnand %p176, %p177
      %p179 = pneg %p178
      // Predicated region
      $region33: #{tpu_custom_call.1} parent=5 // pred_check
        _
      $region34: #{tpu_custom_call.1} parent=5 // pred_check_branch
        %181 = sbr.rel (%p178) target = $region36
      $region35: #{tpu_custom_call.1} parent=5 // pred_region
        %s182 = ssub.s32 %s14, 1
        // Predicated region
        $region37: #{tpu_custom_call.1} parent=35 // pred_check
          %p183 = pneg %p61
        $region38: #{tpu_custom_call.1} parent=35 // pred_check_branch
          %185 = sbr.rel (%p183) target = $region40
        $region39: #{tpu_custom_call.1} parent=35 // pred_region
          %186 = dma.done [#allocation3], 8192
        $region40: #{tpu_custom_call.1} parent=35 // pred_fallthru
          _
        %s187 = smul.u32 16, %s19
        %p188 = scmp.lt.s32.totalorder %s187, 31
        %s189 = scalar_select %p188, %s187, 31
        %s190 = smul.addr %s189, 8
        %s191 = scalar_lea.vmem %s0, %s190
        %p192 = pneg %p40
        %p193 = pneg %p37
        %p194 = pneg %p61
        %p195 = pneg %p58
        %p196 = pneg %p82
        %p197 = pneg %p79
        %p198 = pneg %p103
        %p199 = pneg %p100
        %p200 = pneg %p129
        %p201 = pneg %p126
        %s202 = sand.u32 %s116, 1
        %s203 = scalar_lea.sflag [#allocation4], %s202
        %s204 = sand.u32 %s116, 1
        %s205 = smul.addr %s204, 128
        %s206 = scalar_lea.vmem [#allocation5], %s205
        %s207 = smul.u32 16, %s19
        %p208 = scmp.lt.s32.totalorder %s207, 31
        %s209 = scalar_select %p208, %s207, 31
        %s210 = smul.addr %s209, 8
        %s211 = scalar_lea.vmem %s0, %s210
        %s212 = smul.u32 16, %s19
        %s213 = smul.u32 16, %s19
        %v214 = vld [vmem:[%s211] sm:$0xff]
        %v215 = vld [vmem:[%s211 + $0x8] sm:$0xff]
        %v216 = vld [vmem:[%s211 + $0x10] sm:$0xff]
        %v217 = vld [vmem:[%s211 + $0x18] sm:$0xff]
        %v218 = vld [vmem:[%s211 + $0x20] sm:$0xff]
        %v219 = vld [vmem:[%s211 + $0x28] sm:$0xff]
        %v220 = vld [vmem:[%s211 + $0x30] sm:$0xff]
        %v221 = vld [vmem:[%s211 + $0x38] sm:$0xff]
        %v222 = vld [vmem:[%s211 + $0x40] sm:$0xff]
        %v223 = vld [vmem:[%s211 + $0x48] sm:$0xff]
        %v224 = vld [vmem:[%s211 + $0x50] sm:$0xff]
        %v225 = vld [vmem:[%s211 + $0x58] sm:$0xff]
        %v226 = vld [vmem:[%s211 + $0x60] sm:$0xff]
        %v227 = vld [vmem:[%s211 + $0x68] sm:$0xff]
        %v228 = vld [vmem:[%s211 + $0x70] sm:$0xff]
        %v229 = vld [vmem:[%s211 + $0x78] sm:$0xff]
        %v230 = vlaneseq
        %v231 = vand.u32 %v230, 127
        %v232 = vadd.s32 %v231, 128
        %v233 = vadd.s32 %v231, 256
        %v234 = vadd.s32 %v231, 384
        %235 = vset.pattern.permute.xlu0 0
        %236 = vperm.xlu0 %235, %v214
        %v237 = vpop.permute.xlu0 %236
        %238 = vset.pattern.permute.xlu0 0
        %239 = vperm.xlu0 %238, %v215
        %v240 = vpop.permute.xlu0 %239
        %241 = vset.pattern.permute.xlu0 0
        %242 = vperm.xlu0 %241, %v216
        %v243 = vpop.permute.xlu0 %242
        %244 = vset.pattern.permute.xlu0 0
        %245 = vperm.xlu0 %244, %v217
        %v246 = vpop.permute.xlu0 %245
        %247 = vset.pattern.permute.xlu0 0
        %248 = vperm.xlu0 %247, %v218
        %v249 = vpop.permute.xlu0 %248
        %250 = vset.pattern.permute.xlu0 0
        %251 = vperm.xlu0 %250, %v219
        %v252 = vpop.permute.xlu0 %251
        %253 = vset.pattern.permute.xlu0 0
        %254 = vperm.xlu0 %253, %v220
        %v255 = vpop.permute.xlu0 %254
        %256 = vset.pattern.permute.xlu0 0
        %257 = vperm.xlu0 %256, %v221
        %v258 = vpop.permute.xlu0 %257
        %259 = vset.pattern.permute.xlu0 0
        %260 = vperm.xlu0 %259, %v222
        %v261 = vpop.permute.xlu0 %260
        %262 = vset.pattern.permute.xlu0 0
        %263 = vperm.xlu0 %262, %v223
        %v264 = vpop.permute.xlu0 %263
        %265 = vset.pattern.permute.xlu0 0
        %266 = vperm.xlu0 %265, %v224
        %v267 = vpop.permute.xlu0 %266
        %268 = vset.pattern.permute.xlu0 0
        %269 = vperm.xlu0 %268, %v225
        %v270 = vpop.permute.xlu0 %269
        %271 = vset.pattern.permute.xlu0 0
        %272 = vperm.xlu0 %271, %v226
        %v273 = vpop.permute.xlu0 %272
        %274 = vset.pattern.permute.xlu0 0
        %275 = vperm.xlu0 %274, %v227
        %v276 = vpop.permute.xlu0 %275
        %277 = vset.pattern.permute.xlu0 0
        %278 = vperm.xlu0 %277, %v228
        %v279 = vpop.permute.xlu0 %278
        %280 = vset.pattern.permute.xlu0 0
        %281 = vperm.xlu0 %280, %v229
        %v282 = vpop.permute.xlu0 %281
        %vm283 = vcmp.eq.s32.totalorder %v237, %v231
        %vm284 = vcmp.eq.s32.totalorder %v237, %v232
        %vm285 = vcmp.eq.s32.totalorder %v237, %v233
        %vm286 = vcmp.eq.s32.totalorder %v237, %v234
        %vm287 = vcmp.eq.s32.totalorder %v240, %v231
        %vm288 = vcmp.eq.s32.totalorder %v240, %v232
        %vm289 = vcmp.eq.s32.totalorder %v240, %v233
        %vm290 = vcmp.eq.s32.totalorder %v240, %v234
        %vm291 = vcmp.eq.s32.totalorder %v243, %v231
        %vm292 = vcmp.eq.s32.totalorder %v243, %v232
        %vm293 = vcmp.eq.s32.totalorder %v243, %v233
        %vm294 = vcmp.eq.s32.totalorder %v243, %v234
        %vm295 = vcmp.eq.s32.totalorder %v246, %v231
        %vm296 = vcmp.eq.s32.totalorder %v246, %v232
        %vm297 = vcmp.eq.s32.totalorder %v246, %v233
        %vm298 = vcmp.eq.s32.totalorder %v246, %v234
        %vm299 = vcmp.eq.s32.totalorder %v249, %v231
        %vm300 = vcmp.eq.s32.totalorder %v249, %v232
        %vm301 = vcmp.eq.s32.totalorder %v249, %v233
        %vm302 = vcmp.eq.s32.totalorder %v249, %v234
        %vm303 = vcmp.eq.s32.totalorder %v252, %v231
        %vm304 = vcmp.eq.s32.totalorder %v252, %v232
        %vm305 = vcmp.eq.s32.totalorder %v252, %v233
        %vm306 = vcmp.eq.s32.totalorder %v252, %v234
        %vm307 = vcmp.eq.s32.totalorder %v255, %v231
        %vm308 = vcmp.eq.s32.totalorder %v255, %v232
        %vm309 = vcmp.eq.s32.totalorder %v255, %v233
        %vm310 = vcmp.eq.s32.totalorder %v255, %v234
        %vm311 = vcmp.eq.s32.totalorder %v258, %v231
        %vm312 = vcmp.eq.s32.totalorder %v258, %v232
        %vm313 = vcmp.eq.s32.totalorder %v258, %v233
        %vm314 = vcmp.eq.s32.totalorder %v258, %v234
        %vm315 = vcmp.eq.s32.totalorder %v261, %v231
        %vm316 = vcmp.eq.s32.totalorder %v261, %v232
        %vm317 = vcmp.eq.s32.totalorder %v261, %v233
        %vm318 = vcmp.eq.s32.totalorder %v261, %v234
        %vm319 = vcmp.eq.s32.totalorder %v264, %v231
        %vm320 = vcmp.eq.s32.totalorder %v264, %v232
        %vm321 = vcmp.eq.s32.totalorder %v264, %v233
        %vm322 = vcmp.eq.s32.totalorder %v264, %v234
        %vm323 = vcmp.eq.s32.totalorder %v267, %v231
        %vm324 = vcmp.eq.s32.totalorder %v267, %v232
        %vm325 = vcmp.eq.s32.totalorder %v267, %v233
        %vm326 = vcmp.eq.s32.totalorder %v267, %v234
        %vm327 = vcmp.eq.s32.totalorder %v270, %v231
        %vm328 = vcmp.eq.s32.totalorder %v270, %v232
        %vm329 = vcmp.eq.s32.totalorder %v270, %v233
        %vm330 = vcmp.eq.s32.totalorder %v270, %v234
        %vm331 = vcmp.eq.s32.totalorder %v273, %v231
        %vm332 = vcmp.eq.s32.totalorder %v273, %v232
        %vm333 = vcmp.eq.s32.totalorder %v273, %v233
        %vm334 = vcmp.eq.s32.totalorder %v273, %v234
        %vm335 = vcmp.eq.s32.totalorder %v276, %v231
        %vm336 = vcmp.eq.s32.totalorder %v276, %v232
        %vm337 = vcmp.eq.s32.totalorder %v276, %v233
        %vm338 = vcmp.eq.s32.totalorder %v276, %v234
        %vm339 = vcmp.eq.s32.totalorder %v279, %v231
        %vm340 = vcmp.eq.s32.totalorder %v279, %v232
        %vm341 = vcmp.eq.s32.totalorder %v279, %v233
        %vm342 = vcmp.eq.s32.totalorder %v279, %v234
        %vm343 = vcmp.eq.s32.totalorder %v282, %v231
        %vm344 = vcmp.eq.s32.totalorder %v282, %v232
        %vm345 = vcmp.eq.s32.totalorder %v282, %v233
        %vm346 = vcmp.eq.s32.totalorder %v282, %v234
        %v347 = vsel %vm283, 1, 0
        %v348 = vsel %vm284, 1, 0
        %v349 = vsel %vm285, 1, 0
        %v350 = vsel %vm286, 1, 0
        %v351 = vsel %vm287, 1, 0
        %v352 = vsel %vm288, 1, 0
        %v353 = vsel %vm289, 1, 0
        %v354 = vsel %vm290, 1, 0
        %v355 = vsel %vm291, 1, 0
        %v356 = vsel %vm292, 1, 0
        %v357 = vsel %vm293, 1, 0
        %v358 = vsel %vm294, 1, 0
        %v359 = vsel %vm295, 1, 0
        %v360 = vsel %vm296, 1, 0
        %v361 = vsel %vm297, 1, 0
        %v362 = vsel %vm298, 1, 0
        %v363 = vsel %vm299, 1, 0
        %v364 = vsel %vm300, 1, 0
        %v365 = vsel %vm301, 1, 0
        %v366 = vsel %vm302, 1, 0
        %v367 = vsel %vm303, 1, 0
        %v368 = vsel %vm304, 1, 0
        %v369 = vsel %vm305, 1, 0
        %v370 = vsel %vm306, 1, 0
        %v371 = vsel %vm307, 1, 0
        %v372 = vsel %vm308, 1, 0
        %v373 = vsel %vm309, 1, 0
        %v374 = vsel %vm310, 1, 0
        %v375 = vsel %vm311, 1, 0
        %v376 = vsel %vm312, 1, 0
        %v377 = vsel %vm313, 1, 0
        %v378 = vsel %vm314, 1, 0
        %v379 = vsel %vm315, 1, 0
        %v380 = vsel %vm316, 1, 0
        %v381 = vsel %vm317, 1, 0
        %v382 = vsel %vm318, 1, 0
        %v383 = vsel %vm319, 1, 0
        %v384 = vsel %vm320, 1, 0
        %v385 = vsel %vm321, 1, 0
        %v386 = vsel %vm322, 1, 0
        %v387 = vsel %vm323, 1, 0
        %v388 = vsel %vm324, 1, 0
        %v389 = vsel %vm325, 1, 0
        %v390 = vsel %vm326, 1, 0
        %v391 = vsel %vm327, 1, 0
        %v392 = vsel %vm328, 1, 0
        %v393 = vsel %vm329, 1, 0
        %v394 = vsel %vm330, 1, 0
        %v395 = vsel %vm331, 1, 0
        %v396 = vsel %vm332, 1, 0
        %v397 = vsel %vm333, 1, 0
        %v398 = vsel %vm334, 1, 0
        %v399 = vsel %vm335, 1, 0
        %v400 = vsel %vm336, 1, 0
        %v401 = vsel %vm337, 1, 0
        %v402 = vsel %vm338, 1, 0
        %v403 = vsel %vm339, 1, 0
        %v404 = vsel %vm340, 1, 0
        %v405 = vsel %vm341, 1, 0
        %v406 = vsel %vm342, 1, 0
        %v407 = vsel %vm343, 1, 0
        %v408 = vsel %vm344, 1, 0
        %v409 = vsel %vm345, 1, 0
        %v410 = vsel %vm346, 1, 0
        %v411 = vcvt.s32.f32 %v347
        %v412 = vcvt.s32.f32 %v348
        %v413 = vcvt.s32.f32 %v349
        %v414 = vcvt.s32.f32 %v350
        %v415 = vcvt.s32.f32 %v351
        %v416 = vcvt.s32.f32 %v352
        %v417 = vcvt.s32.f32 %v353
        %v418 = vcvt.s32.f32 %v354
        %v419 = vcvt.s32.f32 %v355
        %v420 = vcvt.s32.f32 %v356
        %v421 = vcvt.s32.f32 %v357
        %v422 = vcvt.s32.f32 %v358
        %v423 = vcvt.s32.f32 %v359
        %v424 = vcvt.s32.f32 %v360
        %v425 = vcvt.s32.f32 %v361
        %v426 = vcvt.s32.f32 %v362
        %v427 = vcvt.s32.f32 %v363
        %v428 = vcvt.s32.f32 %v364
        %v429 = vcvt.s32.f32 %v365
        %v430 = vcvt.s32.f32 %v366
        %v431 = vcvt.s32.f32 %v367
        %v432 = vcvt.s32.f32 %v368
        %v433 = vcvt.s32.f32 %v369
        %v434 = vcvt.s32.f32 %v370
        %v435 = vcvt.s32.f32 %v371
        %v436 = vcvt.s32.f32 %v372
        %v437 = vcvt.s32.f32 %v373
        %v438 = vcvt.s32.f32 %v374
        %v439 = vcvt.s32.f32 %v375
        %v440 = vcvt.s32.f32 %v376
        %v441 = vcvt.s32.f32 %v377
        %v442 = vcvt.s32.f32 %v378
        %v443 = vcvt.s32.f32 %v379
        %v444 = vcvt.s32.f32 %v380
        %v445 = vcvt.s32.f32 %v381
        %v446 = vcvt.s32.f32 %v382
        %v447 = vcvt.s32.f32 %v383
        %v448 = vcvt.s32.f32 %v384
        %v449 = vcvt.s32.f32 %v385
        %v450 = vcvt.s32.f32 %v386
        %v451 = vcvt.s32.f32 %v387
        %v452 = vcvt.s32.f32 %v388
        %v453 = vcvt.s32.f32 %v389
        %v454 = vcvt.s32.f32 %v390
        %v455 = vcvt.s32.f32 %v391
        %v456 = vcvt.s32.f32 %v392
        %v457 = vcvt.s32.f32 %v393
        %v458 = vcvt.s32.f32 %v394
        %v459 = vcvt.s32.f32 %v395
        %v460 = vcvt.s32.f32 %v396
        %v461 = vcvt.s32.f32 %v397
        %v462 = vcvt.s32.f32 %v398
        %v463 = vcvt.s32.f32 %v399
        %v464 = vcvt.s32.f32 %v400
        %v465 = vcvt.s32.f32 %v401
        %v466 = vcvt.s32.f32 %v402
        %v467 = vcvt.s32.f32 %v403
        %v468 = vcvt.s32.f32 %v404
        %v469 = vcvt.s32.f32 %v405
        %v470 = vcvt.s32.f32 %v406
        %v471 = vcvt.s32.f32 %v407
        %v472 = vcvt.s32.f32 %v408
        %v473 = vcvt.s32.f32 %v409
        %v474 = vcvt.s32.f32 %v410
        %v475 = vadd.f32 %v411, 0.0
        %v476 = vadd.f32 %v412, 0.0
        %v477 = vadd.f32 %v413, 0.0
        %v478 = vadd.f32 %v414, 0.0
        %v479 = vadd.f32 %v415, 0.0
        %v480 = vadd.f32 %v416, 0.0
        %v481 = vadd.f32 %v417, 0.0
        %v482 = vadd.f32 %v418, 0.0
        %v483 = vadd.f32 %v419, 0.0
        %v484 = vadd.f32 %v420, 0.0
        %v485 = vadd.f32 %v421, 0.0
        %v486 = vadd.f32 %v422, 0.0
        %v487 = vadd.f32 %v423, 0.0
        %v488 = vadd.f32 %v424, 0.0
        %v489 = vadd.f32 %v425, 0.0
        %v490 = vadd.f32 %v426, 0.0
        %v491 = vadd.f32 %v427, 0.0
        %v492 = vadd.f32 %v428, 0.0
        %v493 = vadd.f32 %v429, 0.0
        %v494 = vadd.f32 %v430, 0.0
        %v495 = vadd.f32 %v431, 0.0
        %v496 = vadd.f32 %v432, 0.0
        %v497 = vadd.f32 %v433, 0.0
        %v498 = vadd.f32 %v434, 0.0
        %v499 = vadd.f32 %v435, 0.0
        %v500 = vadd.f32 %v436, 0.0
        %v501 = vadd.f32 %v437, 0.0
        %v502 = vadd.f32 %v438, 0.0
        %v503 = vadd.f32 %v439, 0.0
        %v504 = vadd.f32 %v440, 0.0
        %v505 = vadd.f32 %v441, 0.0
        %v506 = vadd.f32 %v442, 0.0
        %v507 = vadd.f32 %v443, 0.0
        %v508 = vadd.f32 %v444, 0.0
        %v509 = vadd.f32 %v445, 0.0
        %v510 = vadd.f32 %v446, 0.0
        %v511 = vadd.f32 %v447, 0.0
        %v512 = vadd.f32 %v448, 0.0
        %v513 = vadd.f32 %v449, 0.0
        %v514 = vadd.f32 %v450, 0.0
        %v515 = vadd.f32 %v451, 0.0
        %v516 = vadd.f32 %v452, 0.0
        %v517 = vadd.f32 %v453, 0.0
        %v518 = vadd.f32 %v454, 0.0
        %v519 = vadd.f32 %v455, 0.0
        %v520 = vadd.f32 %v456, 0.0
        %v521 = vadd.f32 %v457, 0.0
        %v522 = vadd.f32 %v458, 0.0
        %v523 = vadd.f32 %v459, 0.0
        %v524 = vadd.f32 %v460, 0.0
        %v525 = vadd.f32 %v461, 0.0
        %v526 = vadd.f32 %v462, 0.0
        %v527 = vadd.f32 %v463, 0.0
        %v528 = vadd.f32 %v464, 0.0
        %v529 = vadd.f32 %v465, 0.0
        %v530 = vadd.f32 %v466, 0.0
        %v531 = vadd.f32 %v467, 0.0
        %v532 = vadd.f32 %v468, 0.0
        %v533 = vadd.f32 %v469, 0.0
        %v534 = vadd.f32 %v470, 0.0
        %v535 = vadd.f32 %v471, 0.0
        %v536 = vadd.f32 %v472, 0.0
        %v537 = vadd.f32 %v473, 0.0
        %v538 = vadd.f32 %v474, 0.0
        %539 = vset.pattern.permute.xlu0 1
        %540 = vperm.xlu0 %539, %v214
        %v541 = vpop.permute.xlu0 %540
        %542 = vset.pattern.permute.xlu0 1
        %543 = vperm.xlu0 %542, %v215
        %v544 = vpop.permute.xlu0 %543
        %545 = vset.pattern.permute.xlu0 1
        %546 = vperm.xlu0 %545, %v216
        %v547 = vpop.permute.xlu0 %546
        %548 = vset.pattern.permute.xlu0 1
        %549 = vperm.xlu0 %548, %v217
        %v550 = vpop.permute.xlu0 %549
        %551 = vset.pattern.permute.xlu0 1
        %552 = vperm.xlu0 %551, %v218
        %v553 = vpop.permute.xlu0 %552
        %554 = vset.pattern.permute.xlu0 1
        %555 = vperm.xlu0 %554, %v219
        %v556 = vpop.permute.xlu0 %555
        %557 = vset.pattern.permute.xlu0 1
        %558 = vperm.xlu0 %557, %v220
        %v559 = vpop.permute.xlu0 %558
        %560 = vset.pattern.permute.xlu0 1
        %561 = vperm.xlu0 %560, %v221
        %v562 = vpop.permute.xlu0 %561
        %563 = vset.pattern.permute.xlu0 1
        %564 = vperm.xlu0 %563, %v222
        %v565 = vpop.permute.xlu0 %564
        %566 = vset.pattern.permute.xlu0 1
        %567 = vperm.xlu0 %566, %v223
        %v568 = vpop.permute.xlu0 %567
        %569 = vset.pattern.permute.xlu0 1
        %570 = vperm.xlu0 %569, %v224
        %v571 = vpop.permute.xlu0 %570
        %572 = vset.pattern.permute.xlu0 1
        %573 = vperm.xlu0 %572, %v225
        %v574 = vpop.permute.xlu0 %573
        %575 = vset.pattern.permute.xlu0 1
        %576 = vperm.xlu0 %575, %v226
        %v577 = vpop.permute.xlu0 %576
        %578 = vset.pattern.permute.xlu0 1
        %579 = vperm.xlu0 %578, %v227
        %v580 = vpop.permute.xlu0 %579
        %581 = vset.pattern.permute.xlu0 1
        %582 = vperm.xlu0 %581, %v228
        %v583 = vpop.permute.xlu0 %582
        %584 = vset.pattern.permute.xlu0 1
        %585 = vperm.xlu0 %584, %v229
        %v586 = vpop.permute.xlu0 %585
        %vm587 = vcmp.eq.s32.totalorder %v541, %v231
        %vm588 = vcmp.eq.s32.totalorder %v541, %v232
        %vm589 = vcmp.eq.s32.totalorder %v541, %v233
        %vm590 = vcmp.eq.s32.totalorder %v541, %v234
        %vm591 = vcmp.eq.s32.totalorder %v544, %v231
        %vm592 = vcmp.eq.s32.totalorder %v544, %v232
        %vm593 = vcmp.eq.s32.totalorder %v544, %v233
        %vm594 = vcmp.eq.s32.totalorder %v544, %v234
        %vm595 = vcmp.eq.s32.totalorder %v547, %v231
        %vm596 = vcmp.eq.s32.totalorder %v547, %v232
        %vm597 = vcmp.eq.s32.totalorder %v547, %v233
        %vm598 = vcmp.eq.s32.totalorder %v547, %v234
        %vm599 = vcmp.eq.s32.totalorder %v550, %v231
        %vm600 = vcmp.eq.s32.totalorder %v550, %v232
        %vm601 = vcmp.eq.s32.totalorder %v550, %v233
        %vm602 = vcmp.eq.s32.totalorder %v550, %v234
        %vm603 = vcmp.eq.s32.totalorder %v553, %v231
        %vm604 = vcmp.eq.s32.totalorder %v553, %v232
        %vm605 = vcmp.eq.s32.totalorder %v553, %v233
        %vm606 = vcmp.eq.s32.totalorder %v553, %v234
        %vm607 = vcmp.eq.s32.totalorder %v556, %v231
        %vm608 = vcmp.eq.s32.totalorder %v556, %v232
        %vm609 = vcmp.eq.s32.totalorder %v556, %v233
        %vm610 = vcmp.eq.s32.totalorder %v556, %v234
        %vm611 = vcmp.eq.s32.totalorder %v559, %v231
        %vm612 = vcmp.eq.s32.totalorder %v559, %v232
        %vm613 = vcmp.eq.s32.totalorder %v559, %v233
        %vm614 = vcmp.eq.s32.totalorder %v559, %v234
        %vm615 = vcmp.eq.s32.totalorder %v562, %v231
        %vm616 = vcmp.eq.s32.totalorder %v562, %v232
        %vm617 = vcmp.eq.s32.totalorder %v562, %v233
        %vm618 = vcmp.eq.s32.totalorder %v562, %v234
        %vm619 = vcmp.eq.s32.totalorder %v565, %v231
        %vm620 = vcmp.eq.s32.totalorder %v565, %v232
        %vm621 = vcmp.eq.s32.totalorder %v565, %v233
        %vm622 = vcmp.eq.s32.totalorder %v565, %v234
        %vm623 = vcmp.eq.s32.totalorder %v568, %v231
        %vm624 = vcmp.eq.s32.totalorder %v568, %v232
        %vm625 = vcmp.eq.s32.totalorder %v568, %v233
        %vm626 = vcmp.eq.s32.totalorder %v568, %v234
        %vm627 = vcmp.eq.s32.totalorder %v571, %v231
        %vm628 = vcmp.eq.s32.totalorder %v571, %v232
        %vm629 = vcmp.eq.s32.totalorder %v571, %v233
        %vm630 = vcmp.eq.s32.totalorder %v571, %v234
        %vm631 = vcmp.eq.s32.totalorder %v574, %v231
        %vm632 = vcmp.eq.s32.totalorder %v574, %v232
        %vm633 = vcmp.eq.s32.totalorder %v574, %v233
        %vm634 = vcmp.eq.s32.totalorder %v574, %v234
        %vm635 = vcmp.eq.s32.totalorder %v577, %v231
        %vm636 = vcmp.eq.s32.totalorder %v577, %v232
        %vm637 = vcmp.eq.s32.totalorder %v577, %v233
        %vm638 = vcmp.eq.s32.totalorder %v577, %v234
        %vm639 = vcmp.eq.s32.totalorder %v580, %v231
        %vm640 = vcmp.eq.s32.totalorder %v580, %v232
        %vm641 = vcmp.eq.s32.totalorder %v580, %v233
        %vm642 = vcmp.eq.s32.totalorder %v580, %v234
        %vm643 = vcmp.eq.s32.totalorder %v583, %v231
        %vm644 = vcmp.eq.s32.totalorder %v583, %v232
        %vm645 = vcmp.eq.s32.totalorder %v583, %v233
        %vm646 = vcmp.eq.s32.totalorder %v583, %v234
        %vm647 = vcmp.eq.s32.totalorder %v586, %v231
        %vm648 = vcmp.eq.s32.totalorder %v586, %v232
        %vm649 = vcmp.eq.s32.totalorder %v586, %v233
        %vm650 = vcmp.eq.s32.totalorder %v586, %v234
        %v651 = vsel %vm587, 1, 0
        %v652 = vsel %vm588, 1, 0
        %v653 = vsel %vm589, 1, 0
        %v654 = vsel %vm590, 1, 0
        %v655 = vsel %vm591, 1, 0
        %v656 = vsel %vm592, 1, 0
        %v657 = vsel %vm593, 1, 0
        %v658 = vsel %vm594, 1, 0
        %v659 = vsel %vm595, 1, 0
        %v660 = vsel %vm596, 1, 0
        %v661 = vsel %vm597, 1, 0
        %v662 = vsel %vm598, 1, 0
        %v663 = vsel %vm599, 1, 0
        %v664 = vsel %vm600, 1, 0
        %v665 = vsel %vm601, 1, 0
        %v666 = vsel %vm602, 1, 0
        %v667 = vsel %vm603, 1, 0
        %v668 = vsel %vm604, 1, 0
        %v669 = vsel %vm605, 1, 0
        %v670 = vsel %vm606, 1, 0
        %v671 = vsel %vm607, 1, 0
        %v672 = vsel %vm608, 1, 0
        %v673 = vsel %vm609, 1, 0
        %v674 = vsel %vm610, 1, 0
        %v675 = vsel %vm611, 1, 0
        %v676 = vsel %vm612, 1, 0
        %v677 = vsel %vm613, 1, 0
        %v678 = vsel %vm614, 1, 0
        %v679 = vsel %vm615, 1, 0
        %v680 = vsel %vm616, 1, 0
        %v681 = vsel %vm617, 1, 0
        %v682 = vsel %vm618, 1, 0
        %v683 = vsel %vm619, 1, 0
        %v684 = vsel %vm620, 1, 0
        %v685 = vsel %vm621, 1, 0
        %v686 = vsel %vm622, 1, 0
        %v687 = vsel %vm623, 1, 0
        %v688 = vsel %vm624, 1, 0
        %v689 = vsel %vm625, 1, 0
        %v690 = vsel %vm626, 1, 0
        %v691 = vsel %vm627, 1, 0
        %v692 = vsel %vm628, 1, 0
        %v693 = vsel %vm629, 1, 0
        %v694 = vsel %vm630, 1, 0
        %v695 = vsel %vm631, 1, 0
        %v696 = vsel %vm632, 1, 0
        %v697 = vsel %vm633, 1, 0
        %v698 = vsel %vm634, 1, 0
        %v699 = vsel %vm635, 1, 0
        %v700 = vsel %vm636, 1, 0
        %v701 = vsel %vm637, 1, 0
        %v702 = vsel %vm638, 1, 0
        %v703 = vsel %vm639, 1, 0
        %v704 = vsel %vm640, 1, 0
        %v705 = vsel %vm641, 1, 0
        %v706 = vsel %vm642, 1, 0
        %v707 = vsel %vm643, 1, 0
        %v708 = vsel %vm644, 1, 0
        %v709 = vsel %vm645, 1, 0
        %v710 = vsel %vm646, 1, 0
        %v711 = vsel %vm647, 1, 0
        %v712 = vsel %vm648, 1, 0
        %v713 = vsel %vm649, 1, 0
        %v714 = vsel %vm650, 1, 0
        %v715 = vcvt.s32.f32 %v651
        %v716 = vcvt.s32.f32 %v652
        %v717 = vcvt.s32.f32 %v653
        %v718 = vcvt.s32.f32 %v654
        %v719 = vcvt.s32.f32 %v655
        %v720 = vcvt.s32.f32 %v656
        %v721 = vcvt.s32.f32 %v657
        %v722 = vcvt.s32.f32 %v658
        %v723 = vcvt.s32.f32 %v659
        %v724 = vcvt.s32.f32 %v660
        %v725 = vcvt.s32.f32 %v661
        %v726 = vcvt.s32.f32 %v662
        %v727 = vcvt.s32.f32 %v663
        %v728 = vcvt.s32.f32 %v664
        %v729 = vcvt.s32.f32 %v665
        %v730 = vcvt.s32.f32 %v666
        %v731 = vcvt.s32.f32 %v667
        %v732 = vcvt.s32.f32 %v668
        %v733 = vcvt.s32.f32 %v669
        %v734 = vcvt.s32.f32 %v670
        %v735 = vcvt.s32.f32 %v671
        %v736 = vcvt.s32.f32 %v672
        %v737 = vcvt.s32.f32 %v673
        %v738 = vcvt.s32.f32 %v674
        %v739 = vcvt.s32.f32 %v675
        %v740 = vcvt.s32.f32 %v676
        %v741 = vcvt.s32.f32 %v677
        %v742 = vcvt.s32.f32 %v678
        %v743 = vcvt.s32.f32 %v679
        %v744 = vcvt.s32.f32 %v680
        %v745 = vcvt.s32.f32 %v681
        %v746 = vcvt.s32.f32 %v682
        %v747 = vcvt.s32.f32 %v683
        %v748 = vcvt.s32.f32 %v684
        %v749 = vcvt.s32.f32 %v685
        %v750 = vcvt.s32.f32 %v686
        %v751 = vcvt.s32.f32 %v687
        %v752 = vcvt.s32.f32 %v688
        %v753 = vcvt.s32.f32 %v689
        %v754 = vcvt.s32.f32 %v690
        %v755 = vcvt.s32.f32 %v691
        %v756 = vcvt.s32.f32 %v692
        %v757 = vcvt.s32.f32 %v693
        %v758 = vcvt.s32.f32 %v694
        %v759 = vcvt.s32.f32 %v695
        %v760 = vcvt.s32.f32 %v696
        %v761 = vcvt.s32.f32 %v697
        %v762 = vcvt.s32.f32 %v698
        %v763 = vcvt.s32.f32 %v699
        %v764 = vcvt.s32.f32 %v700
        %v765 = vcvt.s32.f32 %v701
        %v766 = vcvt.s32.f32 %v702
        %v767 = vcvt.s32.f32 %v703
        %v768 = vcvt.s32.f32 %v704
        %v769 = vcvt.s32.f32 %v705
        %v770 = vcvt.s32.f32 %v706
        %v771 = vcvt.s32.f32 %v707
        %v772 = vcvt.s32.f32 %v708
        %v773 = vcvt.s32.f32 %v709
        %v774 = vcvt.s32.f32 %v710
        %v775 = vcvt.s32.f32 %v711
        %v776 = vcvt.s32.f32 %v712
        %v777 = vcvt.s32.f32 %v713
        %v778 = vcvt.s32.f32 %v714
        %v779 = vadd.f32 %v475, %v715
        %v780 = vadd.f32 %v476, %v716
        %v781 = vadd.f32 %v477, %v717
        %v782 = vadd.f32 %v478, %v718
        %v783 = vadd.f32 %v479, %v719
        %v784 = vadd.f32 %v480, %v720
        %v785 = vadd.f32 %v481, %v721
        %v786 = vadd.f32 %v482, %v722
        %v787 = vadd.f32 %v483, %v723
        %v788 = vadd.f32 %v484, %v724
        %v789 = vadd.f32 %v485, %v725
        %v790 = vadd.f32 %v486, %v726
        %v791 = vadd.f32 %v487, %v727
        %v792 = vadd.f32 %v488, %v728
        %v793 = vadd.f32 %v489, %v729
        %v794 = vadd.f32 %v490, %v730
        %v795 = vadd.f32 %v491, %v731
        %v796 = vadd.f32 %v492, %v732
        %v797 = vadd.f32 %v493, %v733
        %v798 = vadd.f32 %v494, %v734
        %v799 = vadd.f32 %v495, %v735
        %v800 = vadd.f32 %v496, %v736
        %v801 = vadd.f32 %v497, %v737
        %v802 = vadd.f32 %v498, %v738
        %v803 = vadd.f32 %v499, %v739
        %v804 = vadd.f32 %v500, %v740
        %v805 = vadd.f32 %v501, %v741
        %v806 = vadd.f32 %v502, %v742
        %v807 = vadd.f32 %v503, %v743
        %v808 = vadd.f32 %v504, %v744
        %v809 = vadd.f32 %v505, %v745
        %v810 = vadd.f32 %v506, %v746
        %v811 = vadd.f32 %v507, %v747
        %v812 = vadd.f32 %v508, %v748
        %v813 = vadd.f32 %v509, %v749
        %v814 = vadd.f32 %v510, %v750
        %v815 = vadd.f32 %v511, %v751
        %v816 = vadd.f32 %v512, %v752
        %v817 = vadd.f32 %v513, %v753
        %v818 = vadd.f32 %v514, %v754
        %v819 = vadd.f32 %v515, %v755
        %v820 = vadd.f32 %v516, %v756
        %v821 = vadd.f32 %v517, %v757
        %v822 = vadd.f32 %v518, %v758
        %v823 = vadd.f32 %v519, %v759
        %v824 = vadd.f32 %v520, %v760
        %v825 = vadd.f32 %v521, %v761
        %v826 = vadd.f32 %v522, %v762
        %v827 = vadd.f32 %v523, %v763
        %v828 = vadd.f32 %v524, %v764
        %v829 = vadd.f32 %v525, %v765
        %v830 = vadd.f32 %v526, %v766
        %v831 = vadd.f32 %v527, %v767
        %v832 = vadd.f32 %v528, %v768
        %v833 = vadd.f32 %v529, %v769
        %v834 = vadd.f32 %v530, %v770
        %v835 = vadd.f32 %v531, %v771
        %v836 = vadd.f32 %v532, %v772
        %v837 = vadd.f32 %v533, %v773
        %v838 = vadd.f32 %v534, %v774
        %v839 = vadd.f32 %v535, %v775
        %v840 = vadd.f32 %v536, %v776
        %v841 = vadd.f32 %v537, %v777
        %v842 = vadd.f32 %v538, %v778
        %843 = vset.pattern.permute.xlu0 2
        %844 = vperm.xlu0 %843, %v214
        %v845 = vpop.permute.xlu0 %844
        %846 = vset.pattern.permute.xlu0 2
        %847 = vperm.xlu0 %846, %v215
        %v848 = vpop.permute.xlu0 %847
        %849 = vset.pattern.permute.xlu0 2
        %850 = vperm.xlu0 %849, %v216
        %v851 = vpop.permute.xlu0 %850
        %852 = vset.pattern.permute.xlu0 2
        %853 = vperm.xlu0 %852, %v217
        %v854 = vpop.permute.xlu0 %853
        %855 = vset.pattern.permute.xlu0 2
        %856 = vperm.xlu0 %855, %v218
        %v857 = vpop.permute.xlu0 %856
        %858 = vset.pattern.permute.xlu0 2
        %859 = vperm.xlu0 %858, %v219
        %v860 = vpop.permute.xlu0 %859
        %861 = vset.pattern.permute.xlu0 2
        %862 = vperm.xlu0 %861, %v220
        %v863 = vpop.permute.xlu0 %862
        %864 = vset.pattern.permute.xlu0 2
        %865 = vperm.xlu0 %864, %v221
        %v866 = vpop.permute.xlu0 %865
        %867 = vset.pattern.permute.xlu0 2
        %868 = vperm.xlu0 %867, %v222
        %v869 = vpop.permute.xlu0 %868
        %870 = vset.pattern.permute.xlu0 2
        %871 = vperm.xlu0 %870, %v223
        %v872 = vpop.permute.xlu0 %871
        %873 = vset.pattern.permute.xlu0 2
        %874 = vperm.xlu0 %873, %v224
        %v875 = vpop.permute.xlu0 %874
        %876 = vset.pattern.permute.xlu0 2
        %877 = vperm.xlu0 %876, %v225
        %v878 = vpop.permute.xlu0 %877
        %879 = vset.pattern.permute.xlu0 2
        %880 = vperm.xlu0 %879, %v226
        %v881 = vpop.permute.xlu0 %880
        %882 = vset.pattern.permute.xlu0 2
        %883 = vperm.xlu0 %882, %v227
        %v884 = vpop.permute.xlu0 %883
        %885 = vset.pattern.permute.xlu0 2
        %886 = vperm.xlu0 %885, %v228
        %v887 = vpop.permute.xlu0 %886
        %888 = vset.pattern.permute.xlu0 2
        %889 = vperm.xlu0 %888, %v229
        %v890 = vpop.permute.xlu0 %889
        %vm891 = vcmp.eq.s32.totalorder %v845, %v231
        %vm892 = vcmp.eq.s32.totalorder %v845, %v232
        %vm893 = vcmp.eq.s32.totalorder %v845, %v233
        %vm894 = vcmp.eq.s32.totalorder %v845, %v234
        %vm895 = vcmp.eq.s32.totalorder %v848, %v231
        %vm896 = vcmp.eq.s32.totalorder %v848, %v232
        %vm897 = vcmp.eq.s32.totalorder %v848, %v233
        %vm898 = vcmp.eq.s32.totalorder %v848, %v234
        %vm899 = vcmp.eq.s32.totalorder %v851, %v231
        %vm900 = vcmp.eq.s32.totalorder %v851, %v232
        %vm901 = vcmp.eq.s32.totalorder %v851, %v233
        %vm902 = vcmp.eq.s32.totalorder %v851, %v234
        %vm903 = vcmp.eq.s32.totalorder %v854, %v231
        %vm904 = vcmp.eq.s32.totalorder %v854, %v232
        %vm905 = vcmp.eq.s32.totalorder %v854, %v233
        %vm906 = vcmp.eq.s32.totalorder %v854, %v234
        %vm907 = vcmp.eq.s32.totalorder %v857, %v231
        %vm908 = vcmp.eq.s32.totalorder %v857, %v232
        %vm909 = vcmp.eq.s32.totalorder %v857, %v233
        %vm910 = vcmp.eq.s32.totalorder %v857, %v234
        %vm911 = vcmp.eq.s32.totalorder %v860, %v231
        %vm912 = vcmp.eq.s32.totalorder %v860, %v232
        %vm913 = vcmp.eq.s32.totalorder %v860, %v233
        %vm914 = vcmp.eq.s32.totalorder %v860, %v234
        %vm915 = vcmp.eq.s32.totalorder %v863, %v231
        %vm916 = vcmp.eq.s32.totalorder %v863, %v232
        %vm917 = vcmp.eq.s32.totalorder %v863, %v233
        %vm918 = vcmp.eq.s32.totalorder %v863, %v234
        %vm919 = vcmp.eq.s32.totalorder %v866, %v231
        %vm920 = vcmp.eq.s32.totalorder %v866, %v232
        %vm921 = vcmp.eq.s32.totalorder %v866, %v233
        %vm922 = vcmp.eq.s32.totalorder %v866, %v234
        %vm923 = vcmp.eq.s32.totalorder %v869, %v231
        %vm924 = vcmp.eq.s32.totalorder %v869, %v232
        %vm925 = vcmp.eq.s32.totalorder %v869, %v233
        %vm926 = vcmp.eq.s32.totalorder %v869, %v234
        %vm927 = vcmp.eq.s32.totalorder %v872, %v231
        %vm928 = vcmp.eq.s32.totalorder %v872, %v232
        %vm929 = vcmp.eq.s32.totalorder %v872, %v233
        %vm930 = vcmp.eq.s32.totalorder %v872, %v234
        %vm931 = vcmp.eq.s32.totalorder %v875, %v231
        %vm932 = vcmp.eq.s32.totalorder %v875, %v232
        %vm933 = vcmp.eq.s32.totalorder %v875, %v233
        %vm934 = vcmp.eq.s32.totalorder %v875, %v234
        %vm935 = vcmp.eq.s32.totalorder %v878, %v231
        %vm936 = vcmp.eq.s32.totalorder %v878, %v232
        %vm937 = vcmp.eq.s32.totalorder %v878, %v233
        %vm938 = vcmp.eq.s32.totalorder %v878, %v234
        %vm939 = vcmp.eq.s32.totalorder %v881, %v231
        %vm940 = vcmp.eq.s32.totalorder %v881, %v232
        %vm941 = vcmp.eq.s32.totalorder %v881, %v233
        %vm942 = vcmp.eq.s32.totalorder %v881, %v234
        %vm943 = vcmp.eq.s32.totalorder %v884, %v231
        %vm944 = vcmp.eq.s32.totalorder %v884, %v232
        %vm945 = vcmp.eq.s32.totalorder %v884, %v233
        %vm946 = vcmp.eq.s32.totalorder %v884, %v234
        %vm947 = vcmp.eq.s32.totalorder %v887, %v231
        %vm948 = vcmp.eq.s32.totalorder %v887, %v232
        %vm949 = vcmp.eq.s32.totalorder %v887, %v233
        %vm950 = vcmp.eq.s32.totalorder %v887, %v234
        %vm951 = vcmp.eq.s32.totalorder %v890, %v231
        %vm952 = vcmp.eq.s32.totalorder %v890, %v232
        %vm953 = vcmp.eq.s32.totalorder %v890, %v233
        %vm954 = vcmp.eq.s32.totalorder %v890, %v234
        %v955 = vsel %vm891, 1, 0
        %v956 = vsel %vm892, 1, 0
        %v957 = vsel %vm893, 1, 0
        %v958 = vsel %vm894, 1, 0
        %v959 = vsel %vm895, 1, 0
        %v960 = vsel %vm896, 1, 0
        %v961 = vsel %vm897, 1, 0
        %v962 = vsel %vm898, 1, 0
        %v963 = vsel %vm899, 1, 0
        %v964 = vsel %vm900, 1, 0
        %v965 = vsel %vm901, 1, 0
        %v966 = vsel %vm902, 1, 0
        %v967 = vsel %vm903, 1, 0
        %v968 = vsel %vm904, 1, 0
        %v969 = vsel %vm905, 1, 0
        %v970 = vsel %vm906, 1, 0
        %v971 = vsel %vm907, 1, 0
        %v972 = vsel %vm908, 1, 0
        %v973 = vsel %vm909, 1, 0
        %v974 = vsel %vm910, 1, 0
        %v975 = vsel %vm911, 1, 0
        %v976 = vsel %vm912, 1, 0
        %v977 = vsel %vm913, 1, 0
        %v978 = vsel %vm914, 1, 0
        %v979 = vsel %vm915, 1, 0
        %v980 = vsel %vm916, 1, 0
        %v981 = vsel %vm917, 1, 0
        %v982 = vsel %vm918, 1, 0
        %v983 = vsel %vm919, 1, 0
        %v984 = vsel %vm920, 1, 0
        %v985 = vsel %vm921, 1, 0
        %v986 = vsel %vm922, 1, 0
        %v987 = vsel %vm923, 1, 0
        %v988 = vsel %vm924, 1, 0
        %v989 = vsel %vm925, 1, 0
        %v990 = vsel %vm926, 1, 0
        %v991 = vsel %vm927, 1, 0
        %v992 = vsel %vm928, 1, 0
        %v993 = vsel %vm929, 1, 0
        %v994 = vsel %vm930, 1, 0
        %v995 = vsel %vm931, 1, 0
        %v996 = vsel %vm932, 1, 0
        %v997 = vsel %vm933, 1, 0
        %v998 = vsel %vm934, 1, 0
        %v999 = vsel %vm935, 1, 0
        %v1000 = vsel %vm936, 1, 0
        %v1001 = vsel %vm937, 1, 0
        %v1002 = vsel %vm938, 1, 0
        %v1003 = vsel %vm939, 1, 0
        %v1004 = vsel %vm940, 1, 0
        %v1005 = vsel %vm941, 1, 0
        %v1006 = vsel %vm942, 1, 0
        %v1007 = vsel %vm943, 1, 0
        %v1008 = vsel %vm944, 1, 0
        %v1009 = vsel %vm945, 1, 0
        %v1010 = vsel %vm946, 1, 0
        %v1011 = vsel %vm947, 1, 0
        %v1012 = vsel %vm948, 1, 0
        %v1013 = vsel %vm949, 1, 0
        %v1014 = vsel %vm950, 1, 0
        %v1015 = vsel %vm951, 1, 0
        %v1016 = vsel %vm952, 1, 0
        %v1017 = vsel %vm953, 1, 0
        %v1018 = vsel %vm954, 1, 0
        %v1019 = vcvt.s32.f32 %v955
        %v1020 = vcvt.s32.f32 %v956
        %v1021 = vcvt.s32.f32 %v957
        %v1022 = vcvt.s32.f32 %v958
        %v1023 = vcvt.s32.f32 %v959
        %v1024 = vcvt.s32.f32 %v960
        %v1025 = vcvt.s32.f32 %v961
        %v1026 = vcvt.s32.f32 %v962
        %v1027 = vcvt.s32.f32 %v963
        %v1028 = vcvt.s32.f32 %v964
        %v1029 = vcvt.s32.f32 %v965
        %v1030 = vcvt.s32.f32 %v966
        %v1031 = vcvt.s32.f32 %v967
        %v1032 = vcvt.s32.f32 %v968
        %v1033 = vcvt.s32.f32 %v969
        %v1034 = vcvt.s32.f32 %v970
        %v1035 = vcvt.s32.f32 %v971
        %v1036 = vcvt.s32.f32 %v972
        %v1037 = vcvt.s32.f32 %v973
        %v1038 = vcvt.s32.f32 %v974
        %v1039 = vcvt.s32.f32 %v975
        %v1040 = vcvt.s32.f32 %v976
        %v1041 = vcvt.s32.f32 %v977
        %v1042 = vcvt.s32.f32 %v978
        %v1043 = vcvt.s32.f32 %v979
        %v1044 = vcvt.s32.f32 %v980
        %v1045 = vcvt.s32.f32 %v981
        %v1046 = vcvt.s32.f32 %v982
        %v1047 = vcvt.s32.f32 %v983
        %v1048 = vcvt.s32.f32 %v984
        %v1049 = vcvt.s32.f32 %v985
        %v1050 = vcvt.s32.f32 %v986
        %v1051 = vcvt.s32.f32 %v987
        %v1052 = vcvt.s32.f32 %v988
        %v1053 = vcvt.s32.f32 %v989
        %v1054 = vcvt.s32.f32 %v990
        %v1055 = vcvt.s32.f32 %v991
        %v1056 = vcvt.s32.f32 %v992
        %v1057 = vcvt.s32.f32 %v993
        %v1058 = vcvt.s32.f32 %v994
        %v1059 = vcvt.s32.f32 %v995
        %v1060 = vcvt.s32.f32 %v996
        %v1061 = vcvt.s32.f32 %v997
        %v1062 = vcvt.s32.f32 %v998
        %v1063 = vcvt.s32.f32 %v999
        %v1064 = vcvt.s32.f32 %v1000
        %v1065 = vcvt.s32.f32 %v1001
        %v1066 = vcvt.s32.f32 %v1002
        %v1067 = vcvt.s32.f32 %v1003
        %v1068 = vcvt.s32.f32 %v1004
        %v1069 = vcvt.s32.f32 %v1005
        %v1070 = vcvt.s32.f32 %v1006
        %v1071 = vcvt.s32.f32 %v1007
        %v1072 = vcvt.s32.f32 %v1008
        %v1073 = vcvt.s32.f32 %v1009
        %v1074 = vcvt.s32.f32 %v1010
        %v1075 = vcvt.s32.f32 %v1011
        %v1076 = vcvt.s32.f32 %v1012
        %v1077 = vcvt.s32.f32 %v1013
        %v1078 = vcvt.s32.f32 %v1014
        %v1079 = vcvt.s32.f32 %v1015
        %v1080 = vcvt.s32.f32 %v1016
        %v1081 = vcvt.s32.f32 %v1017
        %v1082 = vcvt.s32.f32 %v1018
        %v1083 = vadd.f32 %v779, %v1019
        %v1084 = vadd.f32 %v780, %v1020
        %v1085 = vadd.f32 %v781, %v1021
        %v1086 = vadd.f32 %v782, %v1022
        %v1087 = vadd.f32 %v783, %v1023
        %v1088 = vadd.f32 %v784, %v1024
        %v1089 = vadd.f32 %v785, %v1025
        %v1090 = vadd.f32 %v786, %v1026
        %v1091 = vadd.f32 %v787, %v1027
        %v1092 = vadd.f32 %v788, %v1028
        %v1093 = vadd.f32 %v789, %v1029
        %v1094 = vadd.f32 %v790, %v1030
        %v1095 = vadd.f32 %v791, %v1031
        %v1096 = vadd.f32 %v792, %v1032
        %v1097 = vadd.f32 %v793, %v1033
        %v1098 = vadd.f32 %v794, %v1034
        %v1099 = vadd.f32 %v795, %v1035
        %v1100 = vadd.f32 %v796, %v1036
        %v1101 = vadd.f32 %v797, %v1037
        %v1102 = vadd.f32 %v798, %v1038
        %v1103 = vadd.f32 %v799, %v1039
        %v1104 = vadd.f32 %v800, %v1040
        %v1105 = vadd.f32 %v801, %v1041
        %v1106 = vadd.f32 %v802, %v1042
        %v1107 = vadd.f32 %v803, %v1043
        %v1108 = vadd.f32 %v804, %v1044
        %v1109 = vadd.f32 %v805, %v1045
        %v1110 = vadd.f32 %v806, %v1046
        %v1111 = vadd.f32 %v807, %v1047
        %v1112 = vadd.f32 %v808, %v1048
        %v1113 = vadd.f32 %v809, %v1049
        %v1114 = vadd.f32 %v810, %v1050
        %v1115 = vadd.f32 %v811, %v1051
        %v1116 = vadd.f32 %v812, %v1052
        %v1117 = vadd.f32 %v813, %v1053
        %v1118 = vadd.f32 %v814, %v1054
        %v1119 = vadd.f32 %v815, %v1055
        %v1120 = vadd.f32 %v816, %v1056
        %v1121 = vadd.f32 %v817, %v1057
        %v1122 = vadd.f32 %v818, %v1058
        %v1123 = vadd.f32 %v819, %v1059
        %v1124 = vadd.f32 %v820, %v1060
        %v1125 = vadd.f32 %v821, %v1061
        %v1126 = vadd.f32 %v822, %v1062
        %v1127 = vadd.f32 %v823, %v1063
        %v1128 = vadd.f32 %v824, %v1064
        %v1129 = vadd.f32 %v825, %v1065
        %v1130 = vadd.f32 %v826, %v1066
        %v1131 = vadd.f32 %v827, %v1067
        %v1132 = vadd.f32 %v828, %v1068
        %v1133 = vadd.f32 %v829, %v1069
        %v1134 = vadd.f32 %v830, %v1070
        %v1135 = vadd.f32 %v831, %v1071
        %v1136 = vadd.f32 %v832, %v1072
        %v1137 = vadd.f32 %v833, %v1073
        %v1138 = vadd.f32 %v834, %v1074
        %v1139 = vadd.f32 %v835, %v1075
        %v1140 = vadd.f32 %v836, %v1076
        %v1141 = vadd.f32 %v837, %v1077
        %v1142 = vadd.f32 %v838, %v1078
        %v1143 = vadd.f32 %v839, %v1079
        %v1144 = vadd.f32 %v840, %v1080
        %v1145 = vadd.f32 %v841, %v1081
        %v1146 = vadd.f32 %v842, %v1082
        %1147 = vset.pattern.permute.xlu0 3
        %1148 = vperm.xlu0 %1147, %v214
        %v1149 = vpop.permute.xlu0 %1148
        %1150 = vset.pattern.permute.xlu0 3
        %1151 = vperm.xlu0 %1150, %v215
        %v1152 = vpop.permute.xlu0 %1151
        %1153 = vset.pattern.permute.xlu0 3
        %1154 = vperm.xlu0 %1153, %v216
        %v1155 = vpop.permute.xlu0 %1154
        %1156 = vset.pattern.permute.xlu0 3
        %1157 = vperm.xlu0 %1156, %v217
        %v1158 = vpop.permute.xlu0 %1157
        %1159 = vset.pattern.permute.xlu0 3
        %1160 = vperm.xlu0 %1159, %v218
        %v1161 = vpop.permute.xlu0 %1160
        %1162 = vset.pattern.permute.xlu0 3
        %1163 = vperm.xlu0 %1162, %v219
        %v1164 = vpop.permute.xlu0 %1163
        %1165 = vset.pattern.permute.xlu0 3
        %1166 = vperm.xlu0 %1165, %v220
        %v1167 = vpop.permute.xlu0 %1166
        %1168 = vset.pattern.permute.xlu0 3
        %1169 = vperm.xlu0 %1168, %v221
        %v1170 = vpop.permute.xlu0 %1169
        %1171 = vset.pattern.permute.xlu0 3
        %1172 = vperm.xlu0 %1171, %v222
        %v1173 = vpop.permute.xlu0 %1172
        %1174 = vset.pattern.permute.xlu0 3
        %1175 = vperm.xlu0 %1174, %v223
        %v1176 = vpop.permute.xlu0 %1175
        %1177 = vset.pattern.permute.xlu0 3
        %1178 = vperm.xlu0 %1177, %v224
        %v1179 = vpop.permute.xlu0 %1178
        %1180 = vset.pattern.permute.xlu0 3
        %1181 = vperm.xlu0 %1180, %v225
        %v1182 = vpop.permute.xlu0 %1181
        %1183 = vset.pattern.permute.xlu0 3
        %1184 = vperm.xlu0 %1183, %v226
        %v1185 = vpop.permute.xlu0 %1184
        %1186 = vset.pattern.permute.xlu0 3
        %1187 = vperm.xlu0 %1186, %v227
        %v1188 = vpop.permute.xlu0 %1187
        %1189 = vset.pattern.permute.xlu0 3
        %1190 = vperm.xlu0 %1189, %v228
        %v1191 = vpop.permute.xlu0 %1190
        %1192 = vset.pattern.permute.xlu0 3
        %1193 = vperm.xlu0 %1192, %v229
        %v1194 = vpop.permute.xlu0 %1193
        %vm1195 = vcmp.eq.s32.totalorder %v1149, %v231
        %vm1196 = vcmp.eq.s32.totalorder %v1149, %v232
        %vm1197 = vcmp.eq.s32.totalorder %v1149, %v233
        %vm1198 = vcmp.eq.s32.totalorder %v1149, %v234
        %vm1199 = vcmp.eq.s32.totalorder %v1152, %v231
        %vm1200 = vcmp.eq.s32.totalorder %v1152, %v232
        %vm1201 = vcmp.eq.s32.totalorder %v1152, %v233
        %vm1202 = vcmp.eq.s32.totalorder %v1152, %v234
        %vm1203 = vcmp.eq.s32.totalorder %v1155, %v231
        %vm1204 = vcmp.eq.s32.totalorder %v1155, %v232
        %vm1205 = vcmp.eq.s32.totalorder %v1155, %v233
        %vm1206 = vcmp.eq.s32.totalorder %v1155, %v234
        %vm1207 = vcmp.eq.s32.totalorder %v1158, %v231
        %vm1208 = vcmp.eq.s32.totalorder %v1158, %v232
        %vm1209 = vcmp.eq.s32.totalorder %v1158, %v233
        %vm1210 = vcmp.eq.s32.totalorder %v1158, %v234
        %vm1211 = vcmp.eq.s32.totalorder %v1161, %v231
        %vm1212 = vcmp.eq.s32.totalorder %v1161, %v232
        %vm1213 = vcmp.eq.s32.totalorder %v1161, %v233
        %vm1214 = vcmp.eq.s32.totalorder %v1161, %v234
        %vm1215 = vcmp.eq.s32.totalorder %v1164, %v231
        %vm1216 = vcmp.eq.s32.totalorder %v1164, %v232
        %vm1217 = vcmp.eq.s32.totalorder %v1164, %v233
        %vm1218 = vcmp.eq.s32.totalorder %v1164, %v234
        %vm1219 = vcmp.eq.s32.totalorder %v1167, %v231
        %vm1220 = vcmp.eq.s32.totalorder %v1167, %v232
        %vm1221 = vcmp.eq.s32.totalorder %v1167, %v233
        %vm1222 = vcmp.eq.s32.totalorder %v1167, %v234
        %vm1223 = vcmp.eq.s32.totalorder %v1170, %v231
        %vm1224 = vcmp.eq.s32.totalorder %v1170, %v232
        %vm1225 = vcmp.eq.s32.totalorder %v1170, %v233
        %vm1226 = vcmp.eq.s32.totalorder %v1170, %v234
        %vm1227 = vcmp.eq.s32.totalorder %v1173, %v231
        %vm1228 = vcmp.eq.s32.totalorder %v1173, %v232
        %vm1229 = vcmp.eq.s32.totalorder %v1173, %v233
        %vm1230 = vcmp.eq.s32.totalorder %v1173, %v234
        %vm1231 = vcmp.eq.s32.totalorder %v1176, %v231
        %vm1232 = vcmp.eq.s32.totalorder %v1176, %v232
        %vm1233 = vcmp.eq.s32.totalorder %v1176, %v233
        %vm1234 = vcmp.eq.s32.totalorder %v1176, %v234
        %vm1235 = vcmp.eq.s32.totalorder %v1179, %v231
        %vm1236 = vcmp.eq.s32.totalorder %v1179, %v232
        %vm1237 = vcmp.eq.s32.totalorder %v1179, %v233
        %vm1238 = vcmp.eq.s32.totalorder %v1179, %v234
        %vm1239 = vcmp.eq.s32.totalorder %v1182, %v231
        %vm1240 = vcmp.eq.s32.totalorder %v1182, %v232
        %vm1241 = vcmp.eq.s32.totalorder %v1182, %v233
        %vm1242 = vcmp.eq.s32.totalorder %v1182, %v234
        %vm1243 = vcmp.eq.s32.totalorder %v1185, %v231
        %vm1244 = vcmp.eq.s32.totalorder %v1185, %v232
        %vm1245 = vcmp.eq.s32.totalorder %v1185, %v233
        %vm1246 = vcmp.eq.s32.totalorder %v1185, %v234
        %vm1247 = vcmp.eq.s32.totalorder %v1188, %v231
        %vm1248 = vcmp.eq.s32.totalorder %v1188, %v232
        %vm1249 = vcmp.eq.s32.totalorder %v1188, %v233
        %vm1250 = vcmp.eq.s32.totalorder %v1188, %v234
        %vm1251 = vcmp.eq.s32.totalorder %v1191, %v231
        %vm1252 = vcmp.eq.s32.totalorder %v1191, %v232
        %vm1253 = vcmp.eq.s32.totalorder %v1191, %v233
        %vm1254 = vcmp.eq.s32.totalorder %v1191, %v234
        %vm1255 = vcmp.eq.s32.totalorder %v1194, %v231
        %vm1256 = vcmp.eq.s32.totalorder %v1194, %v232
        %vm1257 = vcmp.eq.s32.totalorder %v1194, %v233
        %vm1258 = vcmp.eq.s32.totalorder %v1194, %v234
        %v1259 = vsel %vm1195, 1, 0
        %v1260 = vsel %vm1196, 1, 0
        %v1261 = vsel %vm1197, 1, 0
        %v1262 = vsel %vm1198, 1, 0
        %v1263 = vsel %vm1199, 1, 0
        %v1264 = vsel %vm1200, 1, 0
        %v1265 = vsel %vm1201, 1, 0
        %v1266 = vsel %vm1202, 1, 0
        %v1267 = vsel %vm1203, 1, 0
        %v1268 = vsel %vm1204, 1, 0
        %v1269 = vsel %vm1205, 1, 0
        %v1270 = vsel %vm1206, 1, 0
        %v1271 = vsel %vm1207, 1, 0
        %v1272 = vsel %vm1208, 1, 0
        %v1273 = vsel %vm1209, 1, 0
        %v1274 = vsel %vm1210, 1, 0
        %v1275 = vsel %vm1211, 1, 0
        %v1276 = vsel %vm1212, 1, 0
        %v1277 = vsel %vm1213, 1, 0
        %v1278 = vsel %vm1214, 1, 0
        %v1279 = vsel %vm1215, 1, 0
        %v1280 = vsel %vm1216, 1, 0
        %v1281 = vsel %vm1217, 1, 0
        %v1282 = vsel %vm1218, 1, 0
        %v1283 = vsel %vm1219, 1, 0
        %v1284 = vsel %vm1220, 1, 0
        %v1285 = vsel %vm1221, 1, 0
        %v1286 = vsel %vm1222, 1, 0
        %v1287 = vsel %vm1223, 1, 0
        %v1288 = vsel %vm1224, 1, 0
        %v1289 = vsel %vm1225, 1, 0
        %v1290 = vsel %vm1226, 1, 0
        %v1291 = vsel %vm1227, 1, 0
        %v1292 = vsel %vm1228, 1, 0
        %v1293 = vsel %vm1229, 1, 0
        %v1294 = vsel %vm1230, 1, 0
        %v1295 = vsel %vm1231, 1, 0
        %v1296 = vsel %vm1232, 1, 0
        %v1297 = vsel %vm1233, 1, 0
        %v1298 = vsel %vm1234, 1, 0
        %v1299 = vsel %vm1235, 1, 0
        %v1300 = vsel %vm1236, 1, 0
        %v1301 = vsel %vm1237, 1, 0
        %v1302 = vsel %vm1238, 1, 0
        %v1303 = vsel %vm1239, 1, 0
        %v1304 = vsel %vm1240, 1, 0
        %v1305 = vsel %vm1241, 1, 0
        %v1306 = vsel %vm1242, 1, 0
        %v1307 = vsel %vm1243, 1, 0
        %v1308 = vsel %vm1244, 1, 0
        %v1309 = vsel %vm1245, 1, 0
        %v1310 = vsel %vm1246, 1, 0
        %v1311 = vsel %vm1247, 1, 0
        %v1312 = vsel %vm1248, 1, 0
        %v1313 = vsel %vm1249, 1, 0
        %v1314 = vsel %vm1250, 1, 0
        %v1315 = vsel %vm1251, 1, 0
        %v1316 = vsel %vm1252, 1, 0
        %v1317 = vsel %vm1253, 1, 0
        %v1318 = vsel %vm1254, 1, 0
        %v1319 = vsel %vm1255, 1, 0
        %v1320 = vsel %vm1256, 1, 0
        %v1321 = vsel %vm1257, 1, 0
        %v1322 = vsel %vm1258, 1, 0
        %v1323 = vcvt.s32.f32 %v1259
        %v1324 = vcvt.s32.f32 %v1260
        %v1325 = vcvt.s32.f32 %v1261
        %v1326 = vcvt.s32.f32 %v1262
        %v1327 = vcvt.s32.f32 %v1263
        %v1328 = vcvt.s32.f32 %v1264
        %v1329 = vcvt.s32.f32 %v1265
        %v1330 = vcvt.s32.f32 %v1266
        %v1331 = vcvt.s32.f32 %v1267
        %v1332 = vcvt.s32.f32 %v1268
        %v1333 = vcvt.s32.f32 %v1269
        %v1334 = vcvt.s32.f32 %v1270
        %v1335 = vcvt.s32.f32 %v1271
        %v1336 = vcvt.s32.f32 %v1272
        %v1337 = vcvt.s32.f32 %v1273
        %v1338 = vcvt.s32.f32 %v1274
        %v1339 = vcvt.s32.f32 %v1275
        %v1340 = vcvt.s32.f32 %v1276
        %v1341 = vcvt.s32.f32 %v1277
        %v1342 = vcvt.s32.f32 %v1278
        %v1343 = vcvt.s32.f32 %v1279
        %v1344 = vcvt.s32.f32 %v1280
        %v1345 = vcvt.s32.f32 %v1281
        %v1346 = vcvt.s32.f32 %v1282
        %v1347 = vcvt.s32.f32 %v1283
        %v1348 = vcvt.s32.f32 %v1284
        %v1349 = vcvt.s32.f32 %v1285
        %v1350 = vcvt.s32.f32 %v1286
        %v1351 = vcvt.s32.f32 %v1287
        %v1352 = vcvt.s32.f32 %v1288
        %v1353 = vcvt.s32.f32 %v1289
        %v1354 = vcvt.s32.f32 %v1290
        %v1355 = vcvt.s32.f32 %v1291
        %v1356 = vcvt.s32.f32 %v1292
        %v1357 = vcvt.s32.f32 %v1293
        %v1358 = vcvt.s32.f32 %v1294
        %v1359 = vcvt.s32.f32 %v1295
        %v1360 = vcvt.s32.f32 %v1296
        %v1361 = vcvt.s32.f32 %v1297
        %v1362 = vcvt.s32.f32 %v1298
        %v1363 = vcvt.s32.f32 %v1299
        %v1364 = vcvt.s32.f32 %v1300
        %v1365 = vcvt.s32.f32 %v1301
        %v1366 = vcvt.s32.f32 %v1302
        %v1367 = vcvt.s32.f32 %v1303
        %v1368 = vcvt.s32.f32 %v1304
        %v1369 = vcvt.s32.f32 %v1305
        %v1370 = vcvt.s32.f32 %v1306
        %v1371 = vcvt.s32.f32 %v1307
        %v1372 = vcvt.s32.f32 %v1308
        %v1373 = vcvt.s32.f32 %v1309
        %v1374 = vcvt.s32.f32 %v1310
        %v1375 = vcvt.s32.f32 %v1311
        %v1376 = vcvt.s32.f32 %v1312
        %v1377 = vcvt.s32.f32 %v1313
        %v1378 = vcvt.s32.f32 %v1314
        %v1379 = vcvt.s32.f32 %v1315
        %v1380 = vcvt.s32.f32 %v1316
        %v1381 = vcvt.s32.f32 %v1317
        %v1382 = vcvt.s32.f32 %v1318
        %v1383 = vcvt.s32.f32 %v1319
        %v1384 = vcvt.s32.f32 %v1320
        %v1385 = vcvt.s32.f32 %v1321
        %v1386 = vcvt.s32.f32 %v1322
        %v1387 = vadd.f32 %v1083, %v1323
        %v1388 = vadd.f32 %v1084, %v1324
        %v1389 = vadd.f32 %v1085, %v1325
        %v1390 = vadd.f32 %v1086, %v1326
        %v1391 = vadd.f32 %v1087, %v1327
        %v1392 = vadd.f32 %v1088, %v1328
        %v1393 = vadd.f32 %v1089, %v1329
        %v1394 = vadd.f32 %v1090, %v1330
        %v1395 = vadd.f32 %v1091, %v1331
        %v1396 = vadd.f32 %v1092, %v1332
        %v1397 = vadd.f32 %v1093, %v1333
        %v1398 = vadd.f32 %v1094, %v1334
        %v1399 = vadd.f32 %v1095, %v1335
        %v1400 = vadd.f32 %v1096, %v1336
        %v1401 = vadd.f32 %v1097, %v1337
        %v1402 = vadd.f32 %v1098, %v1338
        %v1403 = vadd.f32 %v1099, %v1339
        %v1404 = vadd.f32 %v1100, %v1340
        %v1405 = vadd.f32 %v1101, %v1341
        %v1406 = vadd.f32 %v1102, %v1342
        %v1407 = vadd.f32 %v1103, %v1343
        %v1408 = vadd.f32 %v1104, %v1344
        %v1409 = vadd.f32 %v1105, %v1345
        %v1410 = vadd.f32 %v1106, %v1346
        %v1411 = vadd.f32 %v1107, %v1347
        %v1412 = vadd.f32 %v1108, %v1348
        %v1413 = vadd.f32 %v1109, %v1349
        %v1414 = vadd.f32 %v1110, %v1350
        %v1415 = vadd.f32 %v1111, %v1351
        %v1416 = vadd.f32 %v1112, %v1352
        %v1417 = vadd.f32 %v1113, %v1353
        %v1418 = vadd.f32 %v1114, %v1354
        %v1419 = vadd.f32 %v1115, %v1355
        %v1420 = vadd.f32 %v1116, %v1356
        %v1421 = vadd.f32 %v1117, %v1357
        %v1422 = vadd.f32 %v1118, %v1358
        %v1423 = vadd.f32 %v1119, %v1359
        %v1424 = vadd.f32 %v1120, %v1360
        %v1425 = vadd.f32 %v1121, %v1361
        %v1426 = vadd.f32 %v1122, %v1362
        %v1427 = vadd.f32 %v1123, %v1363
        %v1428 = vadd.f32 %v1124, %v1364
        %v1429 = vadd.f32 %v1125, %v1365
        %v1430 = vadd.f32 %v1126, %v1366
        %v1431 = vadd.f32 %v1127, %v1367
        %v1432 = vadd.f32 %v1128, %v1368
        %v1433 = vadd.f32 %v1129, %v1369
        %v1434 = vadd.f32 %v1130, %v1370
        %v1435 = vadd.f32 %v1131, %v1371
        %v1436 = vadd.f32 %v1132, %v1372
        %v1437 = vadd.f32 %v1133, %v1373
        %v1438 = vadd.f32 %v1134, %v1374
        %v1439 = vadd.f32 %v1135, %v1375
        %v1440 = vadd.f32 %v1136, %v1376
        %v1441 = vadd.f32 %v1137, %v1377
        %v1442 = vadd.f32 %v1138, %v1378
        %v1443 = vadd.f32 %v1139, %v1379
        %v1444 = vadd.f32 %v1140, %v1380
        %v1445 = vadd.f32 %v1141, %v1381
        %v1446 = vadd.f32 %v1142, %v1382
        %v1447 = vadd.f32 %v1143, %v1383
        %v1448 = vadd.f32 %v1144, %v1384
        %v1449 = vadd.f32 %v1145, %v1385
        %v1450 = vadd.f32 %v1146, %v1386
        %1451 = vset.pattern.permute.xlu0 4
        %1452 = vperm.xlu0 %1451, %v214
        %v1453 = vpop.permute.xlu0 %1452
        %1454 = vset.pattern.permute.xlu0 4
        %1455 = vperm.xlu0 %1454, %v215
        %v1456 = vpop.permute.xlu0 %1455
        %1457 = vset.pattern.permute.xlu0 4
        %1458 = vperm.xlu0 %1457, %v216
        %v1459 = vpop.permute.xlu0 %1458
        %1460 = vset.pattern.permute.xlu0 4
        %1461 = vperm.xlu0 %1460, %v217
        %v1462 = vpop.permute.xlu0 %1461
        %1463 = vset.pattern.permute.xlu0 4
        %1464 = vperm.xlu0 %1463, %v218
        %v1465 = vpop.permute.xlu0 %1464
        %1466 = vset.pattern.permute.xlu0 4
        %1467 = vperm.xlu0 %1466, %v219
        %v1468 = vpop.permute.xlu0 %1467
        %1469 = vset.pattern.permute.xlu0 4
        %1470 = vperm.xlu0 %1469, %v220
        %v1471 = vpop.permute.xlu0 %1470
        %1472 = vset.pattern.permute.xlu0 4
        %1473 = vperm.xlu0 %1472, %v221
        %v1474 = vpop.permute.xlu0 %1473
        %1475 = vset.pattern.permute.xlu0 4
        %1476 = vperm.xlu0 %1475, %v222
        %v1477 = vpop.permute.xlu0 %1476
        %1478 = vset.pattern.permute.xlu0 4
        %1479 = vperm.xlu0 %1478, %v223
        %v1480 = vpop.permute.xlu0 %1479
        %1481 = vset.pattern.permute.xlu0 4
        %1482 = vperm.xlu0 %1481, %v224
        %v1483 = vpop.permute.xlu0 %1482
        %1484 = vset.pattern.permute.xlu0 4
        %1485 = vperm.xlu0 %1484, %v225
        %v1486 = vpop.permute.xlu0 %1485
        %1487 = vset.pattern.permute.xlu0 4
        %1488 = vperm.xlu0 %1487, %v226
        %v1489 = vpop.permute.xlu0 %1488
        %1490 = vset.pattern.permute.xlu0 4
        %1491 = vperm.xlu0 %1490, %v227
        %v1492 = vpop.permute.xlu0 %1491
        %1493 = vset.pattern.permute.xlu0 4
        %1494 = vperm.xlu0 %1493, %v228
        %v1495 = vpop.permute.xlu0 %1494
        %1496 = vset.pattern.permute.xlu0 4
        %1497 = vperm.xlu0 %1496, %v229
        %v1498 = vpop.permute.xlu0 %1497
        %vm1499 = vcmp.eq.s32.totalorder %v1453, %v231
        %vm1500 = vcmp.eq.s32.totalorder %v1453, %v232
        %vm1501 = vcmp.eq.s32.totalorder %v1453, %v233
        %vm1502 = vcmp.eq.s32.totalorder %v1453, %v234
        %vm1503 = vcmp.eq.s32.totalorder %v1456, %v231
        %vm1504 = vcmp.eq.s32.totalorder %v1456, %v232
        %vm1505 = vcmp.eq.s32.totalorder %v1456, %v233
        %vm1506 = vcmp.eq.s32.totalorder %v1456, %v234
        %vm1507 = vcmp.eq.s32.totalorder %v1459, %v231
        %vm1508 = vcmp.eq.s32.totalorder %v1459, %v232
        %vm1509 = vcmp.eq.s32.totalorder %v1459, %v233
        %vm1510 = vcmp.eq.s32.totalorder %v1459, %v234
        %vm1511 = vcmp.eq.s32.totalorder %v1462, %v231
        %vm1512 = vcmp.eq.s32.totalorder %v1462, %v232
        %vm1513 = vcmp.eq.s32.totalorder %v1462, %v233
        %vm1514 = vcmp.eq.s32.totalorder %v1462, %v234
        %vm1515 = vcmp.eq.s32.totalorder %v1465, %v231
        %vm1516 = vcmp.eq.s32.totalorder %v1465, %v232
        %vm1517 = vcmp.eq.s32.totalorder %v1465, %v233
        %vm1518 = vcmp.eq.s32.totalorder %v1465, %v234
        %vm1519 = vcmp.eq.s32.totalorder %v1468, %v231
        %vm1520 = vcmp.eq.s32.totalorder %v1468, %v232
        %vm1521 = vcmp.eq.s32.totalorder %v1468, %v233
        %vm1522 = vcmp.eq.s32.totalorder %v1468, %v234
        %vm1523 = vcmp.eq.s32.totalorder %v1471, %v231
        %vm1524 = vcmp.eq.s32.totalorder %v1471, %v232
        %vm1525 = vcmp.eq.s32.totalorder %v1471, %v233
        %vm1526 = vcmp.eq.s32.totalorder %v1471, %v234
        %vm1527 = vcmp.eq.s32.totalorder %v1474, %v231
        %vm1528 = vcmp.eq.s32.totalorder %v1474, %v232
        %vm1529 = vcmp.eq.s32.totalorder %v1474, %v233
        %vm1530 = vcmp.eq.s32.totalorder %v1474, %v234
        %vm1531 = vcmp.eq.s32.totalorder %v1477, %v231
        %vm1532 = vcmp.eq.s32.totalorder %v1477, %v232
        %vm1533 = vcmp.eq.s32.totalorder %v1477, %v233
        %vm1534 = vcmp.eq.s32.totalorder %v1477, %v234
        %vm1535 = vcmp.eq.s32.totalorder %v1480, %v231
        %vm1536 = vcmp.eq.s32.totalorder %v1480, %v232
        %vm1537 = vcmp.eq.s32.totalorder %v1480, %v233
        %vm1538 = vcmp.eq.s32.totalorder %v1480, %v234
        %vm1539 = vcmp.eq.s32.totalorder %v1483, %v231
        %vm1540 = vcmp.eq.s32.totalorder %v1483, %v232
        %vm1541 = vcmp.eq.s32.totalorder %v1483, %v233
        %vm1542 = vcmp.eq.s32.totalorder %v1483, %v234
        %vm1543 = vcmp.eq.s32.totalorder %v1486, %v231
        %vm1544 = vcmp.eq.s32.totalorder %v1486, %v232
        %vm1545 = vcmp.eq.s32.totalorder %v1486, %v233
        %vm1546 = vcmp.eq.s32.totalorder %v1486, %v234
        %vm1547 = vcmp.eq.s32.totalorder %v1489, %v231
        %vm1548 = vcmp.eq.s32.totalorder %v1489, %v232
        %vm1549 = vcmp.eq.s32.totalorder %v1489, %v233
        %vm1550 = vcmp.eq.s32.totalorder %v1489, %v234
        %vm1551 = vcmp.eq.s32.totalorder %v1492, %v231
        %vm1552 = vcmp.eq.s32.totalorder %v1492, %v232
        %vm1553 = vcmp.eq.s32.totalorder %v1492, %v233
        %vm1554 = vcmp.eq.s32.totalorder %v1492, %v234
        %vm1555 = vcmp.eq.s32.totalorder %v1495, %v231
        %vm1556 = vcmp.eq.s32.totalorder %v1495, %v232
        %vm1557 = vcmp.eq.s32.totalorder %v1495, %v233
        %vm1558 = vcmp.eq.s32.totalorder %v1495, %v234
        %vm1559 = vcmp.eq.s32.totalorder %v1498, %v231
        %vm1560 = vcmp.eq.s32.totalorder %v1498, %v232
        %vm1561 = vcmp.eq.s32.totalorder %v1498, %v233
        %vm1562 = vcmp.eq.s32.totalorder %v1498, %v234
        %v1563 = vsel %vm1499, 1, 0
        %v1564 = vsel %vm1500, 1, 0
        %v1565 = vsel %vm1501, 1, 0
        %v1566 = vsel %vm1502, 1, 0
        %v1567 = vsel %vm1503, 1, 0
        %v1568 = vsel %vm1504, 1, 0
        %v1569 = vsel %vm1505, 1, 0
        %v1570 = vsel %vm1506, 1, 0
        %v1571 = vsel %vm1507, 1, 0
        %v1572 = vsel %vm1508, 1, 0
        %v1573 = vsel %vm1509, 1, 0
        %v1574 = vsel %vm1510, 1, 0
        %v1575 = vsel %vm1511, 1, 0
        %v1576 = vsel %vm1512, 1, 0
        %v1577 = vsel %vm1513, 1, 0
        %v1578 = vsel %vm1514, 1, 0
        %v1579 = vsel %vm1515, 1, 0
        %v1580 = vsel %vm1516, 1, 0
        %v1581 = vsel %vm1517, 1, 0
        %v1582 = vsel %vm1518, 1, 0
        %v1583 = vsel %vm1519, 1, 0
        %v1584 = vsel %vm1520, 1, 0
        %v1585 = vsel %vm1521, 1, 0
        %v1586 = vsel %vm1522, 1, 0
        %v1587 = vsel %vm1523, 1, 0
        %v1588 = vsel %vm1524, 1, 0
        %v1589 = vsel %vm1525, 1, 0
        %v1590 = vsel %vm1526, 1, 0
        %v1591 = vsel %vm1527, 1, 0
        %v1592 = vsel %vm1528, 1, 0
        %v1593 = vsel %vm1529, 1, 0
        %v1594 = vsel %vm1530, 1, 0
        %v1595 = vsel %vm1531, 1, 0
        %v1596 = vsel %vm1532, 1, 0
        %v1597 = vsel %vm1533, 1, 0
        %v1598 = vsel %vm1534, 1, 0
        %v1599 = vsel %vm1535, 1, 0
        %v1600 = vsel %vm1536, 1, 0
        %v1601 = vsel %vm1537, 1, 0
        %v1602 = vsel %vm1538, 1, 0
        %v1603 = vsel %vm1539, 1, 0
        %v1604 = vsel %vm1540, 1, 0
        %v1605 = vsel %vm1541, 1, 0
        %v1606 = vsel %vm1542, 1, 0
        %v1607 = vsel %vm1543, 1, 0
        %v1608 = vsel %vm1544, 1, 0
        %v1609 = vsel %vm1545, 1, 0
        %v1610 = vsel %vm1546, 1, 0
        %v1611 = vsel %vm1547, 1, 0
        %v1612 = vsel %vm1548, 1, 0
        %v1613 = vsel %vm1549, 1, 0
        %v1614 = vsel %vm1550, 1, 0
        %v1615 = vsel %vm1551, 1, 0
        %v1616 = vsel %vm1552, 1, 0
        %v1617 = vsel %vm1553, 1, 0
        %v1618 = vsel %vm1554, 1, 0
        %v1619 = vsel %vm1555, 1, 0
        %v1620 = vsel %vm1556, 1, 0
        %v1621 = vsel %vm1557, 1, 0
        %v1622 = vsel %vm1558, 1, 0
        %v1623 = vsel %vm1559, 1, 0
        %v1624 = vsel %vm1560, 1, 0
        %v1625 = vsel %vm1561, 1, 0
        %v1626 = vsel %vm1562, 1, 0
        %v1627 = vcvt.s32.f32 %v1563
        %v1628 = vcvt.s32.f32 %v1564
        %v1629 = vcvt.s32.f32 %v1565
        %v1630 = vcvt.s32.f32 %v1566
        %v1631 = vcvt.s32.f32 %v1567
        %v1632 = vcvt.s32.f32 %v1568
        %v1633 = vcvt.s32.f32 %v1569
        %v1634 = vcvt.s32.f32 %v1570
        %v1635 = vcvt.s32.f32 %v1571
        %v1636 = vcvt.s32.f32 %v1572
        %v1637 = vcvt.s32.f32 %v1573
        %v1638 = vcvt.s32.f32 %v1574
        %v1639 = vcvt.s32.f32 %v1575
        %v1640 = vcvt.s32.f32 %v1576
        %v1641 = vcvt.s32.f32 %v1577
        %v1642 = vcvt.s32.f32 %v1578
        %v1643 = vcvt.s32.f32 %v1579
        %v1644 = vcvt.s32.f32 %v1580
        %v1645 = vcvt.s32.f32 %v1581
        %v1646 = vcvt.s32.f32 %v1582
        %v1647 = vcvt.s32.f32 %v1583
        %v1648 = vcvt.s32.f32 %v1584
        %v1649 = vcvt.s32.f32 %v1585
        %v1650 = vcvt.s32.f32 %v1586
        %v1651 = vcvt.s32.f32 %v1587
        %v1652 = vcvt.s32.f32 %v1588
        %v1653 = vcvt.s32.f32 %v1589
        %v1654 = vcvt.s32.f32 %v1590
        %v1655 = vcvt.s32.f32 %v1591
        %v1656 = vcvt.s32.f32 %v1592
        %v1657 = vcvt.s32.f32 %v1593
        %v1658 = vcvt.s32.f32 %v1594
        %v1659 = vcvt.s32.f32 %v1595
        %v1660 = vcvt.s32.f32 %v1596
        %v1661 = vcvt.s32.f32 %v1597
        %v1662 = vcvt.s32.f32 %v1598
        %v1663 = vcvt.s32.f32 %v1599
        %v1664 = vcvt.s32.f32 %v1600
        %v1665 = vcvt.s32.f32 %v1601
        %v1666 = vcvt.s32.f32 %v1602
        %v1667 = vcvt.s32.f32 %v1603
        %v1668 = vcvt.s32.f32 %v1604
        %v1669 = vcvt.s32.f32 %v1605
        %v1670 = vcvt.s32.f32 %v1606
        %v1671 = vcvt.s32.f32 %v1607
        %v1672 = vcvt.s32.f32 %v1608
        %v1673 = vcvt.s32.f32 %v1609
        %v1674 = vcvt.s32.f32 %v1610
        %v1675 = vcvt.s32.f32 %v1611
        %v1676 = vcvt.s32.f32 %v1612
        %v1677 = vcvt.s32.f32 %v1613
        %v1678 = vcvt.s32.f32 %v1614
        %v1679 = vcvt.s32.f32 %v1615
        %v1680 = vcvt.s32.f32 %v1616
        %v1681 = vcvt.s32.f32 %v1617
        %v1682 = vcvt.s32.f32 %v1618
        %v1683 = vcvt.s32.f32 %v1619
        %v1684 = vcvt.s32.f32 %v1620
        %v1685 = vcvt.s32.f32 %v1621
        %v1686 = vcvt.s32.f32 %v1622
        %v1687 = vcvt.s32.f32 %v1623
        %v1688 = vcvt.s32.f32 %v1624
        %v1689 = vcvt.s32.f32 %v1625
        %v1690 = vcvt.s32.f32 %v1626
        %v1691 = vadd.f32 %v1387, %v1627
        %v1692 = vadd.f32 %v1388, %v1628
        %v1693 = vadd.f32 %v1389, %v1629
        %v1694 = vadd.f32 %v1390, %v1630
        %v1695 = vadd.f32 %v1391, %v1631
        %v1696 = vadd.f32 %v1392, %v1632
        %v1697 = vadd.f32 %v1393, %v1633
        %v1698 = vadd.f32 %v1394, %v1634
        %v1699 = vadd.f32 %v1395, %v1635
        %v1700 = vadd.f32 %v1396, %v1636
        %v1701 = vadd.f32 %v1397, %v1637
        %v1702 = vadd.f32 %v1398, %v1638
        %v1703 = vadd.f32 %v1399, %v1639
        %v1704 = vadd.f32 %v1400, %v1640
        %v1705 = vadd.f32 %v1401, %v1641
        %v1706 = vadd.f32 %v1402, %v1642
        %v1707 = vadd.f32 %v1403, %v1643
        %v1708 = vadd.f32 %v1404, %v1644
        %v1709 = vadd.f32 %v1405, %v1645
        %v1710 = vadd.f32 %v1406, %v1646
        %v1711 = vadd.f32 %v1407, %v1647
        %v1712 = vadd.f32 %v1408, %v1648
        %v1713 = vadd.f32 %v1409, %v1649
        %v1714 = vadd.f32 %v1410, %v1650
        %v1715 = vadd.f32 %v1411, %v1651
        %v1716 = vadd.f32 %v1412, %v1652
        %v1717 = vadd.f32 %v1413, %v1653
        %v1718 = vadd.f32 %v1414, %v1654
        %v1719 = vadd.f32 %v1415, %v1655
        %v1720 = vadd.f32 %v1416, %v1656
        %v1721 = vadd.f32 %v1417, %v1657
        %v1722 = vadd.f32 %v1418, %v1658
        %v1723 = vadd.f32 %v1419, %v1659
        %v1724 = vadd.f32 %v1420, %v1660
        %v1725 = vadd.f32 %v1421, %v1661
        %v1726 = vadd.f32 %v1422, %v1662
        %v1727 = vadd.f32 %v1423, %v1663
        %v1728 = vadd.f32 %v1424, %v1664
        %v1729 = vadd.f32 %v1425, %v1665
        %v1730 = vadd.f32 %v1426, %v1666
        %v1731 = vadd.f32 %v1427, %v1667
        %v1732 = vadd.f32 %v1428, %v1668
        %v1733 = vadd.f32 %v1429, %v1669
        %v1734 = vadd.f32 %v1430, %v1670
        %v1735 = vadd.f32 %v1431, %v1671
        %v1736 = vadd.f32 %v1432, %v1672
        %v1737 = vadd.f32 %v1433, %v1673
        %v1738 = vadd.f32 %v1434, %v1674
        %v1739 = vadd.f32 %v1435, %v1675
        %v1740 = vadd.f32 %v1436, %v1676
        %v1741 = vadd.f32 %v1437, %v1677
        %v1742 = vadd.f32 %v1438, %v1678
        %v1743 = vadd.f32 %v1439, %v1679
        %v1744 = vadd.f32 %v1440, %v1680
        %v1745 = vadd.f32 %v1441, %v1681
        %v1746 = vadd.f32 %v1442, %v1682
        %v1747 = vadd.f32 %v1443, %v1683
        %v1748 = vadd.f32 %v1444, %v1684
        %v1749 = vadd.f32 %v1445, %v1685
        %v1750 = vadd.f32 %v1446, %v1686
        %v1751 = vadd.f32 %v1447, %v1687
        %v1752 = vadd.f32 %v1448, %v1688
        %v1753 = vadd.f32 %v1449, %v1689
        %v1754 = vadd.f32 %v1450, %v1690
        %1755 = vset.pattern.permute.xlu0 5
        %1756 = vperm.xlu0 %1755, %v214
        %v1757 = vpop.permute.xlu0 %1756
        %1758 = vset.pattern.permute.xlu0 5
        %1759 = vperm.xlu0 %1758, %v215
        %v1760 = vpop.permute.xlu0 %1759
        %1761 = vset.pattern.permute.xlu0 5
        %1762 = vperm.xlu0 %1761, %v216
        %v1763 = vpop.permute.xlu0 %1762
        %1764 = vset.pattern.permute.xlu0 5
        %1765 = vperm.xlu0 %1764, %v217
        %v1766 = vpop.permute.xlu0 %1765
        %1767 = vset.pattern.permute.xlu0 5
        %1768 = vperm.xlu0 %1767, %v218
        %v1769 = vpop.permute.xlu0 %1768
        %1770 = vset.pattern.permute.xlu0 5
        %1771 = vperm.xlu0 %1770, %v219
        %v1772 = vpop.permute.xlu0 %1771
        %1773 = vset.pattern.permute.xlu0 5
        %1774 = vperm.xlu0 %1773, %v220
        %v1775 = vpop.permute.xlu0 %1774
        %1776 = vset.pattern.permute.xlu0 5
        %1777 = vperm.xlu0 %1776, %v221
        %v1778 = vpop.permute.xlu0 %1777
        %1779 = vset.pattern.permute.xlu0 5
        %1780 = vperm.xlu0 %1779, %v222
        %v1781 = vpop.permute.xlu0 %1780
        %1782 = vset.pattern.permute.xlu0 5
        %1783 = vperm.xlu0 %1782, %v223
        %v1784 = vpop.permute.xlu0 %1783
        %1785 = vset.pattern.permute.xlu0 5
        %1786 = vperm.xlu0 %1785, %v224
        %v1787 = vpop.permute.xlu0 %1786
        %1788 = vset.pattern.permute.xlu0 5
        %1789 = vperm.xlu0 %1788, %v225
        %v1790 = vpop.permute.xlu0 %1789
        %1791 = vset.pattern.permute.xlu0 5
        %1792 = vperm.xlu0 %1791, %v226
        %v1793 = vpop.permute.xlu0 %1792
        %1794 = vset.pattern.permute.xlu0 5
        %1795 = vperm.xlu0 %1794, %v227
        %v1796 = vpop.permute.xlu0 %1795
        %1797 = vset.pattern.permute.xlu0 5
        %1798 = vperm.xlu0 %1797, %v228
        %v1799 = vpop.permute.xlu0 %1798
        %1800 = vset.pattern.permute.xlu0 5
        %1801 = vperm.xlu0 %1800, %v229
        %v1802 = vpop.permute.xlu0 %1801
        %vm1803 = vcmp.eq.s32.totalorder %v1757, %v231
        %vm1804 = vcmp.eq.s32.totalorder %v1757, %v232
        %vm1805 = vcmp.eq.s32.totalorder %v1757, %v233
        %vm1806 = vcmp.eq.s32.totalorder %v1757, %v234
        %vm1807 = vcmp.eq.s32.totalorder %v1760, %v231
        %vm1808 = vcmp.eq.s32.totalorder %v1760, %v232
        %vm1809 = vcmp.eq.s32.totalorder %v1760, %v233
        %vm1810 = vcmp.eq.s32.totalorder %v1760, %v234
        %vm1811 = vcmp.eq.s32.totalorder %v1763, %v231
        %vm1812 = vcmp.eq.s32.totalorder %v1763, %v232
        %vm1813 = vcmp.eq.s32.totalorder %v1763, %v233
        %vm1814 = vcmp.eq.s32.totalorder %v1763, %v234
        %vm1815 = vcmp.eq.s32.totalorder %v1766, %v231
        %vm1816 = vcmp.eq.s32.totalorder %v1766, %v232
        %vm1817 = vcmp.eq.s32.totalorder %v1766, %v233
        %vm1818 = vcmp.eq.s32.totalorder %v1766, %v234
        %vm1819 = vcmp.eq.s32.totalorder %v1769, %v231
        %vm1820 = vcmp.eq.s32.totalorder %v1769, %v232
        %vm1821 = vcmp.eq.s32.totalorder %v1769, %v233
        %vm1822 = vcmp.eq.s32.totalorder %v1769, %v234
        %vm1823 = vcmp.eq.s32.totalorder %v1772, %v231
        %vm1824 = vcmp.eq.s32.totalorder %v1772, %v232
        %vm1825 = vcmp.eq.s32.totalorder %v1772, %v233
        %vm1826 = vcmp.eq.s32.totalorder %v1772, %v234
        %vm1827 = vcmp.eq.s32.totalorder %v1775, %v231
        %vm1828 = vcmp.eq.s32.totalorder %v1775, %v232
        %vm1829 = vcmp.eq.s32.totalorder %v1775, %v233
        %vm1830 = vcmp.eq.s32.totalorder %v1775, %v234
        %vm1831 = vcmp.eq.s32.totalorder %v1778, %v231
        %vm1832 = vcmp.eq.s32.totalorder %v1778, %v232
        %vm1833 = vcmp.eq.s32.totalorder %v1778, %v233
        %vm1834 = vcmp.eq.s32.totalorder %v1778, %v234
        %vm1835 = vcmp.eq.s32.totalorder %v1781, %v231
        %vm1836 = vcmp.eq.s32.totalorder %v1781, %v232
        %vm1837 = vcmp.eq.s32.totalorder %v1781, %v233
        %vm1838 = vcmp.eq.s32.totalorder %v1781, %v234
        %vm1839 = vcmp.eq.s32.totalorder %v1784, %v231
        %vm1840 = vcmp.eq.s32.totalorder %v1784, %v232
        %vm1841 = vcmp.eq.s32.totalorder %v1784, %v233
        %vm1842 = vcmp.eq.s32.totalorder %v1784, %v234
        %vm1843 = vcmp.eq.s32.totalorder %v1787, %v231
        %vm1844 = vcmp.eq.s32.totalorder %v1787, %v232
        %vm1845 = vcmp.eq.s32.totalorder %v1787, %v233
        %vm1846 = vcmp.eq.s32.totalorder %v1787, %v234
        %vm1847 = vcmp.eq.s32.totalorder %v1790, %v231
        %vm1848 = vcmp.eq.s32.totalorder %v1790, %v232
        %vm1849 = vcmp.eq.s32.totalorder %v1790, %v233
        %vm1850 = vcmp.eq.s32.totalorder %v1790, %v234
        %vm1851 = vcmp.eq.s32.totalorder %v1793, %v231
        %vm1852 = vcmp.eq.s32.totalorder %v1793, %v232
        %vm1853 = vcmp.eq.s32.totalorder %v1793, %v233
        %vm1854 = vcmp.eq.s32.totalorder %v1793, %v234
        %vm1855 = vcmp.eq.s32.totalorder %v1796, %v231
        %vm1856 = vcmp.eq.s32.totalorder %v1796, %v232
        %vm1857 = vcmp.eq.s32.totalorder %v1796, %v233
        %vm1858 = vcmp.eq.s32.totalorder %v1796, %v234
        %vm1859 = vcmp.eq.s32.totalorder %v1799, %v231
        %vm1860 = vcmp.eq.s32.totalorder %v1799, %v232
        %vm1861 = vcmp.eq.s32.totalorder %v1799, %v233
        %vm1862 = vcmp.eq.s32.totalorder %v1799, %v234
        %vm1863 = vcmp.eq.s32.totalorder %v1802, %v231
        %vm1864 = vcmp.eq.s32.totalorder %v1802, %v232
        %vm1865 = vcmp.eq.s32.totalorder %v1802, %v233
        %vm1866 = vcmp.eq.s32.totalorder %v1802, %v234
        %v1867 = vsel %vm1803, 1, 0
        %v1868 = vsel %vm1804, 1, 0
        %v1869 = vsel %vm1805, 1, 0
        %v1870 = vsel %vm1806, 1, 0
        %v1871 = vsel %vm1807, 1, 0
        %v1872 = vsel %vm1808, 1, 0
        %v1873 = vsel %vm1809, 1, 0
        %v1874 = vsel %vm1810, 1, 0
        %v1875 = vsel %vm1811, 1, 0
        %v1876 = vsel %vm1812, 1, 0
        %v1877 = vsel %vm1813, 1, 0
        %v1878 = vsel %vm1814, 1, 0
        %v1879 = vsel %vm1815, 1, 0
        %v1880 = vsel %vm1816, 1, 0
        %v1881 = vsel %vm1817, 1, 0
        %v1882 = vsel %vm1818, 1, 0
        %v1883 = vsel %vm1819, 1, 0
        %v1884 = vsel %vm1820, 1, 0
        %v1885 = vsel %vm1821, 1, 0
        %v1886 = vsel %vm1822, 1, 0
        %v1887 = vsel %vm1823, 1, 0
        %v1888 = vsel %vm1824, 1, 0
        %v1889 = vsel %vm1825, 1, 0
        %v1890 = vsel %vm1826, 1, 0
        %v1891 = vsel %vm1827, 1, 0
        %v1892 = vsel %vm1828, 1, 0
        %v1893 = vsel %vm1829, 1, 0
        %v1894 = vsel %vm1830, 1, 0
        %v1895 = vsel %vm1831, 1, 0
        %v1896 = vsel %vm1832, 1, 0
        %v1897 = vsel %vm1833, 1, 0
        %v1898 = vsel %vm1834, 1, 0
        %v1899 = vsel %vm1835, 1, 0
        %v1900 = vsel %vm1836, 1, 0
        %v1901 = vsel %vm1837, 1, 0
        %v1902 = vsel %vm1838, 1, 0
        %v1903 = vsel %vm1839, 1, 0
        %v1904 = vsel %vm1840, 1, 0
        %v1905 = vsel %vm1841, 1, 0
        %v1906 = vsel %vm1842, 1, 0
        %v1907 = vsel %vm1843, 1, 0
        %v1908 = vsel %vm1844, 1, 0
        %v1909 = vsel %vm1845, 1, 0
        %v1910 = vsel %vm1846, 1, 0
        %v1911 = vsel %vm1847, 1, 0
        %v1912 = vsel %vm1848, 1, 0
        %v1913 = vsel %vm1849, 1, 0
        %v1914 = vsel %vm1850, 1, 0
        %v1915 = vsel %vm1851, 1, 0
        %v1916 = vsel %vm1852, 1, 0
        %v1917 = vsel %vm1853, 1, 0
        %v1918 = vsel %vm1854, 1, 0
        %v1919 = vsel %vm1855, 1, 0
        %v1920 = vsel %vm1856, 1, 0
        %v1921 = vsel %vm1857, 1, 0
        %v1922 = vsel %vm1858, 1, 0
        %v1923 = vsel %vm1859, 1, 0
        %v1924 = vsel %vm1860, 1, 0
        %v1925 = vsel %vm1861, 1, 0
        %v1926 = vsel %vm1862, 1, 0
        %v1927 = vsel %vm1863, 1, 0
        %v1928 = vsel %vm1864, 1, 0
        %v1929 = vsel %vm1865, 1, 0
        %v1930 = vsel %vm1866, 1, 0
        %v1931 = vcvt.s32.f32 %v1867
        %v1932 = vcvt.s32.f32 %v1868
        %v1933 = vcvt.s32.f32 %v1869
        %v1934 = vcvt.s32.f32 %v1870
        %v1935 = vcvt.s32.f32 %v1871
        %v1936 = vcvt.s32.f32 %v1872
        %v1937 = vcvt.s32.f32 %v1873
        %v1938 = vcvt.s32.f32 %v1874
        %v1939 = vcvt.s32.f32 %v1875
        %v1940 = vcvt.s32.f32 %v1876
        %v1941 = vcvt.s32.f32 %v1877
        %v1942 = vcvt.s32.f32 %v1878
        %v1943 = vcvt.s32.f32 %v1879
        %v1944 = vcvt.s32.f32 %v1880
        %v1945 = vcvt.s32.f32 %v1881
        %v1946 = vcvt.s32.f32 %v1882
        %v1947 = vcvt.s32.f32 %v1883
        %v1948 = vcvt.s32.f32 %v1884
        %v1949 = vcvt.s32.f32 %v1885
        %v1950 = vcvt.s32.f32 %v1886
        %v1951 = vcvt.s32.f32 %v1887
        %v1952 = vcvt.s32.f32 %v1888
        %v1953 = vcvt.s32.f32 %v1889
        %v1954 = vcvt.s32.f32 %v1890
        %v1955 = vcvt.s32.f32 %v1891
        %v1956 = vcvt.s32.f32 %v1892
        %v1957 = vcvt.s32.f32 %v1893
        %v1958 = vcvt.s32.f32 %v1894
        %v1959 = vcvt.s32.f32 %v1895
        %v1960 = vcvt.s32.f32 %v1896
        %v1961 = vcvt.s32.f32 %v1897
        %v1962 = vcvt.s32.f32 %v1898
        %v1963 = vcvt.s32.f32 %v1899
        %v1964 = vcvt.s32.f32 %v1900
        %v1965 = vcvt.s32.f32 %v1901
        %v1966 = vcvt.s32.f32 %v1902
        %v1967 = vcvt.s32.f32 %v1903
        %v1968 = vcvt.s32.f32 %v1904
        %v1969 = vcvt.s32.f32 %v1905
        %v1970 = vcvt.s32.f32 %v1906
        %v1971 = vcvt.s32.f32 %v1907
        %v1972 = vcvt.s32.f32 %v1908
        %v1973 = vcvt.s32.f32 %v1909
        %v1974 = vcvt.s32.f32 %v1910
        %v1975 = vcvt.s32.f32 %v1911
        %v1976 = vcvt.s32.f32 %v1912
        %v1977 = vcvt.s32.f32 %v1913
        %v1978 = vcvt.s32.f32 %v1914
        %v1979 = vcvt.s32.f32 %v1915
        %v1980 = vcvt.s32.f32 %v1916
        %v1981 = vcvt.s32.f32 %v1917
        %v1982 = vcvt.s32.f32 %v1918
        %v1983 = vcvt.s32.f32 %v1919
        %v1984 = vcvt.s32.f32 %v1920
        %v1985 = vcvt.s32.f32 %v1921
        %v1986 = vcvt.s32.f32 %v1922
        %v1987 = vcvt.s32.f32 %v1923
        %v1988 = vcvt.s32.f32 %v1924
        %v1989 = vcvt.s32.f32 %v1925
        %v1990 = vcvt.s32.f32 %v1926
        %v1991 = vcvt.s32.f32 %v1927
        %v1992 = vcvt.s32.f32 %v1928
        %v1993 = vcvt.s32.f32 %v1929
        %v1994 = vcvt.s32.f32 %v1930
        %v1995 = vadd.f32 %v1691, %v1931
        %v1996 = vadd.f32 %v1692, %v1932
        %v1997 = vadd.f32 %v1693, %v1933
        %v1998 = vadd.f32 %v1694, %v1934
        %v1999 = vadd.f32 %v1695, %v1935
        %v2000 = vadd.f32 %v1696, %v1936
        %v2001 = vadd.f32 %v1697, %v1937
        %v2002 = vadd.f32 %v1698, %v1938
        %v2003 = vadd.f32 %v1699, %v1939
        %v2004 = vadd.f32 %v1700, %v1940
        %v2005 = vadd.f32 %v1701, %v1941
        %v2006 = vadd.f32 %v1702, %v1942
        %v2007 = vadd.f32 %v1703, %v1943
        %v2008 = vadd.f32 %v1704, %v1944
        %v2009 = vadd.f32 %v1705, %v1945
        %v2010 = vadd.f32 %v1706, %v1946
        %v2011 = vadd.f32 %v1707, %v1947
        %v2012 = vadd.f32 %v1708, %v1948
        %v2013 = vadd.f32 %v1709, %v1949
        %v2014 = vadd.f32 %v1710, %v1950
        %v2015 = vadd.f32 %v1711, %v1951
        %v2016 = vadd.f32 %v1712, %v1952
        %v2017 = vadd.f32 %v1713, %v1953
        %v2018 = vadd.f32 %v1714, %v1954
        %v2019 = vadd.f32 %v1715, %v1955
        %v2020 = vadd.f32 %v1716, %v1956
        %v2021 = vadd.f32 %v1717, %v1957
        %v2022 = vadd.f32 %v1718, %v1958
        %v2023 = vadd.f32 %v1719, %v1959
        %v2024 = vadd.f32 %v1720, %v1960
        %v2025 = vadd.f32 %v1721, %v1961
        %v2026 = vadd.f32 %v1722, %v1962
        %v2027 = vadd.f32 %v1723, %v1963
        %v2028 = vadd.f32 %v1724, %v1964
        %v2029 = vadd.f32 %v1725, %v1965
        %v2030 = vadd.f32 %v1726, %v1966
        %v2031 = vadd.f32 %v1727, %v1967
        %v2032 = vadd.f32 %v1728, %v1968
        %v2033 = vadd.f32 %v1729, %v1969
        %v2034 = vadd.f32 %v1730, %v1970
        %v2035 = vadd.f32 %v1731, %v1971
        %v2036 = vadd.f32 %v1732, %v1972
        %v2037 = vadd.f32 %v1733, %v1973
        %v2038 = vadd.f32 %v1734, %v1974
        %v2039 = vadd.f32 %v1735, %v1975
        %v2040 = vadd.f32 %v1736, %v1976
        %v2041 = vadd.f32 %v1737, %v1977
        %v2042 = vadd.f32 %v1738, %v1978
        %v2043 = vadd.f32 %v1739, %v1979
        %v2044 = vadd.f32 %v1740, %v1980
        %v2045 = vadd.f32 %v1741, %v1981
        %v2046 = vadd.f32 %v1742, %v1982
        %v2047 = vadd.f32 %v1743, %v1983
        %v2048 = vadd.f32 %v1744, %v1984
        %v2049 = vadd.f32 %v1745, %v1985
        %v2050 = vadd.f32 %v1746, %v1986
        %v2051 = vadd.f32 %v1747, %v1987
        %v2052 = vadd.f32 %v1748, %v1988
        %v2053 = vadd.f32 %v1749, %v1989
        %v2054 = vadd.f32 %v1750, %v1990
        %v2055 = vadd.f32 %v1751, %v1991
        %v2056 = vadd.f32 %v1752, %v1992
        %v2057 = vadd.f32 %v1753, %v1993
        %v2058 = vadd.f32 %v1754, %v1994
        %2059 = vset.pattern.permute.xlu0 6
        %2060 = vperm.xlu0 %2059, %v214
        %v2061 = vpop.permute.xlu0 %2060
        %2062 = vset.pattern.permute.xlu0 6
        %2063 = vperm.xlu0 %2062, %v215
        %v2064 = vpop.permute.xlu0 %2063
        %2065 = vset.pattern.permute.xlu0 6
        %2066 = vperm.xlu0 %2065, %v216
        %v2067 = vpop.permute.xlu0 %2066
        %2068 = vset.pattern.permute.xlu0 6
        %2069 = vperm.xlu0 %2068, %v217
        %v2070 = vpop.permute.xlu0 %2069
        %2071 = vset.pattern.permute.xlu0 6
        %2072 = vperm.xlu0 %2071, %v218
        %v2073 = vpop.permute.xlu0 %2072
        %2074 = vset.pattern.permute.xlu0 6
        %2075 = vperm.xlu0 %2074, %v219
        %v2076 = vpop.permute.xlu0 %2075
        %2077 = vset.pattern.permute.xlu0 6
        %2078 = vperm.xlu0 %2077, %v220
        %v2079 = vpop.permute.xlu0 %2078
        %2080 = vset.pattern.permute.xlu0 6
        %2081 = vperm.xlu0 %2080, %v221
        %v2082 = vpop.permute.xlu0 %2081
        %2083 = vset.pattern.permute.xlu0 6
        %2084 = vperm.xlu0 %2083, %v222
        %v2085 = vpop.permute.xlu0 %2084
        %2086 = vset.pattern.permute.xlu0 6
        %2087 = vperm.xlu0 %2086, %v223
        %v2088 = vpop.permute.xlu0 %2087
        %2089 = vset.pattern.permute.xlu0 6
        %2090 = vperm.xlu0 %2089, %v224
        %v2091 = vpop.permute.xlu0 %2090
        %2092 = vset.pattern.permute.xlu0 6
        %2093 = vperm.xlu0 %2092, %v225
        %v2094 = vpop.permute.xlu0 %2093
        %2095 = vset.pattern.permute.xlu0 6
        %2096 = vperm.xlu0 %2095, %v226
        %v2097 = vpop.permute.xlu0 %2096
        %2098 = vset.pattern.permute.xlu0 6
        %2099 = vperm.xlu0 %2098, %v227
        %v2100 = vpop.permute.xlu0 %2099
        %2101 = vset.pattern.permute.xlu0 6
        %2102 = vperm.xlu0 %2101, %v228
        %v2103 = vpop.permute.xlu0 %2102
        %2104 = vset.pattern.permute.xlu0 6
        %2105 = vperm.xlu0 %2104, %v229
        %v2106 = vpop.permute.xlu0 %2105
        %vm2107 = vcmp.eq.s32.totalorder %v2061, %v231
        %vm2108 = vcmp.eq.s32.totalorder %v2061, %v232
        %vm2109 = vcmp.eq.s32.totalorder %v2061, %v233
        %vm2110 = vcmp.eq.s32.totalorder %v2061, %v234
        %vm2111 = vcmp.eq.s32.totalorder %v2064, %v231
        %vm2112 = vcmp.eq.s32.totalorder %v2064, %v232
        %vm2113 = vcmp.eq.s32.totalorder %v2064, %v233
        %vm2114 = vcmp.eq.s32.totalorder %v2064, %v234
        %vm2115 = vcmp.eq.s32.totalorder %v2067, %v231
        %vm2116 = vcmp.eq.s32.totalorder %v2067, %v232
        %vm2117 = vcmp.eq.s32.totalorder %v2067, %v233
        %vm2118 = vcmp.eq.s32.totalorder %v2067, %v234
        %vm2119 = vcmp.eq.s32.totalorder %v2070, %v231
        %vm2120 = vcmp.eq.s32.totalorder %v2070, %v232
        %vm2121 = vcmp.eq.s32.totalorder %v2070, %v233
        %vm2122 = vcmp.eq.s32.totalorder %v2070, %v234
        %vm2123 = vcmp.eq.s32.totalorder %v2073, %v231
        %vm2124 = vcmp.eq.s32.totalorder %v2073, %v232
        %vm2125 = vcmp.eq.s32.totalorder %v2073, %v233
        %vm2126 = vcmp.eq.s32.totalorder %v2073, %v234
        %vm2127 = vcmp.eq.s32.totalorder %v2076, %v231
        %vm2128 = vcmp.eq.s32.totalorder %v2076, %v232
        %vm2129 = vcmp.eq.s32.totalorder %v2076, %v233
        %vm2130 = vcmp.eq.s32.totalorder %v2076, %v234
        %vm2131 = vcmp.eq.s32.totalorder %v2079, %v231
        %vm2132 = vcmp.eq.s32.totalorder %v2079, %v232
        %vm2133 = vcmp.eq.s32.totalorder %v2079, %v233
        %vm2134 = vcmp.eq.s32.totalorder %v2079, %v234
        %vm2135 = vcmp.eq.s32.totalorder %v2082, %v231
        %vm2136 = vcmp.eq.s32.totalorder %v2082, %v232
        %vm2137 = vcmp.eq.s32.totalorder %v2082, %v233
        %vm2138 = vcmp.eq.s32.totalorder %v2082, %v234
        %vm2139 = vcmp.eq.s32.totalorder %v2085, %v231
        %vm2140 = vcmp.eq.s32.totalorder %v2085, %v232
        %vm2141 = vcmp.eq.s32.totalorder %v2085, %v233
        %vm2142 = vcmp.eq.s32.totalorder %v2085, %v234
        %vm2143 = vcmp.eq.s32.totalorder %v2088, %v231
        %vm2144 = vcmp.eq.s32.totalorder %v2088, %v232
        %vm2145 = vcmp.eq.s32.totalorder %v2088, %v233
        %vm2146 = vcmp.eq.s32.totalorder %v2088, %v234
        %vm2147 = vcmp.eq.s32.totalorder %v2091, %v231
        %vm2148 = vcmp.eq.s32.totalorder %v2091, %v232
        %vm2149 = vcmp.eq.s32.totalorder %v2091, %v233
        %vm2150 = vcmp.eq.s32.totalorder %v2091, %v234
        %vm2151 = vcmp.eq.s32.totalorder %v2094, %v231
        %vm2152 = vcmp.eq.s32.totalorder %v2094, %v232
        %vm2153 = vcmp.eq.s32.totalorder %v2094, %v233
        %vm2154 = vcmp.eq.s32.totalorder %v2094, %v234
        %vm2155 = vcmp.eq.s32.totalorder %v2097, %v231
        %vm2156 = vcmp.eq.s32.totalorder %v2097, %v232
        %vm2157 = vcmp.eq.s32.totalorder %v2097, %v233
        %vm2158 = vcmp.eq.s32.totalorder %v2097, %v234
        %vm2159 = vcmp.eq.s32.totalorder %v2100, %v231
        %vm2160 = vcmp.eq.s32.totalorder %v2100, %v232
        %vm2161 = vcmp.eq.s32.totalorder %v2100, %v233
        %vm2162 = vcmp.eq.s32.totalorder %v2100, %v234
        %vm2163 = vcmp.eq.s32.totalorder %v2103, %v231
        %vm2164 = vcmp.eq.s32.totalorder %v2103, %v232
        %vm2165 = vcmp.eq.s32.totalorder %v2103, %v233
        %vm2166 = vcmp.eq.s32.totalorder %v2103, %v234
        %vm2167 = vcmp.eq.s32.totalorder %v2106, %v231
        %vm2168 = vcmp.eq.s32.totalorder %v2106, %v232
        %vm2169 = vcmp.eq.s32.totalorder %v2106, %v233
        %vm2170 = vcmp.eq.s32.totalorder %v2106, %v234
        %v2171 = vsel %vm2107, 1, 0
        %v2172 = vsel %vm2108, 1, 0
        %v2173 = vsel %vm2109, 1, 0
        %v2174 = vsel %vm2110, 1, 0
        %v2175 = vsel %vm2111, 1, 0
        %v2176 = vsel %vm2112, 1, 0
        %v2177 = vsel %vm2113, 1, 0
        %v2178 = vsel %vm2114, 1, 0
        %v2179 = vsel %vm2115, 1, 0
        %v2180 = vsel %vm2116, 1, 0
        %v2181 = vsel %vm2117, 1, 0
        %v2182 = vsel %vm2118, 1, 0
        %v2183 = vsel %vm2119, 1, 0
        %v2184 = vsel %vm2120, 1, 0
        %v2185 = vsel %vm2121, 1, 0
        %v2186 = vsel %vm2122, 1, 0
        %v2187 = vsel %vm2123, 1, 0
        %v2188 = vsel %vm2124, 1, 0
        %v2189 = vsel %vm2125, 1, 0
        %v2190 = vsel %vm2126, 1, 0
        %v2191 = vsel %vm2127, 1, 0
        %v2192 = vsel %vm2128, 1, 0
        %v2193 = vsel %vm2129, 1, 0
        %v2194 = vsel %vm2130, 1, 0
        %v2195 = vsel %vm2131, 1, 0
        %v2196 = vsel %vm2132, 1, 0
        %v2197 = vsel %vm2133, 1, 0
        %v2198 = vsel %vm2134, 1, 0
        %v2199 = vsel %vm2135, 1, 0
        %v2200 = vsel %vm2136, 1, 0
        %v2201 = vsel %vm2137, 1, 0
        %v2202 = vsel %vm2138, 1, 0
        %v2203 = vsel %vm2139, 1, 0
        %v2204 = vsel %vm2140, 1, 0
        %v2205 = vsel %vm2141, 1, 0
        %v2206 = vsel %vm2142, 1, 0
        %v2207 = vsel %vm2143, 1, 0
        %v2208 = vsel %vm2144, 1, 0
        %v2209 = vsel %vm2145, 1, 0
        %v2210 = vsel %vm2146, 1, 0
        %v2211 = vsel %vm2147, 1, 0
        %v2212 = vsel %vm2148, 1, 0
        %v2213 = vsel %vm2149, 1, 0
        %v2214 = vsel %vm2150, 1, 0
        %v2215 = vsel %vm2151, 1, 0
        %v2216 = vsel %vm2152, 1, 0
        %v2217 = vsel %vm2153, 1, 0
        %v2218 = vsel %vm2154, 1, 0
        %v2219 = vsel %vm2155, 1, 0
        %v2220 = vsel %vm2156, 1, 0
        %v2221 = vsel %vm2157, 1, 0
        %v2222 = vsel %vm2158, 1, 0
        %v2223 = vsel %vm2159, 1, 0
        %v2224 = vsel %vm2160, 1, 0
        %v2225 = vsel %vm2161, 1, 0
        %v2226 = vsel %vm2162, 1, 0
        %v2227 = vsel %vm2163, 1, 0
        %v2228 = vsel %vm2164, 1, 0
        %v2229 = vsel %vm2165, 1, 0
        %v2230 = vsel %vm2166, 1, 0
        %v2231 = vsel %vm2167, 1, 0
        %v2232 = vsel %vm2168, 1, 0
        %v2233 = vsel %vm2169, 1, 0
        %v2234 = vsel %vm2170, 1, 0
        %v2235 = vcvt.s32.f32 %v2171
        %v2236 = vcvt.s32.f32 %v2172
        %v2237 = vcvt.s32.f32 %v2173
        %v2238 = vcvt.s32.f32 %v2174
        %v2239 = vcvt.s32.f32 %v2175
        %v2240 = vcvt.s32.f32 %v2176
        %v2241 = vcvt.s32.f32 %v2177
        %v2242 = vcvt.s32.f32 %v2178
        %v2243 = vcvt.s32.f32 %v2179
        %v2244 = vcvt.s32.f32 %v2180
        %v2245 = vcvt.s32.f32 %v2181
        %v2246 = vcvt.s32.f32 %v2182
        %v2247 = vcvt.s32.f32 %v2183
        %v2248 = vcvt.s32.f32 %v2184
        %v2249 = vcvt.s32.f32 %v2185
        %v2250 = vcvt.s32.f32 %v2186
        %v2251 = vcvt.s32.f32 %v2187
        %v2252 = vcvt.s32.f32 %v2188
        %v2253 = vcvt.s32.f32 %v2189
        %v2254 = vcvt.s32.f32 %v2190
        %v2255 = vcvt.s32.f32 %v2191
        %v2256 = vcvt.s32.f32 %v2192
        %v2257 = vcvt.s32.f32 %v2193
        %v2258 = vcvt.s32.f32 %v2194
        %v2259 = vcvt.s32.f32 %v2195
        %v2260 = vcvt.s32.f32 %v2196
        %v2261 = vcvt.s32.f32 %v2197
        %v2262 = vcvt.s32.f32 %v2198
        %v2263 = vcvt.s32.f32 %v2199
        %v2264 = vcvt.s32.f32 %v2200
        %v2265 = vcvt.s32.f32 %v2201
        %v2266 = vcvt.s32.f32 %v2202
        %v2267 = vcvt.s32.f32 %v2203
        %v2268 = vcvt.s32.f32 %v2204
        %v2269 = vcvt.s32.f32 %v2205
        %v2270 = vcvt.s32.f32 %v2206
        %v2271 = vcvt.s32.f32 %v2207
        %v2272 = vcvt.s32.f32 %v2208
        %v2273 = vcvt.s32.f32 %v2209
        %v2274 = vcvt.s32.f32 %v2210
        %v2275 = vcvt.s32.f32 %v2211
        %v2276 = vcvt.s32.f32 %v2212
        %v2277 = vcvt.s32.f32 %v2213
        %v2278 = vcvt.s32.f32 %v2214
        %v2279 = vcvt.s32.f32 %v2215
        %v2280 = vcvt.s32.f32 %v2216
        %v2281 = vcvt.s32.f32 %v2217
        %v2282 = vcvt.s32.f32 %v2218
        %v2283 = vcvt.s32.f32 %v2219
        %v2284 = vcvt.s32.f32 %v2220
        %v2285 = vcvt.s32.f32 %v2221
        %v2286 = vcvt.s32.f32 %v2222
        %v2287 = vcvt.s32.f32 %v2223
        %v2288 = vcvt.s32.f32 %v2224
        %v2289 = vcvt.s32.f32 %v2225
        %v2290 = vcvt.s32.f32 %v2226
        %v2291 = vcvt.s32.f32 %v2227
        %v2292 = vcvt.s32.f32 %v2228
        %v2293 = vcvt.s32.f32 %v2229
        %v2294 = vcvt.s32.f32 %v2230
        %v2295 = vcvt.s32.f32 %v2231
        %v2296 = vcvt.s32.f32 %v2232
        %v2297 = vcvt.s32.f32 %v2233
        %v2298 = vcvt.s32.f32 %v2234
        %v2299 = vadd.f32 %v1995, %v2235
        %v2300 = vadd.f32 %v1996, %v2236
        %v2301 = vadd.f32 %v1997, %v2237
        %v2302 = vadd.f32 %v1998, %v2238
        %v2303 = vadd.f32 %v1999, %v2239
        %v2304 = vadd.f32 %v2000, %v2240
        %v2305 = vadd.f32 %v2001, %v2241
        %v2306 = vadd.f32 %v2002, %v2242
        %v2307 = vadd.f32 %v2003, %v2243
        %v2308 = vadd.f32 %v2004, %v2244
        %v2309 = vadd.f32 %v2005, %v2245
        %v2310 = vadd.f32 %v2006, %v2246
        %v2311 = vadd.f32 %v2007, %v2247
        %v2312 = vadd.f32 %v2008, %v2248
        %v2313 = vadd.f32 %v2009, %v2249
        %v2314 = vadd.f32 %v2010, %v2250
        %v2315 = vadd.f32 %v2011, %v2251
        %v2316 = vadd.f32 %v2012, %v2252
        %v2317 = vadd.f32 %v2013, %v2253
        %v2318 = vadd.f32 %v2014, %v2254
        %v2319 = vadd.f32 %v2015, %v2255
        %v2320 = vadd.f32 %v2016, %v2256
        %v2321 = vadd.f32 %v2017, %v2257
        %v2322 = vadd.f32 %v2018, %v2258
        %v2323 = vadd.f32 %v2019, %v2259
        %v2324 = vadd.f32 %v2020, %v2260
        %v2325 = vadd.f32 %v2021, %v2261
        %v2326 = vadd.f32 %v2022, %v2262
        %v2327 = vadd.f32 %v2023, %v2263
        %v2328 = vadd.f32 %v2024, %v2264
        %v2329 = vadd.f32 %v2025, %v2265
        %v2330 = vadd.f32 %v2026, %v2266
        %v2331 = vadd.f32 %v2027, %v2267
        %v2332 = vadd.f32 %v2028, %v2268
        %v2333 = vadd.f32 %v2029, %v2269
        %v2334 = vadd.f32 %v2030, %v2270
        %v2335 = vadd.f32 %v2031, %v2271
        %v2336 = vadd.f32 %v2032, %v2272
        %v2337 = vadd.f32 %v2033, %v2273
        %v2338 = vadd.f32 %v2034, %v2274
        %v2339 = vadd.f32 %v2035, %v2275
        %v2340 = vadd.f32 %v2036, %v2276
        %v2341 = vadd.f32 %v2037, %v2277
        %v2342 = vadd.f32 %v2038, %v2278
        %v2343 = vadd.f32 %v2039, %v2279
        %v2344 = vadd.f32 %v2040, %v2280
        %v2345 = vadd.f32 %v2041, %v2281
        %v2346 = vadd.f32 %v2042, %v2282
        %v2347 = vadd.f32 %v2043, %v2283
        %v2348 = vadd.f32 %v2044, %v2284
        %v2349 = vadd.f32 %v2045, %v2285
        %v2350 = vadd.f32 %v2046, %v2286
        %v2351 = vadd.f32 %v2047, %v2287
        %v2352 = vadd.f32 %v2048, %v2288
        %v2353 = vadd.f32 %v2049, %v2289
        %v2354 = vadd.f32 %v2050, %v2290
        %v2355 = vadd.f32 %v2051, %v2291
        %v2356 = vadd.f32 %v2052, %v2292
        %v2357 = vadd.f32 %v2053, %v2293
        %v2358 = vadd.f32 %v2054, %v2294
        %v2359 = vadd.f32 %v2055, %v2295
        %v2360 = vadd.f32 %v2056, %v2296
        %v2361 = vadd.f32 %v2057, %v2297
        %v2362 = vadd.f32 %v2058, %v2298
        %2363 = vset.pattern.permute.xlu0 7
        %2364 = vperm.xlu0 %2363, %v214
        %v2365 = vpop.permute.xlu0 %2364
        %2366 = vset.pattern.permute.xlu0 7
        %2367 = vperm.xlu0 %2366, %v215
        %v2368 = vpop.permute.xlu0 %2367
        %2369 = vset.pattern.permute.xlu0 7
        %2370 = vperm.xlu0 %2369, %v216
        %v2371 = vpop.permute.xlu0 %2370
        %2372 = vset.pattern.permute.xlu0 7
        %2373 = vperm.xlu0 %2372, %v217
        %v2374 = vpop.permute.xlu0 %2373
        %2375 = vset.pattern.permute.xlu0 7
        %2376 = vperm.xlu0 %2375, %v218
        %v2377 = vpop.permute.xlu0 %2376
        %2378 = vset.pattern.permute.xlu0 7
        %2379 = vperm.xlu0 %2378, %v219
        %v2380 = vpop.permute.xlu0 %2379
        %2381 = vset.pattern.permute.xlu0 7
        %2382 = vperm.xlu0 %2381, %v220
        %v2383 = vpop.permute.xlu0 %2382
        %2384 = vset.pattern.permute.xlu0 7
        %2385 = vperm.xlu0 %2384, %v221
        %v2386 = vpop.permute.xlu0 %2385
        %2387 = vset.pattern.permute.xlu0 7
        %2388 = vperm.xlu0 %2387, %v222
        %v2389 = vpop.permute.xlu0 %2388
        %2390 = vset.pattern.permute.xlu0 7
        %2391 = vperm.xlu0 %2390, %v223
        %v2392 = vpop.permute.xlu0 %2391
        %2393 = vset.pattern.permute.xlu0 7
        %2394 = vperm.xlu0 %2393, %v224
        %v2395 = vpop.permute.xlu0 %2394
        %2396 = vset.pattern.permute.xlu0 7
        %2397 = vperm.xlu0 %2396, %v225
        %v2398 = vpop.permute.xlu0 %2397
        %2399 = vset.pattern.permute.xlu0 7
        %2400 = vperm.xlu0 %2399, %v226
        %v2401 = vpop.permute.xlu0 %2400
        %2402 = vset.pattern.permute.xlu0 7
        %2403 = vperm.xlu0 %2402, %v227
        %v2404 = vpop.permute.xlu0 %2403
        %2405 = vset.pattern.permute.xlu0 7
        %2406 = vperm.xlu0 %2405, %v228
        %v2407 = vpop.permute.xlu0 %2406
        %2408 = vset.pattern.permute.xlu0 7
        %2409 = vperm.xlu0 %2408, %v229
        %v2410 = vpop.permute.xlu0 %2409
        %vm2411 = vcmp.eq.s32.totalorder %v2365, %v231
        %vm2412 = vcmp.eq.s32.totalorder %v2365, %v232
        %vm2413 = vcmp.eq.s32.totalorder %v2365, %v233
        %vm2414 = vcmp.eq.s32.totalorder %v2365, %v234
        %vm2415 = vcmp.eq.s32.totalorder %v2368, %v231
        %vm2416 = vcmp.eq.s32.totalorder %v2368, %v232
        %vm2417 = vcmp.eq.s32.totalorder %v2368, %v233
        %vm2418 = vcmp.eq.s32.totalorder %v2368, %v234
        %vm2419 = vcmp.eq.s32.totalorder %v2371, %v231
        %vm2420 = vcmp.eq.s32.totalorder %v2371, %v232
        %vm2421 = vcmp.eq.s32.totalorder %v2371, %v233
        %vm2422 = vcmp.eq.s32.totalorder %v2371, %v234
        %vm2423 = vcmp.eq.s32.totalorder %v2374, %v231
        %vm2424 = vcmp.eq.s32.totalorder %v2374, %v232
        %vm2425 = vcmp.eq.s32.totalorder %v2374, %v233
        %vm2426 = vcmp.eq.s32.totalorder %v2374, %v234
        %vm2427 = vcmp.eq.s32.totalorder %v2377, %v231
        %vm2428 = vcmp.eq.s32.totalorder %v2377, %v232
        %vm2429 = vcmp.eq.s32.totalorder %v2377, %v233
        %vm2430 = vcmp.eq.s32.totalorder %v2377, %v234
        %vm2431 = vcmp.eq.s32.totalorder %v2380, %v231
        %vm2432 = vcmp.eq.s32.totalorder %v2380, %v232
        %vm2433 = vcmp.eq.s32.totalorder %v2380, %v233
        %vm2434 = vcmp.eq.s32.totalorder %v2380, %v234
        %vm2435 = vcmp.eq.s32.totalorder %v2383, %v231
        %vm2436 = vcmp.eq.s32.totalorder %v2383, %v232
        %vm2437 = vcmp.eq.s32.totalorder %v2383, %v233
        %vm2438 = vcmp.eq.s32.totalorder %v2383, %v234
        %vm2439 = vcmp.eq.s32.totalorder %v2386, %v231
        %vm2440 = vcmp.eq.s32.totalorder %v2386, %v232
        %vm2441 = vcmp.eq.s32.totalorder %v2386, %v233
        %vm2442 = vcmp.eq.s32.totalorder %v2386, %v234
        %vm2443 = vcmp.eq.s32.totalorder %v2389, %v231
        %vm2444 = vcmp.eq.s32.totalorder %v2389, %v232
        %vm2445 = vcmp.eq.s32.totalorder %v2389, %v233
        %vm2446 = vcmp.eq.s32.totalorder %v2389, %v234
        %vm2447 = vcmp.eq.s32.totalorder %v2392, %v231
        %vm2448 = vcmp.eq.s32.totalorder %v2392, %v232
        %vm2449 = vcmp.eq.s32.totalorder %v2392, %v233
        %vm2450 = vcmp.eq.s32.totalorder %v2392, %v234
        %vm2451 = vcmp.eq.s32.totalorder %v2395, %v231
        %vm2452 = vcmp.eq.s32.totalorder %v2395, %v232
        %vm2453 = vcmp.eq.s32.totalorder %v2395, %v233
        %vm2454 = vcmp.eq.s32.totalorder %v2395, %v234
        %vm2455 = vcmp.eq.s32.totalorder %v2398, %v231
        %vm2456 = vcmp.eq.s32.totalorder %v2398, %v232
        %vm2457 = vcmp.eq.s32.totalorder %v2398, %v233
        %vm2458 = vcmp.eq.s32.totalorder %v2398, %v234
        %vm2459 = vcmp.eq.s32.totalorder %v2401, %v231
        %vm2460 = vcmp.eq.s32.totalorder %v2401, %v232
        %vm2461 = vcmp.eq.s32.totalorder %v2401, %v233
        %vm2462 = vcmp.eq.s32.totalorder %v2401, %v234
        %vm2463 = vcmp.eq.s32.totalorder %v2404, %v231
        %vm2464 = vcmp.eq.s32.totalorder %v2404, %v232
        %vm2465 = vcmp.eq.s32.totalorder %v2404, %v233
        %vm2466 = vcmp.eq.s32.totalorder %v2404, %v234
        %vm2467 = vcmp.eq.s32.totalorder %v2407, %v231
        %vm2468 = vcmp.eq.s32.totalorder %v2407, %v232
        %vm2469 = vcmp.eq.s32.totalorder %v2407, %v233
        %vm2470 = vcmp.eq.s32.totalorder %v2407, %v234
        %vm2471 = vcmp.eq.s32.totalorder %v2410, %v231
        %vm2472 = vcmp.eq.s32.totalorder %v2410, %v232
        %vm2473 = vcmp.eq.s32.totalorder %v2410, %v233
        %vm2474 = vcmp.eq.s32.totalorder %v2410, %v234
        %v2475 = vsel %vm2411, 1, 0
        %v2476 = vsel %vm2412, 1, 0
        %v2477 = vsel %vm2413, 1, 0
        %v2478 = vsel %vm2414, 1, 0
        %v2479 = vsel %vm2415, 1, 0
        %v2480 = vsel %vm2416, 1, 0
        %v2481 = vsel %vm2417, 1, 0
        %v2482 = vsel %vm2418, 1, 0
        %v2483 = vsel %vm2419, 1, 0
        %v2484 = vsel %vm2420, 1, 0
        %v2485 = vsel %vm2421, 1, 0
        %v2486 = vsel %vm2422, 1, 0
        %v2487 = vsel %vm2423, 1, 0
        %v2488 = vsel %vm2424, 1, 0
        %v2489 = vsel %vm2425, 1, 0
        %v2490 = vsel %vm2426, 1, 0
        %v2491 = vsel %vm2427, 1, 0
        %v2492 = vsel %vm2428, 1, 0
        %v2493 = vsel %vm2429, 1, 0
        %v2494 = vsel %vm2430, 1, 0
        %v2495 = vsel %vm2431, 1, 0
        %v2496 = vsel %vm2432, 1, 0
        %v2497 = vsel %vm2433, 1, 0
        %v2498 = vsel %vm2434, 1, 0
        %v2499 = vsel %vm2435, 1, 0
        %v2500 = vsel %vm2436, 1, 0
        %v2501 = vsel %vm2437, 1, 0
        %v2502 = vsel %vm2438, 1, 0
        %v2503 = vsel %vm2439, 1, 0
        %v2504 = vsel %vm2440, 1, 0
        %v2505 = vsel %vm2441, 1, 0
        %v2506 = vsel %vm2442, 1, 0
        %v2507 = vsel %vm2443, 1, 0
        %v2508 = vsel %vm2444, 1, 0
        %v2509 = vsel %vm2445, 1, 0
        %v2510 = vsel %vm2446, 1, 0
        %v2511 = vsel %vm2447, 1, 0
        %v2512 = vsel %vm2448, 1, 0
        %v2513 = vsel %vm2449, 1, 0
        %v2514 = vsel %vm2450, 1, 0
        %v2515 = vsel %vm2451, 1, 0
        %v2516 = vsel %vm2452, 1, 0
        %v2517 = vsel %vm2453, 1, 0
        %v2518 = vsel %vm2454, 1, 0
        %v2519 = vsel %vm2455, 1, 0
        %v2520 = vsel %vm2456, 1, 0
        %v2521 = vsel %vm2457, 1, 0
        %v2522 = vsel %vm2458, 1, 0
        %v2523 = vsel %vm2459, 1, 0
        %v2524 = vsel %vm2460, 1, 0
        %v2525 = vsel %vm2461, 1, 0
        %v2526 = vsel %vm2462, 1, 0
        %v2527 = vsel %vm2463, 1, 0
        %v2528 = vsel %vm2464, 1, 0
        %v2529 = vsel %vm2465, 1, 0
        %v2530 = vsel %vm2466, 1, 0
        %v2531 = vsel %vm2467, 1, 0
        %v2532 = vsel %vm2468, 1, 0
        %v2533 = vsel %vm2469, 1, 0
        %v2534 = vsel %vm2470, 1, 0
        %v2535 = vsel %vm2471, 1, 0
        %v2536 = vsel %vm2472, 1, 0
        %v2537 = vsel %vm2473, 1, 0
        %v2538 = vsel %vm2474, 1, 0
        %v2539 = vcvt.s32.f32 %v2475
        %v2540 = vcvt.s32.f32 %v2476
        %v2541 = vcvt.s32.f32 %v2477
        %v2542 = vcvt.s32.f32 %v2478
        %v2543 = vcvt.s32.f32 %v2479
        %v2544 = vcvt.s32.f32 %v2480
        %v2545 = vcvt.s32.f32 %v2481
        %v2546 = vcvt.s32.f32 %v2482
        %v2547 = vcvt.s32.f32 %v2483
        %v2548 = vcvt.s32.f32 %v2484
        %v2549 = vcvt.s32.f32 %v2485
        %v2550 = vcvt.s32.f32 %v2486
        %v2551 = vcvt.s32.f32 %v2487
        %v2552 = vcvt.s32.f32 %v2488
        %v2553 = vcvt.s32.f32 %v2489
        %v2554 = vcvt.s32.f32 %v2490
        %v2555 = vcvt.s32.f32 %v2491
        %v2556 = vcvt.s32.f32 %v2492
        %v2557 = vcvt.s32.f32 %v2493
        %v2558 = vcvt.s32.f32 %v2494
        %v2559 = vcvt.s32.f32 %v2495
        %v2560 = vcvt.s32.f32 %v2496
        %v2561 = vcvt.s32.f32 %v2497
        %v2562 = vcvt.s32.f32 %v2498
        %v2563 = vcvt.s32.f32 %v2499
        %v2564 = vcvt.s32.f32 %v2500
        %v2565 = vcvt.s32.f32 %v2501
        %v2566 = vcvt.s32.f32 %v2502
        %v2567 = vcvt.s32.f32 %v2503
        %v2568 = vcvt.s32.f32 %v2504
        %v2569 = vcvt.s32.f32 %v2505
        %v2570 = vcvt.s32.f32 %v2506
        %v2571 = vcvt.s32.f32 %v2507
        %v2572 = vcvt.s32.f32 %v2508
        %v2573 = vcvt.s32.f32 %v2509
        %v2574 = vcvt.s32.f32 %v2510
        %v2575 = vcvt.s32.f32 %v2511
        %v2576 = vcvt.s32.f32 %v2512
        %v2577 = vcvt.s32.f32 %v2513
        %v2578 = vcvt.s32.f32 %v2514
        %v2579 = vcvt.s32.f32 %v2515
        %v2580 = vcvt.s32.f32 %v2516
        %v2581 = vcvt.s32.f32 %v2517
        %v2582 = vcvt.s32.f32 %v2518
        %v2583 = vcvt.s32.f32 %v2519
        %v2584 = vcvt.s32.f32 %v2520
        %v2585 = vcvt.s32.f32 %v2521
        %v2586 = vcvt.s32.f32 %v2522
        %v2587 = vcvt.s32.f32 %v2523
        %v2588 = vcvt.s32.f32 %v2524
        %v2589 = vcvt.s32.f32 %v2525
        %v2590 = vcvt.s32.f32 %v2526
        %v2591 = vcvt.s32.f32 %v2527
        %v2592 = vcvt.s32.f32 %v2528
        %v2593 = vcvt.s32.f32 %v2529
        %v2594 = vcvt.s32.f32 %v2530
        %v2595 = vcvt.s32.f32 %v2531
        %v2596 = vcvt.s32.f32 %v2532
        %v2597 = vcvt.s32.f32 %v2533
        %v2598 = vcvt.s32.f32 %v2534
        %v2599 = vcvt.s32.f32 %v2535
        %v2600 = vcvt.s32.f32 %v2536
        %v2601 = vcvt.s32.f32 %v2537
        %v2602 = vcvt.s32.f32 %v2538
        %v2603 = vadd.f32 %v2299, %v2539
        %v2604 = vadd.f32 %v2300, %v2540
        %v2605 = vadd.f32 %v2301, %v2541
        %v2606 = vadd.f32 %v2302, %v2542
        %v2607 = vadd.f32 %v2303, %v2543
        %v2608 = vadd.f32 %v2304, %v2544
        %v2609 = vadd.f32 %v2305, %v2545
        %v2610 = vadd.f32 %v2306, %v2546
        %v2611 = vadd.f32 %v2307, %v2547
        %v2612 = vadd.f32 %v2308, %v2548
        %v2613 = vadd.f32 %v2309, %v2549
        %v2614 = vadd.f32 %v2310, %v2550
        %v2615 = vadd.f32 %v2311, %v2551
        %v2616 = vadd.f32 %v2312, %v2552
        %v2617 = vadd.f32 %v2313, %v2553
        %v2618 = vadd.f32 %v2314, %v2554
        %v2619 = vadd.f32 %v2315, %v2555
        %v2620 = vadd.f32 %v2316, %v2556
        %v2621 = vadd.f32 %v2317, %v2557
        %v2622 = vadd.f32 %v2318, %v2558
        %v2623 = vadd.f32 %v2319, %v2559
        %v2624 = vadd.f32 %v2320, %v2560
        %v2625 = vadd.f32 %v2321, %v2561
        %v2626 = vadd.f32 %v2322, %v2562
        %v2627 = vadd.f32 %v2323, %v2563
        %v2628 = vadd.f32 %v2324, %v2564
        %v2629 = vadd.f32 %v2325, %v2565
        %v2630 = vadd.f32 %v2326, %v2566
        %v2631 = vadd.f32 %v2327, %v2567
        %v2632 = vadd.f32 %v2328, %v2568
        %v2633 = vadd.f32 %v2329, %v2569
        %v2634 = vadd.f32 %v2330, %v2570
        %v2635 = vadd.f32 %v2331, %v2571
        %v2636 = vadd.f32 %v2332, %v2572
        %v2637 = vadd.f32 %v2333, %v2573
        %v2638 = vadd.f32 %v2334, %v2574
        %v2639 = vadd.f32 %v2335, %v2575
        %v2640 = vadd.f32 %v2336, %v2576
        %v2641 = vadd.f32 %v2337, %v2577
        %v2642 = vadd.f32 %v2338, %v2578
        %v2643 = vadd.f32 %v2339, %v2579
        %v2644 = vadd.f32 %v2340, %v2580
        %v2645 = vadd.f32 %v2341, %v2581
        %v2646 = vadd.f32 %v2342, %v2582
        %v2647 = vadd.f32 %v2343, %v2583
        %v2648 = vadd.f32 %v2344, %v2584
        %v2649 = vadd.f32 %v2345, %v2585
        %v2650 = vadd.f32 %v2346, %v2586
        %v2651 = vadd.f32 %v2347, %v2587
        %v2652 = vadd.f32 %v2348, %v2588
        %v2653 = vadd.f32 %v2349, %v2589
        %v2654 = vadd.f32 %v2350, %v2590
        %v2655 = vadd.f32 %v2351, %v2591
        %v2656 = vadd.f32 %v2352, %v2592
        %v2657 = vadd.f32 %v2353, %v2593
        %v2658 = vadd.f32 %v2354, %v2594
        %v2659 = vadd.f32 %v2355, %v2595
        %v2660 = vadd.f32 %v2356, %v2596
        %v2661 = vadd.f32 %v2357, %v2597
        %v2662 = vadd.f32 %v2358, %v2598
        %v2663 = vadd.f32 %v2359, %v2599
        %v2664 = vadd.f32 %v2360, %v2600
        %v2665 = vadd.f32 %v2361, %v2601
        %v2666 = vadd.f32 %v2362, %v2602
        %2667 = vset.pattern.permute.xlu0 8
        %2668 = vperm.xlu0 %2667, %v214
        %v2669 = vpop.permute.xlu0 %2668
        %2670 = vset.pattern.permute.xlu0 8
        %2671 = vperm.xlu0 %2670, %v215
        %v2672 = vpop.permute.xlu0 %2671
        %2673 = vset.pattern.permute.xlu0 8
        %2674 = vperm.xlu0 %2673, %v216
        %v2675 = vpop.permute.xlu0 %2674
        %2676 = vset.pattern.permute.xlu0 8
        %2677 = vperm.xlu0 %2676, %v217
        %v2678 = vpop.permute.xlu0 %2677
        %2679 = vset.pattern.permute.xlu0 8
        %2680 = vperm.xlu0 %2679, %v218
        %v2681 = vpop.permute.xlu0 %2680
        %2682 = vset.pattern.permute.xlu0 8
        %2683 = vperm.xlu0 %2682, %v219
        %v2684 = vpop.permute.xlu0 %2683
        %2685 = vset.pattern.permute.xlu0 8
        %2686 = vperm.xlu0 %2685, %v220
        %v2687 = vpop.permute.xlu0 %2686
        %2688 = vset.pattern.permute.xlu0 8
        %2689 = vperm.xlu0 %2688, %v221
        %v2690 = vpop.permute.xlu0 %2689
        %2691 = vset.pattern.permute.xlu0 8
        %2692 = vperm.xlu0 %2691, %v222
        %v2693 = vpop.permute.xlu0 %2692
        %2694 = vset.pattern.permute.xlu0 8
        %2695 = vperm.xlu0 %2694, %v223
        %v2696 = vpop.permute.xlu0 %2695
        %2697 = vset.pattern.permute.xlu0 8
        %2698 = vperm.xlu0 %2697, %v224
        %v2699 = vpop.permute.xlu0 %2698
        %2700 = vset.pattern.permute.xlu0 8
        %2701 = vperm.xlu0 %2700, %v225
        %v2702 = vpop.permute.xlu0 %2701
        %2703 = vset.pattern.permute.xlu0 8
        %2704 = vperm.xlu0 %2703, %v226
        %v2705 = vpop.permute.xlu0 %2704
        %2706 = vset.pattern.permute.xlu0 8
        %2707 = vperm.xlu0 %2706, %v227
        %v2708 = vpop.permute.xlu0 %2707
        %2709 = vset.pattern.permute.xlu0 8
        %2710 = vperm.xlu0 %2709, %v228
        %v2711 = vpop.permute.xlu0 %2710
        %2712 = vset.pattern.permute.xlu0 8
        %2713 = vperm.xlu0 %2712, %v229
        %v2714 = vpop.permute.xlu0 %2713
        %vm2715 = vcmp.eq.s32.totalorder %v2669, %v231
        %vm2716 = vcmp.eq.s32.totalorder %v2669, %v232
        %vm2717 = vcmp.eq.s32.totalorder %v2669, %v233
        %vm2718 = vcmp.eq.s32.totalorder %v2669, %v234
        %vm2719 = vcmp.eq.s32.totalorder %v2672, %v231
        %vm2720 = vcmp.eq.s32.totalorder %v2672, %v232
        %vm2721 = vcmp.eq.s32.totalorder %v2672, %v233
        %vm2722 = vcmp.eq.s32.totalorder %v2672, %v234
        %vm2723 = vcmp.eq.s32.totalorder %v2675, %v231
        %vm2724 = vcmp.eq.s32.totalorder %v2675, %v232
        %vm2725 = vcmp.eq.s32.totalorder %v2675, %v233
        %vm2726 = vcmp.eq.s32.totalorder %v2675, %v234
        %vm2727 = vcmp.eq.s32.totalorder %v2678, %v231
        %vm2728 = vcmp.eq.s32.totalorder %v2678, %v232
        %vm2729 = vcmp.eq.s32.totalorder %v2678, %v233
        %vm2730 = vcmp.eq.s32.totalorder %v2678, %v234
        %vm2731 = vcmp.eq.s32.totalorder %v2681, %v231
        %vm2732 = vcmp.eq.s32.totalorder %v2681, %v232
        %vm2733 = vcmp.eq.s32.totalorder %v2681, %v233
        %vm2734 = vcmp.eq.s32.totalorder %v2681, %v234
        %vm2735 = vcmp.eq.s32.totalorder %v2684, %v231
        %vm2736 = vcmp.eq.s32.totalorder %v2684, %v232
        %vm2737 = vcmp.eq.s32.totalorder %v2684, %v233
        %vm2738 = vcmp.eq.s32.totalorder %v2684, %v234
        %vm2739 = vcmp.eq.s32.totalorder %v2687, %v231
        %vm2740 = vcmp.eq.s32.totalorder %v2687, %v232
        %vm2741 = vcmp.eq.s32.totalorder %v2687, %v233
        %vm2742 = vcmp.eq.s32.totalorder %v2687, %v234
        %vm2743 = vcmp.eq.s32.totalorder %v2690, %v231
        %vm2744 = vcmp.eq.s32.totalorder %v2690, %v232
        %vm2745 = vcmp.eq.s32.totalorder %v2690, %v233
        %vm2746 = vcmp.eq.s32.totalorder %v2690, %v234
        %vm2747 = vcmp.eq.s32.totalorder %v2693, %v231
        %vm2748 = vcmp.eq.s32.totalorder %v2693, %v232
        %vm2749 = vcmp.eq.s32.totalorder %v2693, %v233
        %vm2750 = vcmp.eq.s32.totalorder %v2693, %v234
        %vm2751 = vcmp.eq.s32.totalorder %v2696, %v231
        %vm2752 = vcmp.eq.s32.totalorder %v2696, %v232
        %vm2753 = vcmp.eq.s32.totalorder %v2696, %v233
        %vm2754 = vcmp.eq.s32.totalorder %v2696, %v234
        %vm2755 = vcmp.eq.s32.totalorder %v2699, %v231
        %vm2756 = vcmp.eq.s32.totalorder %v2699, %v232
        %vm2757 = vcmp.eq.s32.totalorder %v2699, %v233
        %vm2758 = vcmp.eq.s32.totalorder %v2699, %v234
        %vm2759 = vcmp.eq.s32.totalorder %v2702, %v231
        %vm2760 = vcmp.eq.s32.totalorder %v2702, %v232
        %vm2761 = vcmp.eq.s32.totalorder %v2702, %v233
        %vm2762 = vcmp.eq.s32.totalorder %v2702, %v234
        %vm2763 = vcmp.eq.s32.totalorder %v2705, %v231
        %vm2764 = vcmp.eq.s32.totalorder %v2705, %v232
        %vm2765 = vcmp.eq.s32.totalorder %v2705, %v233
        %vm2766 = vcmp.eq.s32.totalorder %v2705, %v234
        %vm2767 = vcmp.eq.s32.totalorder %v2708, %v231
        %vm2768 = vcmp.eq.s32.totalorder %v2708, %v232
        %vm2769 = vcmp.eq.s32.totalorder %v2708, %v233
        %vm2770 = vcmp.eq.s32.totalorder %v2708, %v234
        %vm2771 = vcmp.eq.s32.totalorder %v2711, %v231
        %vm2772 = vcmp.eq.s32.totalorder %v2711, %v232
        %vm2773 = vcmp.eq.s32.totalorder %v2711, %v233
        %vm2774 = vcmp.eq.s32.totalorder %v2711, %v234
        %vm2775 = vcmp.eq.s32.totalorder %v2714, %v231
        %vm2776 = vcmp.eq.s32.totalorder %v2714, %v232
        %vm2777 = vcmp.eq.s32.totalorder %v2714, %v233
        %vm2778 = vcmp.eq.s32.totalorder %v2714, %v234
        %v2779 = vsel %vm2715, 1, 0
        %v2780 = vsel %vm2716, 1, 0
        %v2781 = vsel %vm2717, 1, 0
        %v2782 = vsel %vm2718, 1, 0
        %v2783 = vsel %vm2719, 1, 0
        %v2784 = vsel %vm2720, 1, 0
        %v2785 = vsel %vm2721, 1, 0
        %v2786 = vsel %vm2722, 1, 0
        %v2787 = vsel %vm2723, 1, 0
        %v2788 = vsel %vm2724, 1, 0
        %v2789 = vsel %vm2725, 1, 0
        %v2790 = vsel %vm2726, 1, 0
        %v2791 = vsel %vm2727, 1, 0
        %v2792 = vsel %vm2728, 1, 0
        %v2793 = vsel %vm2729, 1, 0
        %v2794 = vsel %vm2730, 1, 0
        %v2795 = vsel %vm2731, 1, 0
        %v2796 = vsel %vm2732, 1, 0
        %v2797 = vsel %vm2733, 1, 0
        %v2798 = vsel %vm2734, 1, 0
        %v2799 = vsel %vm2735, 1, 0
        %v2800 = vsel %vm2736, 1, 0
        %v2801 = vsel %vm2737, 1, 0
        %v2802 = vsel %vm2738, 1, 0
        %v2803 = vsel %vm2739, 1, 0
        %v2804 = vsel %vm2740, 1, 0
        %v2805 = vsel %vm2741, 1, 0
        %v2806 = vsel %vm2742, 1, 0
        %v2807 = vsel %vm2743, 1, 0
        %v2808 = vsel %vm2744, 1, 0
        %v2809 = vsel %vm2745, 1, 0
        %v2810 = vsel %vm2746, 1, 0
        %v2811 = vsel %vm2747, 1, 0
        %v2812 = vsel %vm2748, 1, 0
        %v2813 = vsel %vm2749, 1, 0
        %v2814 = vsel %vm2750, 1, 0
        %v2815 = vsel %vm2751, 1, 0
        %v2816 = vsel %vm2752, 1, 0
        %v2817 = vsel %vm2753, 1, 0
        %v2818 = vsel %vm2754, 1, 0
        %v2819 = vsel %vm2755, 1, 0
        %v2820 = vsel %vm2756, 1, 0
        %v2821 = vsel %vm2757, 1, 0
        %v2822 = vsel %vm2758, 1, 0
        %v2823 = vsel %vm2759, 1, 0
        %v2824 = vsel %vm2760, 1, 0
        %v2825 = vsel %vm2761, 1, 0
        %v2826 = vsel %vm2762, 1, 0
        %v2827 = vsel %vm2763, 1, 0
        %v2828 = vsel %vm2764, 1, 0
        %v2829 = vsel %vm2765, 1, 0
        %v2830 = vsel %vm2766, 1, 0
        %v2831 = vsel %vm2767, 1, 0
        %v2832 = vsel %vm2768, 1, 0
        %v2833 = vsel %vm2769, 1, 0
        %v2834 = vsel %vm2770, 1, 0
        %v2835 = vsel %vm2771, 1, 0
        %v2836 = vsel %vm2772, 1, 0
        %v2837 = vsel %vm2773, 1, 0
        %v2838 = vsel %vm2774, 1, 0
        %v2839 = vsel %vm2775, 1, 0
        %v2840 = vsel %vm2776, 1, 0
        %v2841 = vsel %vm2777, 1, 0
        %v2842 = vsel %vm2778, 1, 0
        %v2843 = vcvt.s32.f32 %v2779
        %v2844 = vcvt.s32.f32 %v2780
        %v2845 = vcvt.s32.f32 %v2781
        %v2846 = vcvt.s32.f32 %v2782
        %v2847 = vcvt.s32.f32 %v2783
        %v2848 = vcvt.s32.f32 %v2784
        %v2849 = vcvt.s32.f32 %v2785
        %v2850 = vcvt.s32.f32 %v2786
        %v2851 = vcvt.s32.f32 %v2787
        %v2852 = vcvt.s32.f32 %v2788
        %v2853 = vcvt.s32.f32 %v2789
        %v2854 = vcvt.s32.f32 %v2790
        %v2855 = vcvt.s32.f32 %v2791
        %v2856 = vcvt.s32.f32 %v2792
        %v2857 = vcvt.s32.f32 %v2793
        %v2858 = vcvt.s32.f32 %v2794
        %v2859 = vcvt.s32.f32 %v2795
        %v2860 = vcvt.s32.f32 %v2796
        %v2861 = vcvt.s32.f32 %v2797
        %v2862 = vcvt.s32.f32 %v2798
        %v2863 = vcvt.s32.f32 %v2799
        %v2864 = vcvt.s32.f32 %v2800
        %v2865 = vcvt.s32.f32 %v2801
        %v2866 = vcvt.s32.f32 %v2802
        %v2867 = vcvt.s32.f32 %v2803
        %v2868 = vcvt.s32.f32 %v2804
        %v2869 = vcvt.s32.f32 %v2805
        %v2870 = vcvt.s32.f32 %v2806
        %v2871 = vcvt.s32.f32 %v2807
        %v2872 = vcvt.s32.f32 %v2808
        %v2873 = vcvt.s32.f32 %v2809
        %v2874 = vcvt.s32.f32 %v2810
        %v2875 = vcvt.s32.f32 %v2811
        %v2876 = vcvt.s32.f32 %v2812
        %v2877 = vcvt.s32.f32 %v2813
        %v2878 = vcvt.s32.f32 %v2814
        %v2879 = vcvt.s32.f32 %v2815
        %v2880 = vcvt.s32.f32 %v2816
        %v2881 = vcvt.s32.f32 %v2817
        %v2882 = vcvt.s32.f32 %v2818
        %v2883 = vcvt.s32.f32 %v2819
        %v2884 = vcvt.s32.f32 %v2820
        %v2885 = vcvt.s32.f32 %v2821
        %v2886 = vcvt.s32.f32 %v2822
        %v2887 = vcvt.s32.f32 %v2823
        %v2888 = vcvt.s32.f32 %v2824
        %v2889 = vcvt.s32.f32 %v2825
        %v2890 = vcvt.s32.f32 %v2826
        %v2891 = vcvt.s32.f32 %v2827
        %v2892 = vcvt.s32.f32 %v2828
        %v2893 = vcvt.s32.f32 %v2829
        %v2894 = vcvt.s32.f32 %v2830
        %v2895 = vcvt.s32.f32 %v2831
        %v2896 = vcvt.s32.f32 %v2832
        %v2897 = vcvt.s32.f32 %v2833
        %v2898 = vcvt.s32.f32 %v2834
        %v2899 = vcvt.s32.f32 %v2835
        %v2900 = vcvt.s32.f32 %v2836
        %v2901 = vcvt.s32.f32 %v2837
        %v2902 = vcvt.s32.f32 %v2838
        %v2903 = vcvt.s32.f32 %v2839
        %v2904 = vcvt.s32.f32 %v2840
        %v2905 = vcvt.s32.f32 %v2841
        %v2906 = vcvt.s32.f32 %v2842
        %v2907 = vadd.f32 %v2603, %v2843
        %v2908 = vadd.f32 %v2604, %v2844
        %v2909 = vadd.f32 %v2605, %v2845
        %v2910 = vadd.f32 %v2606, %v2846
        %v2911 = vadd.f32 %v2607, %v2847
        %v2912 = vadd.f32 %v2608, %v2848
        %v2913 = vadd.f32 %v2609, %v2849
        %v2914 = vadd.f32 %v2610, %v2850
        %v2915 = vadd.f32 %v2611, %v2851
        %v2916 = vadd.f32 %v2612, %v2852
        %v2917 = vadd.f32 %v2613, %v2853
        %v2918 = vadd.f32 %v2614, %v2854
        %v2919 = vadd.f32 %v2615, %v2855
        %v2920 = vadd.f32 %v2616, %v2856
        %v2921 = vadd.f32 %v2617, %v2857
        %v2922 = vadd.f32 %v2618, %v2858
        %v2923 = vadd.f32 %v2619, %v2859
        %v2924 = vadd.f32 %v2620, %v2860
        %v2925 = vadd.f32 %v2621, %v2861
        %v2926 = vadd.f32 %v2622, %v2862
        %v2927 = vadd.f32 %v2623, %v2863
        %v2928 = vadd.f32 %v2624, %v2864
        %v2929 = vadd.f32 %v2625, %v2865
        %v2930 = vadd.f32 %v2626, %v2866
        %v2931 = vadd.f32 %v2627, %v2867
        %v2932 = vadd.f32 %v2628, %v2868
        %v2933 = vadd.f32 %v2629, %v2869
        %v2934 = vadd.f32 %v2630, %v2870
        %v2935 = vadd.f32 %v2631, %v2871
        %v2936 = vadd.f32 %v2632, %v2872
        %v2937 = vadd.f32 %v2633, %v2873
        %v2938 = vadd.f32 %v2634, %v2874
        %v2939 = vadd.f32 %v2635, %v2875
        %v2940 = vadd.f32 %v2636, %v2876
        %v2941 = vadd.f32 %v2637, %v2877
        %v2942 = vadd.f32 %v2638, %v2878
        %v2943 = vadd.f32 %v2639, %v2879
        %v2944 = vadd.f32 %v2640, %v2880
        %v2945 = vadd.f32 %v2641, %v2881
        %v2946 = vadd.f32 %v2642, %v2882
        %v2947 = vadd.f32 %v2643, %v2883
        %v2948 = vadd.f32 %v2644, %v2884
        %v2949 = vadd.f32 %v2645, %v2885
        %v2950 = vadd.f32 %v2646, %v2886
        %v2951 = vadd.f32 %v2647, %v2887
        %v2952 = vadd.f32 %v2648, %v2888
        %v2953 = vadd.f32 %v2649, %v2889
        %v2954 = vadd.f32 %v2650, %v2890
        %v2955 = vadd.f32 %v2651, %v2891
        %v2956 = vadd.f32 %v2652, %v2892
        %v2957 = vadd.f32 %v2653, %v2893
        %v2958 = vadd.f32 %v2654, %v2894
        %v2959 = vadd.f32 %v2655, %v2895
        %v2960 = vadd.f32 %v2656, %v2896
        %v2961 = vadd.f32 %v2657, %v2897
        %v2962 = vadd.f32 %v2658, %v2898
        %v2963 = vadd.f32 %v2659, %v2899
        %v2964 = vadd.f32 %v2660, %v2900
        %v2965 = vadd.f32 %v2661, %v2901
        %v2966 = vadd.f32 %v2662, %v2902
        %v2967 = vadd.f32 %v2663, %v2903
        %v2968 = vadd.f32 %v2664, %v2904
        %v2969 = vadd.f32 %v2665, %v2905
        %v2970 = vadd.f32 %v2666, %v2906
        %2971 = vset.pattern.permute.xlu0 9
        %2972 = vperm.xlu0 %2971, %v214
        %v2973 = vpop.permute.xlu0 %2972
        %2974 = vset.pattern.permute.xlu0 9
        %2975 = vperm.xlu0 %2974, %v215
        %v2976 = vpop.permute.xlu0 %2975
        %2977 = vset.pattern.permute.xlu0 9
        %2978 = vperm.xlu0 %2977, %v216
        %v2979 = vpop.permute.xlu0 %2978
        %2980 = vset.pattern.permute.xlu0 9
        %2981 = vperm.xlu0 %2980, %v217
        %v2982 = vpop.permute.xlu0 %2981
        %2983 = vset.pattern.permute.xlu0 9
        %2984 = vperm.xlu0 %2983, %v218
        %v2985 = vpop.permute.xlu0 %2984
        %2986 = vset.pattern.permute.xlu0 9
        %2987 = vperm.xlu0 %2986, %v219
        %v2988 = vpop.permute.xlu0 %2987
        %2989 = vset.pattern.permute.xlu0 9
        %2990 = vperm.xlu0 %2989, %v220
        %v2991 = vpop.permute.xlu0 %2990
        %2992 = vset.pattern.permute.xlu0 9
        %2993 = vperm.xlu0 %2992, %v221
        %v2994 = vpop.permute.xlu0 %2993
        %2995 = vset.pattern.permute.xlu0 9
        %2996 = vperm.xlu0 %2995, %v222
        %v2997 = vpop.permute.xlu0 %2996
        %2998 = vset.pattern.permute.xlu0 9
        %2999 = vperm.xlu0 %2998, %v223
        %v3000 = vpop.permute.xlu0 %2999
        %3001 = vset.pattern.permute.xlu0 9
        %3002 = vperm.xlu0 %3001, %v224
        %v3003 = vpop.permute.xlu0 %3002
        %3004 = vset.pattern.permute.xlu0 9
        %3005 = vperm.xlu0 %3004, %v225
        %v3006 = vpop.permute.xlu0 %3005
        %3007 = vset.pattern.permute.xlu0 9
        %3008 = vperm.xlu0 %3007, %v226
        %v3009 = vpop.permute.xlu0 %3008
        %3010 = vset.pattern.permute.xlu0 9
        %3011 = vperm.xlu0 %3010, %v227
        %v3012 = vpop.permute.xlu0 %3011
        %3013 = vset.pattern.permute.xlu0 9
        %3014 = vperm.xlu0 %3013, %v228
        %v3015 = vpop.permute.xlu0 %3014
        %3016 = vset.pattern.permute.xlu0 9
        %3017 = vperm.xlu0 %3016, %v229
        %v3018 = vpop.permute.xlu0 %3017
        %vm3019 = vcmp.eq.s32.totalorder %v2973, %v231
        %vm3020 = vcmp.eq.s32.totalorder %v2973, %v232
        %vm3021 = vcmp.eq.s32.totalorder %v2973, %v233
        %vm3022 = vcmp.eq.s32.totalorder %v2973, %v234
        %vm3023 = vcmp.eq.s32.totalorder %v2976, %v231
        %vm3024 = vcmp.eq.s32.totalorder %v2976, %v232
        %vm3025 = vcmp.eq.s32.totalorder %v2976, %v233
        %vm3026 = vcmp.eq.s32.totalorder %v2976, %v234
        %vm3027 = vcmp.eq.s32.totalorder %v2979, %v231
        %vm3028 = vcmp.eq.s32.totalorder %v2979, %v232
        %vm3029 = vcmp.eq.s32.totalorder %v2979, %v233
        %vm3030 = vcmp.eq.s32.totalorder %v2979, %v234
        %vm3031 = vcmp.eq.s32.totalorder %v2982, %v231
        %vm3032 = vcmp.eq.s32.totalorder %v2982, %v232
        %vm3033 = vcmp.eq.s32.totalorder %v2982, %v233
        %vm3034 = vcmp.eq.s32.totalorder %v2982, %v234
        %vm3035 = vcmp.eq.s32.totalorder %v2985, %v231
        %vm3036 = vcmp.eq.s32.totalorder %v2985, %v232
        %vm3037 = vcmp.eq.s32.totalorder %v2985, %v233
        %vm3038 = vcmp.eq.s32.totalorder %v2985, %v234
        %vm3039 = vcmp.eq.s32.totalorder %v2988, %v231
        %vm3040 = vcmp.eq.s32.totalorder %v2988, %v232
        %vm3041 = vcmp.eq.s32.totalorder %v2988, %v233
        %vm3042 = vcmp.eq.s32.totalorder %v2988, %v234
        %vm3043 = vcmp.eq.s32.totalorder %v2991, %v231
        %vm3044 = vcmp.eq.s32.totalorder %v2991, %v232
        %vm3045 = vcmp.eq.s32.totalorder %v2991, %v233
        %vm3046 = vcmp.eq.s32.totalorder %v2991, %v234
        %vm3047 = vcmp.eq.s32.totalorder %v2994, %v231
        %vm3048 = vcmp.eq.s32.totalorder %v2994, %v232
        %vm3049 = vcmp.eq.s32.totalorder %v2994, %v233
        %vm3050 = vcmp.eq.s32.totalorder %v2994, %v234
        %vm3051 = vcmp.eq.s32.totalorder %v2997, %v231
        %vm3052 = vcmp.eq.s32.totalorder %v2997, %v232
        %vm3053 = vcmp.eq.s32.totalorder %v2997, %v233
        %vm3054 = vcmp.eq.s32.totalorder %v2997, %v234
        %vm3055 = vcmp.eq.s32.totalorder %v3000, %v231
        %vm3056 = vcmp.eq.s32.totalorder %v3000, %v232
        %vm3057 = vcmp.eq.s32.totalorder %v3000, %v233
        %vm3058 = vcmp.eq.s32.totalorder %v3000, %v234
        %vm3059 = vcmp.eq.s32.totalorder %v3003, %v231
        %vm3060 = vcmp.eq.s32.totalorder %v3003, %v232
        %vm3061 = vcmp.eq.s32.totalorder %v3003, %v233
        %vm3062 = vcmp.eq.s32.totalorder %v3003, %v234
        %vm3063 = vcmp.eq.s32.totalorder %v3006, %v231
        %vm3064 = vcmp.eq.s32.totalorder %v3006, %v232
        %vm3065 = vcmp.eq.s32.totalorder %v3006, %v233
        %vm3066 = vcmp.eq.s32.totalorder %v3006, %v234
        %vm3067 = vcmp.eq.s32.totalorder %v3009, %v231
        %vm3068 = vcmp.eq.s32.totalorder %v3009, %v232
        %vm3069 = vcmp.eq.s32.totalorder %v3009, %v233
        %vm3070 = vcmp.eq.s32.totalorder %v3009, %v234
        %vm3071 = vcmp.eq.s32.totalorder %v3012, %v231
        %vm3072 = vcmp.eq.s32.totalorder %v3012, %v232
        %vm3073 = vcmp.eq.s32.totalorder %v3012, %v233
        %vm3074 = vcmp.eq.s32.totalorder %v3012, %v234
        %vm3075 = vcmp.eq.s32.totalorder %v3015, %v231
        %vm3076 = vcmp.eq.s32.totalorder %v3015, %v232
        %vm3077 = vcmp.eq.s32.totalorder %v3015, %v233
        %vm3078 = vcmp.eq.s32.totalorder %v3015, %v234
        %vm3079 = vcmp.eq.s32.totalorder %v3018, %v231
        %vm3080 = vcmp.eq.s32.totalorder %v3018, %v232
        %vm3081 = vcmp.eq.s32.totalorder %v3018, %v233
        %vm3082 = vcmp.eq.s32.totalorder %v3018, %v234
        %v3083 = vsel %vm3019, 1, 0
        %v3084 = vsel %vm3020, 1, 0
        %v3085 = vsel %vm3021, 1, 0
        %v3086 = vsel %vm3022, 1, 0
        %v3087 = vsel %vm3023, 1, 0
        %v3088 = vsel %vm3024, 1, 0
        %v3089 = vsel %vm3025, 1, 0
        %v3090 = vsel %vm3026, 1, 0
        %v3091 = vsel %vm3027, 1, 0
        %v3092 = vsel %vm3028, 1, 0
        %v3093 = vsel %vm3029, 1, 0
        %v3094 = vsel %vm3030, 1, 0
        %v3095 = vsel %vm3031, 1, 0
        %v3096 = vsel %vm3032, 1, 0
        %v3097 = vsel %vm3033, 1, 0
        %v3098 = vsel %vm3034, 1, 0
        %v3099 = vsel %vm3035, 1, 0
        %v3100 = vsel %vm3036, 1, 0
        %v3101 = vsel %vm3037, 1, 0
        %v3102 = vsel %vm3038, 1, 0
        %v3103 = vsel %vm3039, 1, 0
        %v3104 = vsel %vm3040, 1, 0
        %v3105 = vsel %vm3041, 1, 0
        %v3106 = vsel %vm3042, 1, 0
        %v3107 = vsel %vm3043, 1, 0
        %v3108 = vsel %vm3044, 1, 0
        %v3109 = vsel %vm3045, 1, 0
        %v3110 = vsel %vm3046, 1, 0
        %v3111 = vsel %vm3047, 1, 0
        %v3112 = vsel %vm3048, 1, 0
        %v3113 = vsel %vm3049, 1, 0
        %v3114 = vsel %vm3050, 1, 0
        %v3115 = vsel %vm3051, 1, 0
        %v3116 = vsel %vm3052, 1, 0
        %v3117 = vsel %vm3053, 1, 0
        %v3118 = vsel %vm3054, 1, 0
        %v3119 = vsel %vm3055, 1, 0
        %v3120 = vsel %vm3056, 1, 0
        %v3121 = vsel %vm3057, 1, 0
        %v3122 = vsel %vm3058, 1, 0
        %v3123 = vsel %vm3059, 1, 0
        %v3124 = vsel %vm3060, 1, 0
        %v3125 = vsel %vm3061, 1, 0
        %v3126 = vsel %vm3062, 1, 0
        %v3127 = vsel %vm3063, 1, 0
        %v3128 = vsel %vm3064, 1, 0
        %v3129 = vsel %vm3065, 1, 0
        %v3130 = vsel %vm3066, 1, 0
        %v3131 = vsel %vm3067, 1, 0
        %v3132 = vsel %vm3068, 1, 0
        %v3133 = vsel %vm3069, 1, 0
        %v3134 = vsel %vm3070, 1, 0
        %v3135 = vsel %vm3071, 1, 0
        %v3136 = vsel %vm3072, 1, 0
        %v3137 = vsel %vm3073, 1, 0
        %v3138 = vsel %vm3074, 1, 0
        %v3139 = vsel %vm3075, 1, 0
        %v3140 = vsel %vm3076, 1, 0
        %v3141 = vsel %vm3077, 1, 0
        %v3142 = vsel %vm3078, 1, 0
        %v3143 = vsel %vm3079, 1, 0
        %v3144 = vsel %vm3080, 1, 0
        %v3145 = vsel %vm3081, 1, 0
        %v3146 = vsel %vm3082, 1, 0
        %v3147 = vcvt.s32.f32 %v3083
        %v3148 = vcvt.s32.f32 %v3084
        %v3149 = vcvt.s32.f32 %v3085
        %v3150 = vcvt.s32.f32 %v3086
        %v3151 = vcvt.s32.f32 %v3087
        %v3152 = vcvt.s32.f32 %v3088
        %v3153 = vcvt.s32.f32 %v3089
        %v3154 = vcvt.s32.f32 %v3090
        %v3155 = vcvt.s32.f32 %v3091
        %v3156 = vcvt.s32.f32 %v3092
        %v3157 = vcvt.s32.f32 %v3093
        %v3158 = vcvt.s32.f32 %v3094
        %v3159 = vcvt.s32.f32 %v3095
        %v3160 = vcvt.s32.f32 %v3096
        %v3161 = vcvt.s32.f32 %v3097
        %v3162 = vcvt.s32.f32 %v3098
        %v3163 = vcvt.s32.f32 %v3099
        %v3164 = vcvt.s32.f32 %v3100
        %v3165 = vcvt.s32.f32 %v3101
        %v3166 = vcvt.s32.f32 %v3102
        %v3167 = vcvt.s32.f32 %v3103
        %v3168 = vcvt.s32.f32 %v3104
        %v3169 = vcvt.s32.f32 %v3105
        %v3170 = vcvt.s32.f32 %v3106
        %v3171 = vcvt.s32.f32 %v3107
        %v3172 = vcvt.s32.f32 %v3108
        %v3173 = vcvt.s32.f32 %v3109
        %v3174 = vcvt.s32.f32 %v3110
        %v3175 = vcvt.s32.f32 %v3111
        %v3176 = vcvt.s32.f32 %v3112
        %v3177 = vcvt.s32.f32 %v3113
        %v3178 = vcvt.s32.f32 %v3114
        %v3179 = vcvt.s32.f32 %v3115
        %v3180 = vcvt.s32.f32 %v3116
        %v3181 = vcvt.s32.f32 %v3117
        %v3182 = vcvt.s32.f32 %v3118
        %v3183 = vcvt.s32.f32 %v3119
        %v3184 = vcvt.s32.f32 %v3120
        %v3185 = vcvt.s32.f32 %v3121
        %v3186 = vcvt.s32.f32 %v3122
        %v3187 = vcvt.s32.f32 %v3123
        %v3188 = vcvt.s32.f32 %v3124
        %v3189 = vcvt.s32.f32 %v3125
        %v3190 = vcvt.s32.f32 %v3126
        %v3191 = vcvt.s32.f32 %v3127
        %v3192 = vcvt.s32.f32 %v3128
        %v3193 = vcvt.s32.f32 %v3129
        %v3194 = vcvt.s32.f32 %v3130
        %v3195 = vcvt.s32.f32 %v3131
        %v3196 = vcvt.s32.f32 %v3132
        %v3197 = vcvt.s32.f32 %v3133
        %v3198 = vcvt.s32.f32 %v3134
        %v3199 = vcvt.s32.f32 %v3135
        %v3200 = vcvt.s32.f32 %v3136
        %v3201 = vcvt.s32.f32 %v3137
        %v3202 = vcvt.s32.f32 %v3138
        %v3203 = vcvt.s32.f32 %v3139
        %v3204 = vcvt.s32.f32 %v3140
        %v3205 = vcvt.s32.f32 %v3141
        %v3206 = vcvt.s32.f32 %v3142
        %v3207 = vcvt.s32.f32 %v3143
        %v3208 = vcvt.s32.f32 %v3144
        %v3209 = vcvt.s32.f32 %v3145
        %v3210 = vcvt.s32.f32 %v3146
        %v3211 = vadd.f32 %v2907, %v3147
        %v3212 = vadd.f32 %v2908, %v3148
        %v3213 = vadd.f32 %v2909, %v3149
        %v3214 = vadd.f32 %v2910, %v3150
        %v3215 = vadd.f32 %v2911, %v3151
        %v3216 = vadd.f32 %v2912, %v3152
        %v3217 = vadd.f32 %v2913, %v3153
        %v3218 = vadd.f32 %v2914, %v3154
        %v3219 = vadd.f32 %v2915, %v3155
        %v3220 = vadd.f32 %v2916, %v3156
        %v3221 = vadd.f32 %v2917, %v3157
        %v3222 = vadd.f32 %v2918, %v3158
        %v3223 = vadd.f32 %v2919, %v3159
        %v3224 = vadd.f32 %v2920, %v3160
        %v3225 = vadd.f32 %v2921, %v3161
        %v3226 = vadd.f32 %v2922, %v3162
        %v3227 = vadd.f32 %v2923, %v3163
        %v3228 = vadd.f32 %v2924, %v3164
        %v3229 = vadd.f32 %v2925, %v3165
        %v3230 = vadd.f32 %v2926, %v3166
        %v3231 = vadd.f32 %v2927, %v3167
        %v3232 = vadd.f32 %v2928, %v3168
        %v3233 = vadd.f32 %v2929, %v3169
        %v3234 = vadd.f32 %v2930, %v3170
        %v3235 = vadd.f32 %v2931, %v3171
        %v3236 = vadd.f32 %v2932, %v3172
        %v3237 = vadd.f32 %v2933, %v3173
        %v3238 = vadd.f32 %v2934, %v3174
        %v3239 = vadd.f32 %v2935, %v3175
        %v3240 = vadd.f32 %v2936, %v3176
        %v3241 = vadd.f32 %v2937, %v3177
        %v3242 = vadd.f32 %v2938, %v3178
        %v3243 = vadd.f32 %v2939, %v3179
        %v3244 = vadd.f32 %v2940, %v3180
        %v3245 = vadd.f32 %v2941, %v3181
        %v3246 = vadd.f32 %v2942, %v3182
        %v3247 = vadd.f32 %v2943, %v3183
        %v3248 = vadd.f32 %v2944, %v3184
        %v3249 = vadd.f32 %v2945, %v3185
        %v3250 = vadd.f32 %v2946, %v3186
        %v3251 = vadd.f32 %v2947, %v3187
        %v3252 = vadd.f32 %v2948, %v3188
        %v3253 = vadd.f32 %v2949, %v3189
        %v3254 = vadd.f32 %v2950, %v3190
        %v3255 = vadd.f32 %v2951, %v3191
        %v3256 = vadd.f32 %v2952, %v3192
        %v3257 = vadd.f32 %v2953, %v3193
        %v3258 = vadd.f32 %v2954, %v3194
        %v3259 = vadd.f32 %v2955, %v3195
        %v3260 = vadd.f32 %v2956, %v3196
        %v3261 = vadd.f32 %v2957, %v3197
        %v3262 = vadd.f32 %v2958, %v3198
        %v3263 = vadd.f32 %v2959, %v3199
        %v3264 = vadd.f32 %v2960, %v3200
        %v3265 = vadd.f32 %v2961, %v3201
        %v3266 = vadd.f32 %v2962, %v3202
        %v3267 = vadd.f32 %v2963, %v3203
        %v3268 = vadd.f32 %v2964, %v3204
        %v3269 = vadd.f32 %v2965, %v3205
        %v3270 = vadd.f32 %v2966, %v3206
        %v3271 = vadd.f32 %v2967, %v3207
        %v3272 = vadd.f32 %v2968, %v3208
        %v3273 = vadd.f32 %v2969, %v3209
        %v3274 = vadd.f32 %v2970, %v3210
        %3275 = vset.pattern.permute.xlu0 10
        %3276 = vperm.xlu0 %3275, %v214
        %v3277 = vpop.permute.xlu0 %3276
        %3278 = vset.pattern.permute.xlu0 10
        %3279 = vperm.xlu0 %3278, %v215
        %v3280 = vpop.permute.xlu0 %3279
        %3281 = vset.pattern.permute.xlu0 10
        %3282 = vperm.xlu0 %3281, %v216
        %v3283 = vpop.permute.xlu0 %3282
        %3284 = vset.pattern.permute.xlu0 10
        %3285 = vperm.xlu0 %3284, %v217
        %v3286 = vpop.permute.xlu0 %3285
        %3287 = vset.pattern.permute.xlu0 10
        %3288 = vperm.xlu0 %3287, %v218
        %v3289 = vpop.permute.xlu0 %3288
        %3290 = vset.pattern.permute.xlu0 10
        %3291 = vperm.xlu0 %3290, %v219
        %v3292 = vpop.permute.xlu0 %3291
        %3293 = vset.pattern.permute.xlu0 10
        %3294 = vperm.xlu0 %3293, %v220
        %v3295 = vpop.permute.xlu0 %3294
        %3296 = vset.pattern.permute.xlu0 10
        %3297 = vperm.xlu0 %3296, %v221
        %v3298 = vpop.permute.xlu0 %3297
        %3299 = vset.pattern.permute.xlu0 10
        %3300 = vperm.xlu0 %3299, %v222
        %v3301 = vpop.permute.xlu0 %3300
        %3302 = vset.pattern.permute.xlu0 10
        %3303 = vperm.xlu0 %3302, %v223
        %v3304 = vpop.permute.xlu0 %3303
        %3305 = vset.pattern.permute.xlu0 10
        %3306 = vperm.xlu0 %3305, %v224
        %v3307 = vpop.permute.xlu0 %3306
        %3308 = vset.pattern.permute.xlu0 10
        %3309 = vperm.xlu0 %3308, %v225
        %v3310 = vpop.permute.xlu0 %3309
        %3311 = vset.pattern.permute.xlu0 10
        %3312 = vperm.xlu0 %3311, %v226
        %v3313 = vpop.permute.xlu0 %3312
        %3314 = vset.pattern.permute.xlu0 10
        %3315 = vperm.xlu0 %3314, %v227
        %v3316 = vpop.permute.xlu0 %3315
        %3317 = vset.pattern.permute.xlu0 10
        %3318 = vperm.xlu0 %3317, %v228
        %v3319 = vpop.permute.xlu0 %3318
        %3320 = vset.pattern.permute.xlu0 10
        %3321 = vperm.xlu0 %3320, %v229
        %v3322 = vpop.permute.xlu0 %3321
        %vm3323 = vcmp.eq.s32.totalorder %v3277, %v231
        %vm3324 = vcmp.eq.s32.totalorder %v3277, %v232
        %vm3325 = vcmp.eq.s32.totalorder %v3277, %v233
        %vm3326 = vcmp.eq.s32.totalorder %v3277, %v234
        %vm3327 = vcmp.eq.s32.totalorder %v3280, %v231
        %vm3328 = vcmp.eq.s32.totalorder %v3280, %v232
        %vm3329 = vcmp.eq.s32.totalorder %v3280, %v233
        %vm3330 = vcmp.eq.s32.totalorder %v3280, %v234
        %vm3331 = vcmp.eq.s32.totalorder %v3283, %v231
        %vm3332 = vcmp.eq.s32.totalorder %v3283, %v232
        %vm3333 = vcmp.eq.s32.totalorder %v3283, %v233
        %vm3334 = vcmp.eq.s32.totalorder %v3283, %v234
        %vm3335 = vcmp.eq.s32.totalorder %v3286, %v231
        %vm3336 = vcmp.eq.s32.totalorder %v3286, %v232
        %vm3337 = vcmp.eq.s32.totalorder %v3286, %v233
        %vm3338 = vcmp.eq.s32.totalorder %v3286, %v234
        %vm3339 = vcmp.eq.s32.totalorder %v3289, %v231
        %vm3340 = vcmp.eq.s32.totalorder %v3289, %v232
        %vm3341 = vcmp.eq.s32.totalorder %v3289, %v233
        %vm3342 = vcmp.eq.s32.totalorder %v3289, %v234
        %vm3343 = vcmp.eq.s32.totalorder %v3292, %v231
        %vm3344 = vcmp.eq.s32.totalorder %v3292, %v232
        %vm3345 = vcmp.eq.s32.totalorder %v3292, %v233
        %vm3346 = vcmp.eq.s32.totalorder %v3292, %v234
        %vm3347 = vcmp.eq.s32.totalorder %v3295, %v231
        %vm3348 = vcmp.eq.s32.totalorder %v3295, %v232
        %vm3349 = vcmp.eq.s32.totalorder %v3295, %v233
        %vm3350 = vcmp.eq.s32.totalorder %v3295, %v234
        %vm3351 = vcmp.eq.s32.totalorder %v3298, %v231
        %vm3352 = vcmp.eq.s32.totalorder %v3298, %v232
        %vm3353 = vcmp.eq.s32.totalorder %v3298, %v233
        %vm3354 = vcmp.eq.s32.totalorder %v3298, %v234
        %vm3355 = vcmp.eq.s32.totalorder %v3301, %v231
        %vm3356 = vcmp.eq.s32.totalorder %v3301, %v232
        %vm3357 = vcmp.eq.s32.totalorder %v3301, %v233
        %vm3358 = vcmp.eq.s32.totalorder %v3301, %v234
        %vm3359 = vcmp.eq.s32.totalorder %v3304, %v231
        %vm3360 = vcmp.eq.s32.totalorder %v3304, %v232
        %vm3361 = vcmp.eq.s32.totalorder %v3304, %v233
        %vm3362 = vcmp.eq.s32.totalorder %v3304, %v234
        %vm3363 = vcmp.eq.s32.totalorder %v3307, %v231
        %vm3364 = vcmp.eq.s32.totalorder %v3307, %v232
        %vm3365 = vcmp.eq.s32.totalorder %v3307, %v233
        %vm3366 = vcmp.eq.s32.totalorder %v3307, %v234
        %vm3367 = vcmp.eq.s32.totalorder %v3310, %v231
        %vm3368 = vcmp.eq.s32.totalorder %v3310, %v232
        %vm3369 = vcmp.eq.s32.totalorder %v3310, %v233
        %vm3370 = vcmp.eq.s32.totalorder %v3310, %v234
        %vm3371 = vcmp.eq.s32.totalorder %v3313, %v231
        %vm3372 = vcmp.eq.s32.totalorder %v3313, %v232
        %vm3373 = vcmp.eq.s32.totalorder %v3313, %v233
        %vm3374 = vcmp.eq.s32.totalorder %v3313, %v234
        %vm3375 = vcmp.eq.s32.totalorder %v3316, %v231
        %vm3376 = vcmp.eq.s32.totalorder %v3316, %v232
        %vm3377 = vcmp.eq.s32.totalorder %v3316, %v233
        %vm3378 = vcmp.eq.s32.totalorder %v3316, %v234
        %vm3379 = vcmp.eq.s32.totalorder %v3319, %v231
        %vm3380 = vcmp.eq.s32.totalorder %v3319, %v232
        %vm3381 = vcmp.eq.s32.totalorder %v3319, %v233
        %vm3382 = vcmp.eq.s32.totalorder %v3319, %v234
        %vm3383 = vcmp.eq.s32.totalorder %v3322, %v231
        %vm3384 = vcmp.eq.s32.totalorder %v3322, %v232
        %vm3385 = vcmp.eq.s32.totalorder %v3322, %v233
        %vm3386 = vcmp.eq.s32.totalorder %v3322, %v234
        %v3387 = vsel %vm3323, 1, 0
        %v3388 = vsel %vm3324, 1, 0
        %v3389 = vsel %vm3325, 1, 0
        %v3390 = vsel %vm3326, 1, 0
        %v3391 = vsel %vm3327, 1, 0
        %v3392 = vsel %vm3328, 1, 0
        %v3393 = vsel %vm3329, 1, 0
        %v3394 = vsel %vm3330, 1, 0
        %v3395 = vsel %vm3331, 1, 0
        %v3396 = vsel %vm3332, 1, 0
        %v3397 = vsel %vm3333, 1, 0
        %v3398 = vsel %vm3334, 1, 0
        %v3399 = vsel %vm3335, 1, 0
        %v3400 = vsel %vm3336, 1, 0
        %v3401 = vsel %vm3337, 1, 0
        %v3402 = vsel %vm3338, 1, 0
        %v3403 = vsel %vm3339, 1, 0
        %v3404 = vsel %vm3340, 1, 0
        %v3405 = vsel %vm3341, 1, 0
        %v3406 = vsel %vm3342, 1, 0
        %v3407 = vsel %vm3343, 1, 0
        %v3408 = vsel %vm3344, 1, 0
        %v3409 = vsel %vm3345, 1, 0
        %v3410 = vsel %vm3346, 1, 0
        %v3411 = vsel %vm3347, 1, 0
        %v3412 = vsel %vm3348, 1, 0
        %v3413 = vsel %vm3349, 1, 0
        %v3414 = vsel %vm3350, 1, 0
        %v3415 = vsel %vm3351, 1, 0
        %v3416 = vsel %vm3352, 1, 0
        %v3417 = vsel %vm3353, 1, 0
        %v3418 = vsel %vm3354, 1, 0
        %v3419 = vsel %vm3355, 1, 0
        %v3420 = vsel %vm3356, 1, 0
        %v3421 = vsel %vm3357, 1, 0
        %v3422 = vsel %vm3358, 1, 0
        %v3423 = vsel %vm3359, 1, 0
        %v3424 = vsel %vm3360, 1, 0
        %v3425 = vsel %vm3361, 1, 0
        %v3426 = vsel %vm3362, 1, 0
        %v3427 = vsel %vm3363, 1, 0
        %v3428 = vsel %vm3364, 1, 0
        %v3429 = vsel %vm3365, 1, 0
        %v3430 = vsel %vm3366, 1, 0
        %v3431 = vsel %vm3367, 1, 0
        %v3432 = vsel %vm3368, 1, 0
        %v3433 = vsel %vm3369, 1, 0
        %v3434 = vsel %vm3370, 1, 0
        %v3435 = vsel %vm3371, 1, 0
        %v3436 = vsel %vm3372, 1, 0
        %v3437 = vsel %vm3373, 1, 0
        %v3438 = vsel %vm3374, 1, 0
        %v3439 = vsel %vm3375, 1, 0
        %v3440 = vsel %vm3376, 1, 0
        %v3441 = vsel %vm3377, 1, 0
        %v3442 = vsel %vm3378, 1, 0
        %v3443 = vsel %vm3379, 1, 0
        %v3444 = vsel %vm3380, 1, 0
        %v3445 = vsel %vm3381, 1, 0
        %v3446 = vsel %vm3382, 1, 0
        %v3447 = vsel %vm3383, 1, 0
        %v3448 = vsel %vm3384, 1, 0
        %v3449 = vsel %vm3385, 1, 0
        %v3450 = vsel %vm3386, 1, 0
        %v3451 = vcvt.s32.f32 %v3387
        %v3452 = vcvt.s32.f32 %v3388
        %v3453 = vcvt.s32.f32 %v3389
        %v3454 = vcvt.s32.f32 %v3390
        %v3455 = vcvt.s32.f32 %v3391
        %v3456 = vcvt.s32.f32 %v3392
        %v3457 = vcvt.s32.f32 %v3393
        %v3458 = vcvt.s32.f32 %v3394
        %v3459 = vcvt.s32.f32 %v3395
        %v3460 = vcvt.s32.f32 %v3396
        %v3461 = vcvt.s32.f32 %v3397
        %v3462 = vcvt.s32.f32 %v3398
        %v3463 = vcvt.s32.f32 %v3399
        %v3464 = vcvt.s32.f32 %v3400
        %v3465 = vcvt.s32.f32 %v3401
        %v3466 = vcvt.s32.f32 %v3402
        %v3467 = vcvt.s32.f32 %v3403
        %v3468 = vcvt.s32.f32 %v3404
        %v3469 = vcvt.s32.f32 %v3405
        %v3470 = vcvt.s32.f32 %v3406
        %v3471 = vcvt.s32.f32 %v3407
        %v3472 = vcvt.s32.f32 %v3408
        %v3473 = vcvt.s32.f32 %v3409
        %v3474 = vcvt.s32.f32 %v3410
        %v3475 = vcvt.s32.f32 %v3411
        %v3476 = vcvt.s32.f32 %v3412
        %v3477 = vcvt.s32.f32 %v3413
        %v3478 = vcvt.s32.f32 %v3414
        %v3479 = vcvt.s32.f32 %v3415
        %v3480 = vcvt.s32.f32 %v3416
        %v3481 = vcvt.s32.f32 %v3417
        %v3482 = vcvt.s32.f32 %v3418
        %v3483 = vcvt.s32.f32 %v3419
        %v3484 = vcvt.s32.f32 %v3420
        %v3485 = vcvt.s32.f32 %v3421
        %v3486 = vcvt.s32.f32 %v3422
        %v3487 = vcvt.s32.f32 %v3423
        %v3488 = vcvt.s32.f32 %v3424
        %v3489 = vcvt.s32.f32 %v3425
        %v3490 = vcvt.s32.f32 %v3426
        %v3491 = vcvt.s32.f32 %v3427
        %v3492 = vcvt.s32.f32 %v3428
        %v3493 = vcvt.s32.f32 %v3429
        %v3494 = vcvt.s32.f32 %v3430
        %v3495 = vcvt.s32.f32 %v3431
        %v3496 = vcvt.s32.f32 %v3432
        %v3497 = vcvt.s32.f32 %v3433
        %v3498 = vcvt.s32.f32 %v3434
        %v3499 = vcvt.s32.f32 %v3435
        %v3500 = vcvt.s32.f32 %v3436
        %v3501 = vcvt.s32.f32 %v3437
        %v3502 = vcvt.s32.f32 %v3438
        %v3503 = vcvt.s32.f32 %v3439
        %v3504 = vcvt.s32.f32 %v3440
        %v3505 = vcvt.s32.f32 %v3441
        %v3506 = vcvt.s32.f32 %v3442
        %v3507 = vcvt.s32.f32 %v3443
        %v3508 = vcvt.s32.f32 %v3444
        %v3509 = vcvt.s32.f32 %v3445
        %v3510 = vcvt.s32.f32 %v3446
        %v3511 = vcvt.s32.f32 %v3447
        %v3512 = vcvt.s32.f32 %v3448
        %v3513 = vcvt.s32.f32 %v3449
        %v3514 = vcvt.s32.f32 %v3450
        %v3515 = vadd.f32 %v3211, %v3451
        %v3516 = vadd.f32 %v3212, %v3452
        %v3517 = vadd.f32 %v3213, %v3453
        %v3518 = vadd.f32 %v3214, %v3454
        %v3519 = vadd.f32 %v3215, %v3455
        %v3520 = vadd.f32 %v3216, %v3456
        %v3521 = vadd.f32 %v3217, %v3457
        %v3522 = vadd.f32 %v3218, %v3458
        %v3523 = vadd.f32 %v3219, %v3459
        %v3524 = vadd.f32 %v3220, %v3460
        %v3525 = vadd.f32 %v3221, %v3461
        %v3526 = vadd.f32 %v3222, %v3462
        %v3527 = vadd.f32 %v3223, %v3463
        %v3528 = vadd.f32 %v3224, %v3464
        %v3529 = vadd.f32 %v3225, %v3465
        %v3530 = vadd.f32 %v3226, %v3466
        %v3531 = vadd.f32 %v3227, %v3467
        %v3532 = vadd.f32 %v3228, %v3468
        %v3533 = vadd.f32 %v3229, %v3469
        %v3534 = vadd.f32 %v3230, %v3470
        %v3535 = vadd.f32 %v3231, %v3471
        %v3536 = vadd.f32 %v3232, %v3472
        %v3537 = vadd.f32 %v3233, %v3473
        %v3538 = vadd.f32 %v3234, %v3474
        %v3539 = vadd.f32 %v3235, %v3475
        %v3540 = vadd.f32 %v3236, %v3476
        %v3541 = vadd.f32 %v3237, %v3477
        %v3542 = vadd.f32 %v3238, %v3478
        %v3543 = vadd.f32 %v3239, %v3479
        %v3544 = vadd.f32 %v3240, %v3480
        %v3545 = vadd.f32 %v3241, %v3481
        %v3546 = vadd.f32 %v3242, %v3482
        %v3547 = vadd.f32 %v3243, %v3483
        %v3548 = vadd.f32 %v3244, %v3484
        %v3549 = vadd.f32 %v3245, %v3485
        %v3550 = vadd.f32 %v3246, %v3486
        %v3551 = vadd.f32 %v3247, %v3487
        %v3552 = vadd.f32 %v3248, %v3488
        %v3553 = vadd.f32 %v3249, %v3489
        %v3554 = vadd.f32 %v3250, %v3490
        %v3555 = vadd.f32 %v3251, %v3491
        %v3556 = vadd.f32 %v3252, %v3492
        %v3557 = vadd.f32 %v3253, %v3493
        %v3558 = vadd.f32 %v3254, %v3494
        %v3559 = vadd.f32 %v3255, %v3495
        %v3560 = vadd.f32 %v3256, %v3496
        %v3561 = vadd.f32 %v3257, %v3497
        %v3562 = vadd.f32 %v3258, %v3498
        %v3563 = vadd.f32 %v3259, %v3499
        %v3564 = vadd.f32 %v3260, %v3500
        %v3565 = vadd.f32 %v3261, %v3501
        %v3566 = vadd.f32 %v3262, %v3502
        %v3567 = vadd.f32 %v3263, %v3503
        %v3568 = vadd.f32 %v3264, %v3504
        %v3569 = vadd.f32 %v3265, %v3505
        %v3570 = vadd.f32 %v3266, %v3506
        %v3571 = vadd.f32 %v3267, %v3507
        %v3572 = vadd.f32 %v3268, %v3508
        %v3573 = vadd.f32 %v3269, %v3509
        %v3574 = vadd.f32 %v3270, %v3510
        %v3575 = vadd.f32 %v3271, %v3511
        %v3576 = vadd.f32 %v3272, %v3512
        %v3577 = vadd.f32 %v3273, %v3513
        %v3578 = vadd.f32 %v3274, %v3514
        %3579 = vset.pattern.permute.xlu0 11
        %3580 = vperm.xlu0 %3579, %v214
        %v3581 = vpop.permute.xlu0 %3580
        %3582 = vset.pattern.permute.xlu0 11
        %3583 = vperm.xlu0 %3582, %v215
        %v3584 = vpop.permute.xlu0 %3583
        %3585 = vset.pattern.permute.xlu0 11
        %3586 = vperm.xlu0 %3585, %v216
        %v3587 = vpop.permute.xlu0 %3586
        %3588 = vset.pattern.permute.xlu0 11
        %3589 = vperm.xlu0 %3588, %v217
        %v3590 = vpop.permute.xlu0 %3589
        %3591 = vset.pattern.permute.xlu0 11
        %3592 = vperm.xlu0 %3591, %v218
        %v3593 = vpop.permute.xlu0 %3592
        %3594 = vset.pattern.permute.xlu0 11
        %3595 = vperm.xlu0 %3594, %v219
        %v3596 = vpop.permute.xlu0 %3595
        %3597 = vset.pattern.permute.xlu0 11
        %3598 = vperm.xlu0 %3597, %v220
        %v3599 = vpop.permute.xlu0 %3598
        %3600 = vset.pattern.permute.xlu0 11
        %3601 = vperm.xlu0 %3600, %v221
        %v3602 = vpop.permute.xlu0 %3601
        %3603 = vset.pattern.permute.xlu0 11
        %3604 = vperm.xlu0 %3603, %v222
        %v3605 = vpop.permute.xlu0 %3604
        %3606 = vset.pattern.permute.xlu0 11
        %3607 = vperm.xlu0 %3606, %v223
        %v3608 = vpop.permute.xlu0 %3607
        %3609 = vset.pattern.permute.xlu0 11
        %3610 = vperm.xlu0 %3609, %v224
        %v3611 = vpop.permute.xlu0 %3610
        %3612 = vset.pattern.permute.xlu0 11
        %3613 = vperm.xlu0 %3612, %v225
        %v3614 = vpop.permute.xlu0 %3613
        %3615 = vset.pattern.permute.xlu0 11
        %3616 = vperm.xlu0 %3615, %v226
        %v3617 = vpop.permute.xlu0 %3616
        %3618 = vset.pattern.permute.xlu0 11
        %3619 = vperm.xlu0 %3618, %v227
        %v3620 = vpop.permute.xlu0 %3619
        %3621 = vset.pattern.permute.xlu0 11
        %3622 = vperm.xlu0 %3621, %v228
        %v3623 = vpop.permute.xlu0 %3622
        %3624 = vset.pattern.permute.xlu0 11
        %3625 = vperm.xlu0 %3624, %v229
        %v3626 = vpop.permute.xlu0 %3625
        %vm3627 = vcmp.eq.s32.totalorder %v3581, %v231
        %vm3628 = vcmp.eq.s32.totalorder %v3581, %v232
        %vm3629 = vcmp.eq.s32.totalorder %v3581, %v233
        %vm3630 = vcmp.eq.s32.totalorder %v3581, %v234
        %vm3631 = vcmp.eq.s32.totalorder %v3584, %v231
        %vm3632 = vcmp.eq.s32.totalorder %v3584, %v232
        %vm3633 = vcmp.eq.s32.totalorder %v3584, %v233
        %vm3634 = vcmp.eq.s32.totalorder %v3584, %v234
        %vm3635 = vcmp.eq.s32.totalorder %v3587, %v231
        %vm3636 = vcmp.eq.s32.totalorder %v3587, %v232
        %vm3637 = vcmp.eq.s32.totalorder %v3587, %v233
        %vm3638 = vcmp.eq.s32.totalorder %v3587, %v234
        %vm3639 = vcmp.eq.s32.totalorder %v3590, %v231
        %vm3640 = vcmp.eq.s32.totalorder %v3590, %v232
        %vm3641 = vcmp.eq.s32.totalorder %v3590, %v233
        %vm3642 = vcmp.eq.s32.totalorder %v3590, %v234
        %vm3643 = vcmp.eq.s32.totalorder %v3593, %v231
        %vm3644 = vcmp.eq.s32.totalorder %v3593, %v232
        %vm3645 = vcmp.eq.s32.totalorder %v3593, %v233
        %vm3646 = vcmp.eq.s32.totalorder %v3593, %v234
        %vm3647 = vcmp.eq.s32.totalorder %v3596, %v231
        %vm3648 = vcmp.eq.s32.totalorder %v3596, %v232
        %vm3649 = vcmp.eq.s32.totalorder %v3596, %v233
        %vm3650 = vcmp.eq.s32.totalorder %v3596, %v234
        %vm3651 = vcmp.eq.s32.totalorder %v3599, %v231
        %vm3652 = vcmp.eq.s32.totalorder %v3599, %v232
        %vm3653 = vcmp.eq.s32.totalorder %v3599, %v233
        %vm3654 = vcmp.eq.s32.totalorder %v3599, %v234
        %vm3655 = vcmp.eq.s32.totalorder %v3602, %v231
        %vm3656 = vcmp.eq.s32.totalorder %v3602, %v232
        %vm3657 = vcmp.eq.s32.totalorder %v3602, %v233
        %vm3658 = vcmp.eq.s32.totalorder %v3602, %v234
        %vm3659 = vcmp.eq.s32.totalorder %v3605, %v231
        %vm3660 = vcmp.eq.s32.totalorder %v3605, %v232
        %vm3661 = vcmp.eq.s32.totalorder %v3605, %v233
        %vm3662 = vcmp.eq.s32.totalorder %v3605, %v234
        %vm3663 = vcmp.eq.s32.totalorder %v3608, %v231
        %vm3664 = vcmp.eq.s32.totalorder %v3608, %v232
        %vm3665 = vcmp.eq.s32.totalorder %v3608, %v233
        %vm3666 = vcmp.eq.s32.totalorder %v3608, %v234
        %vm3667 = vcmp.eq.s32.totalorder %v3611, %v231
        %vm3668 = vcmp.eq.s32.totalorder %v3611, %v232
        %vm3669 = vcmp.eq.s32.totalorder %v3611, %v233
        %vm3670 = vcmp.eq.s32.totalorder %v3611, %v234
        %vm3671 = vcmp.eq.s32.totalorder %v3614, %v231
        %vm3672 = vcmp.eq.s32.totalorder %v3614, %v232
        %vm3673 = vcmp.eq.s32.totalorder %v3614, %v233
        %vm3674 = vcmp.eq.s32.totalorder %v3614, %v234
        %vm3675 = vcmp.eq.s32.totalorder %v3617, %v231
        %vm3676 = vcmp.eq.s32.totalorder %v3617, %v232
        %vm3677 = vcmp.eq.s32.totalorder %v3617, %v233
        %vm3678 = vcmp.eq.s32.totalorder %v3617, %v234
        %vm3679 = vcmp.eq.s32.totalorder %v3620, %v231
        %vm3680 = vcmp.eq.s32.totalorder %v3620, %v232
        %vm3681 = vcmp.eq.s32.totalorder %v3620, %v233
        %vm3682 = vcmp.eq.s32.totalorder %v3620, %v234
        %vm3683 = vcmp.eq.s32.totalorder %v3623, %v231
        %vm3684 = vcmp.eq.s32.totalorder %v3623, %v232
        %vm3685 = vcmp.eq.s32.totalorder %v3623, %v233
        %vm3686 = vcmp.eq.s32.totalorder %v3623, %v234
        %vm3687 = vcmp.eq.s32.totalorder %v3626, %v231
        %vm3688 = vcmp.eq.s32.totalorder %v3626, %v232
        %vm3689 = vcmp.eq.s32.totalorder %v3626, %v233
        %vm3690 = vcmp.eq.s32.totalorder %v3626, %v234
        %v3691 = vsel %vm3627, 1, 0
        %v3692 = vsel %vm3628, 1, 0
        %v3693 = vsel %vm3629, 1, 0
        %v3694 = vsel %vm3630, 1, 0
        %v3695 = vsel %vm3631, 1, 0
        %v3696 = vsel %vm3632, 1, 0
        %v3697 = vsel %vm3633, 1, 0
        %v3698 = vsel %vm3634, 1, 0
        %v3699 = vsel %vm3635, 1, 0
        %v3700 = vsel %vm3636, 1, 0
        %v3701 = vsel %vm3637, 1, 0
        %v3702 = vsel %vm3638, 1, 0
        %v3703 = vsel %vm3639, 1, 0
        %v3704 = vsel %vm3640, 1, 0
        %v3705 = vsel %vm3641, 1, 0
        %v3706 = vsel %vm3642, 1, 0
        %v3707 = vsel %vm3643, 1, 0
        %v3708 = vsel %vm3644, 1, 0
        %v3709 = vsel %vm3645, 1, 0
        %v3710 = vsel %vm3646, 1, 0
        %v3711 = vsel %vm3647, 1, 0
        %v3712 = vsel %vm3648, 1, 0
        %v3713 = vsel %vm3649, 1, 0
        %v3714 = vsel %vm3650, 1, 0
        %v3715 = vsel %vm3651, 1, 0
        %v3716 = vsel %vm3652, 1, 0
        %v3717 = vsel %vm3653, 1, 0
        %v3718 = vsel %vm3654, 1, 0
        %v3719 = vsel %vm3655, 1, 0
        %v3720 = vsel %vm3656, 1, 0
        %v3721 = vsel %vm3657, 1, 0
        %v3722 = vsel %vm3658, 1, 0
        %v3723 = vsel %vm3659, 1, 0
        %v3724 = vsel %vm3660, 1, 0
        %v3725 = vsel %vm3661, 1, 0
        %v3726 = vsel %vm3662, 1, 0
        %v3727 = vsel %vm3663, 1, 0
        %v3728 = vsel %vm3664, 1, 0
        %v3729 = vsel %vm3665, 1, 0
        %v3730 = vsel %vm3666, 1, 0
        %v3731 = vsel %vm3667, 1, 0
        %v3732 = vsel %vm3668, 1, 0
        %v3733 = vsel %vm3669, 1, 0
        %v3734 = vsel %vm3670, 1, 0
        %v3735 = vsel %vm3671, 1, 0
        %v3736 = vsel %vm3672, 1, 0
        %v3737 = vsel %vm3673, 1, 0
        %v3738 = vsel %vm3674, 1, 0
        %v3739 = vsel %vm3675, 1, 0
        %v3740 = vsel %vm3676, 1, 0
        %v3741 = vsel %vm3677, 1, 0
        %v3742 = vsel %vm3678, 1, 0
        %v3743 = vsel %vm3679, 1, 0
        %v3744 = vsel %vm3680, 1, 0
        %v3745 = vsel %vm3681, 1, 0
        %v3746 = vsel %vm3682, 1, 0
        %v3747 = vsel %vm3683, 1, 0
        %v3748 = vsel %vm3684, 1, 0
        %v3749 = vsel %vm3685, 1, 0
        %v3750 = vsel %vm3686, 1, 0
        %v3751 = vsel %vm3687, 1, 0
        %v3752 = vsel %vm3688, 1, 0
        %v3753 = vsel %vm3689, 1, 0
        %v3754 = vsel %vm3690, 1, 0
        %v3755 = vcvt.s32.f32 %v3691
        %v3756 = vcvt.s32.f32 %v3692
        %v3757 = vcvt.s32.f32 %v3693
        %v3758 = vcvt.s32.f32 %v3694
        %v3759 = vcvt.s32.f32 %v3695
        %v3760 = vcvt.s32.f32 %v3696
        %v3761 = vcvt.s32.f32 %v3697
        %v3762 = vcvt.s32.f32 %v3698
        %v3763 = vcvt.s32.f32 %v3699
        %v3764 = vcvt.s32.f32 %v3700
        %v3765 = vcvt.s32.f32 %v3701
        %v3766 = vcvt.s32.f32 %v3702
        %v3767 = vcvt.s32.f32 %v3703
        %v3768 = vcvt.s32.f32 %v3704
        %v3769 = vcvt.s32.f32 %v3705
        %v3770 = vcvt.s32.f32 %v3706
        %v3771 = vcvt.s32.f32 %v3707
        %v3772 = vcvt.s32.f32 %v3708
        %v3773 = vcvt.s32.f32 %v3709
        %v3774 = vcvt.s32.f32 %v3710
        %v3775 = vcvt.s32.f32 %v3711
        %v3776 = vcvt.s32.f32 %v3712
        %v3777 = vcvt.s32.f32 %v3713
        %v3778 = vcvt.s32.f32 %v3714
        %v3779 = vcvt.s32.f32 %v3715
        %v3780 = vcvt.s32.f32 %v3716
        %v3781 = vcvt.s32.f32 %v3717
        %v3782 = vcvt.s32.f32 %v3718
        %v3783 = vcvt.s32.f32 %v3719
        %v3784 = vcvt.s32.f32 %v3720
        %v3785 = vcvt.s32.f32 %v3721
        %v3786 = vcvt.s32.f32 %v3722
        %v3787 = vcvt.s32.f32 %v3723
        %v3788 = vcvt.s32.f32 %v3724
        %v3789 = vcvt.s32.f32 %v3725
        %v3790 = vcvt.s32.f32 %v3726
        %v3791 = vcvt.s32.f32 %v3727
        %v3792 = vcvt.s32.f32 %v3728
        %v3793 = vcvt.s32.f32 %v3729
        %v3794 = vcvt.s32.f32 %v3730
        %v3795 = vcvt.s32.f32 %v3731
        %v3796 = vcvt.s32.f32 %v3732
        %v3797 = vcvt.s32.f32 %v3733
        %v3798 = vcvt.s32.f32 %v3734
        %v3799 = vcvt.s32.f32 %v3735
        %v3800 = vcvt.s32.f32 %v3736
        %v3801 = vcvt.s32.f32 %v3737
        %v3802 = vcvt.s32.f32 %v3738
        %v3803 = vcvt.s32.f32 %v3739
        %v3804 = vcvt.s32.f32 %v3740
        %v3805 = vcvt.s32.f32 %v3741
        %v3806 = vcvt.s32.f32 %v3742
        %v3807 = vcvt.s32.f32 %v3743
        %v3808 = vcvt.s32.f32 %v3744
        %v3809 = vcvt.s32.f32 %v3745
        %v3810 = vcvt.s32.f32 %v3746
        %v3811 = vcvt.s32.f32 %v3747
        %v3812 = vcvt.s32.f32 %v3748
        %v3813 = vcvt.s32.f32 %v3749
        %v3814 = vcvt.s32.f32 %v3750
        %v3815 = vcvt.s32.f32 %v3751
        %v3816 = vcvt.s32.f32 %v3752
        %v3817 = vcvt.s32.f32 %v3753
        %v3818 = vcvt.s32.f32 %v3754
        %v3819 = vadd.f32 %v3515, %v3755
        %v3820 = vadd.f32 %v3516, %v3756
        %v3821 = vadd.f32 %v3517, %v3757
        %v3822 = vadd.f32 %v3518, %v3758
        %v3823 = vadd.f32 %v3519, %v3759
        %v3824 = vadd.f32 %v3520, %v3760
        %v3825 = vadd.f32 %v3521, %v3761
        %v3826 = vadd.f32 %v3522, %v3762
        %v3827 = vadd.f32 %v3523, %v3763
        %v3828 = vadd.f32 %v3524, %v3764
        %v3829 = vadd.f32 %v3525, %v3765
        %v3830 = vadd.f32 %v3526, %v3766
        %v3831 = vadd.f32 %v3527, %v3767
        %v3832 = vadd.f32 %v3528, %v3768
        %v3833 = vadd.f32 %v3529, %v3769
        %v3834 = vadd.f32 %v3530, %v3770
        %v3835 = vadd.f32 %v3531, %v3771
        %v3836 = vadd.f32 %v3532, %v3772
        %v3837 = vadd.f32 %v3533, %v3773
        %v3838 = vadd.f32 %v3534, %v3774
        %v3839 = vadd.f32 %v3535, %v3775
        %v3840 = vadd.f32 %v3536, %v3776
        %v3841 = vadd.f32 %v3537, %v3777
        %v3842 = vadd.f32 %v3538, %v3778
        %v3843 = vadd.f32 %v3539, %v3779
        %v3844 = vadd.f32 %v3540, %v3780
        %v3845 = vadd.f32 %v3541, %v3781
        %v3846 = vadd.f32 %v3542, %v3782
        %v3847 = vadd.f32 %v3543, %v3783
        %v3848 = vadd.f32 %v3544, %v3784
        %v3849 = vadd.f32 %v3545, %v3785
        %v3850 = vadd.f32 %v3546, %v3786
        %v3851 = vadd.f32 %v3547, %v3787
        %v3852 = vadd.f32 %v3548, %v3788
        %v3853 = vadd.f32 %v3549, %v3789
        %v3854 = vadd.f32 %v3550, %v3790
        %v3855 = vadd.f32 %v3551, %v3791
        %v3856 = vadd.f32 %v3552, %v3792
        %v3857 = vadd.f32 %v3553, %v3793
        %v3858 = vadd.f32 %v3554, %v3794
        %v3859 = vadd.f32 %v3555, %v3795
        %v3860 = vadd.f32 %v3556, %v3796
        %v3861 = vadd.f32 %v3557, %v3797
        %v3862 = vadd.f32 %v3558, %v3798
        %v3863 = vadd.f32 %v3559, %v3799
        %v3864 = vadd.f32 %v3560, %v3800
        %v3865 = vadd.f32 %v3561, %v3801
        %v3866 = vadd.f32 %v3562, %v3802
        %v3867 = vadd.f32 %v3563, %v3803
        %v3868 = vadd.f32 %v3564, %v3804
        %v3869 = vadd.f32 %v3565, %v3805
        %v3870 = vadd.f32 %v3566, %v3806
        %v3871 = vadd.f32 %v3567, %v3807
        %v3872 = vadd.f32 %v3568, %v3808
        %v3873 = vadd.f32 %v3569, %v3809
        %v3874 = vadd.f32 %v3570, %v3810
        %v3875 = vadd.f32 %v3571, %v3811
        %v3876 = vadd.f32 %v3572, %v3812
        %v3877 = vadd.f32 %v3573, %v3813
        %v3878 = vadd.f32 %v3574, %v3814
        %v3879 = vadd.f32 %v3575, %v3815
        %v3880 = vadd.f32 %v3576, %v3816
        %v3881 = vadd.f32 %v3577, %v3817
        %v3882 = vadd.f32 %v3578, %v3818
        %3883 = vset.pattern.permute.xlu0 12
        %3884 = vperm.xlu0 %3883, %v214
        %v3885 = vpop.permute.xlu0 %3884
        %3886 = vset.pattern.permute.xlu0 12
        %3887 = vperm.xlu0 %3886, %v215
        %v3888 = vpop.permute.xlu0 %3887
        %3889 = vset.pattern.permute.xlu0 12
        %3890 = vperm.xlu0 %3889, %v216
        %v3891 = vpop.permute.xlu0 %3890
        %3892 = vset.pattern.permute.xlu0 12
        %3893 = vperm.xlu0 %3892, %v217
        %v3894 = vpop.permute.xlu0 %3893
        %3895 = vset.pattern.permute.xlu0 12
        %3896 = vperm.xlu0 %3895, %v218
        %v3897 = vpop.permute.xlu0 %3896
        %3898 = vset.pattern.permute.xlu0 12
        %3899 = vperm.xlu0 %3898, %v219
        %v3900 = vpop.permute.xlu0 %3899
        %3901 = vset.pattern.permute.xlu0 12
        %3902 = vperm.xlu0 %3901, %v220
        %v3903 = vpop.permute.xlu0 %3902
        %3904 = vset.pattern.permute.xlu0 12
        %3905 = vperm.xlu0 %3904, %v221
        %v3906 = vpop.permute.xlu0 %3905
        %3907 = vset.pattern.permute.xlu0 12
        %3908 = vperm.xlu0 %3907, %v222
        %v3909 = vpop.permute.xlu0 %3908
        %3910 = vset.pattern.permute.xlu0 12
        %3911 = vperm.xlu0 %3910, %v223
        %v3912 = vpop.permute.xlu0 %3911
        %3913 = vset.pattern.permute.xlu0 12
        %3914 = vperm.xlu0 %3913, %v224
        %v3915 = vpop.permute.xlu0 %3914
        %3916 = vset.pattern.permute.xlu0 12
        %3917 = vperm.xlu0 %3916, %v225
        %v3918 = vpop.permute.xlu0 %3917
        %3919 = vset.pattern.permute.xlu0 12
        %3920 = vperm.xlu0 %3919, %v226
        %v3921 = vpop.permute.xlu0 %3920
        %3922 = vset.pattern.permute.xlu0 12
        %3923 = vperm.xlu0 %3922, %v227
        %v3924 = vpop.permute.xlu0 %3923
        %3925 = vset.pattern.permute.xlu0 12
        %3926 = vperm.xlu0 %3925, %v228
        %v3927 = vpop.permute.xlu0 %3926
        %3928 = vset.pattern.permute.xlu0 12
        %3929 = vperm.xlu0 %3928, %v229
        %v3930 = vpop.permute.xlu0 %3929
        %vm3931 = vcmp.eq.s32.totalorder %v3885, %v231
        %vm3932 = vcmp.eq.s32.totalorder %v3885, %v232
        %vm3933 = vcmp.eq.s32.totalorder %v3885, %v233
        %vm3934 = vcmp.eq.s32.totalorder %v3885, %v234
        %vm3935 = vcmp.eq.s32.totalorder %v3888, %v231
        %vm3936 = vcmp.eq.s32.totalorder %v3888, %v232
        %vm3937 = vcmp.eq.s32.totalorder %v3888, %v233
        %vm3938 = vcmp.eq.s32.totalorder %v3888, %v234
        %vm3939 = vcmp.eq.s32.totalorder %v3891, %v231
        %vm3940 = vcmp.eq.s32.totalorder %v3891, %v232
        %vm3941 = vcmp.eq.s32.totalorder %v3891, %v233
        %vm3942 = vcmp.eq.s32.totalorder %v3891, %v234
        %vm3943 = vcmp.eq.s32.totalorder %v3894, %v231
        %vm3944 = vcmp.eq.s32.totalorder %v3894, %v232
        %vm3945 = vcmp.eq.s32.totalorder %v3894, %v233
        %vm3946 = vcmp.eq.s32.totalorder %v3894, %v234
        %vm3947 = vcmp.eq.s32.totalorder %v3897, %v231
        %vm3948 = vcmp.eq.s32.totalorder %v3897, %v232
        %vm3949 = vcmp.eq.s32.totalorder %v3897, %v233
        %vm3950 = vcmp.eq.s32.totalorder %v3897, %v234
        %vm3951 = vcmp.eq.s32.totalorder %v3900, %v231
        %vm3952 = vcmp.eq.s32.totalorder %v3900, %v232
        %vm3953 = vcmp.eq.s32.totalorder %v3900, %v233
        %vm3954 = vcmp.eq.s32.totalorder %v3900, %v234
        %vm3955 = vcmp.eq.s32.totalorder %v3903, %v231
        %vm3956 = vcmp.eq.s32.totalorder %v3903, %v232
        %vm3957 = vcmp.eq.s32.totalorder %v3903, %v233
        %vm3958 = vcmp.eq.s32.totalorder %v3903, %v234
        %vm3959 = vcmp.eq.s32.totalorder %v3906, %v231
        %vm3960 = vcmp.eq.s32.totalorder %v3906, %v232
        %vm3961 = vcmp.eq.s32.totalorder %v3906, %v233
        %vm3962 = vcmp.eq.s32.totalorder %v3906, %v234
        %vm3963 = vcmp.eq.s32.totalorder %v3909, %v231
        %vm3964 = vcmp.eq.s32.totalorder %v3909, %v232
        %vm3965 = vcmp.eq.s32.totalorder %v3909, %v233
        %vm3966 = vcmp.eq.s32.totalorder %v3909, %v234
        %vm3967 = vcmp.eq.s32.totalorder %v3912, %v231
        %vm3968 = vcmp.eq.s32.totalorder %v3912, %v232
        %vm3969 = vcmp.eq.s32.totalorder %v3912, %v233
        %vm3970 = vcmp.eq.s32.totalorder %v3912, %v234
        %vm3971 = vcmp.eq.s32.totalorder %v3915, %v231
        %vm3972 = vcmp.eq.s32.totalorder %v3915, %v232
        %vm3973 = vcmp.eq.s32.totalorder %v3915, %v233
        %vm3974 = vcmp.eq.s32.totalorder %v3915, %v234
        %vm3975 = vcmp.eq.s32.totalorder %v3918, %v231
        %vm3976 = vcmp.eq.s32.totalorder %v3918, %v232
        %vm3977 = vcmp.eq.s32.totalorder %v3918, %v233
        %vm3978 = vcmp.eq.s32.totalorder %v3918, %v234
        %vm3979 = vcmp.eq.s32.totalorder %v3921, %v231
        %vm3980 = vcmp.eq.s32.totalorder %v3921, %v232
        %vm3981 = vcmp.eq.s32.totalorder %v3921, %v233
        %vm3982 = vcmp.eq.s32.totalorder %v3921, %v234
        %vm3983 = vcmp.eq.s32.totalorder %v3924, %v231
        %vm3984 = vcmp.eq.s32.totalorder %v3924, %v232
        %vm3985 = vcmp.eq.s32.totalorder %v3924, %v233
        %vm3986 = vcmp.eq.s32.totalorder %v3924, %v234
        %vm3987 = vcmp.eq.s32.totalorder %v3927, %v231
        %vm3988 = vcmp.eq.s32.totalorder %v3927, %v232
        %vm3989 = vcmp.eq.s32.totalorder %v3927, %v233
        %vm3990 = vcmp.eq.s32.totalorder %v3927, %v234
        %vm3991 = vcmp.eq.s32.totalorder %v3930, %v231
        %vm3992 = vcmp.eq.s32.totalorder %v3930, %v232
        %vm3993 = vcmp.eq.s32.totalorder %v3930, %v233
        %vm3994 = vcmp.eq.s32.totalorder %v3930, %v234
        %v3995 = vsel %vm3931, 1, 0
        %v3996 = vsel %vm3932, 1, 0
        %v3997 = vsel %vm3933, 1, 0
        %v3998 = vsel %vm3934, 1, 0
        %v3999 = vsel %vm3935, 1, 0
        %v4000 = vsel %vm3936, 1, 0
        %v4001 = vsel %vm3937, 1, 0
        %v4002 = vsel %vm3938, 1, 0
        %v4003 = vsel %vm3939, 1, 0
        %v4004 = vsel %vm3940, 1, 0
        %v4005 = vsel %vm3941, 1, 0
        %v4006 = vsel %vm3942, 1, 0
        %v4007 = vsel %vm3943, 1, 0
        %v4008 = vsel %vm3944, 1, 0
        %v4009 = vsel %vm3945, 1, 0
        %v4010 = vsel %vm3946, 1, 0
        %v4011 = vsel %vm3947, 1, 0
        %v4012 = vsel %vm3948, 1, 0
        %v4013 = vsel %vm3949, 1, 0
        %v4014 = vsel %vm3950, 1, 0
        %v4015 = vsel %vm3951, 1, 0
        %v4016 = vsel %vm3952, 1, 0
        %v4017 = vsel %vm3953, 1, 0
        %v4018 = vsel %vm3954, 1, 0
        %v4019 = vsel %vm3955, 1, 0
        %v4020 = vsel %vm3956, 1, 0
        %v4021 = vsel %vm3957, 1, 0
        %v4022 = vsel %vm3958, 1, 0
        %v4023 = vsel %vm3959, 1, 0
        %v4024 = vsel %vm3960, 1, 0
        %v4025 = vsel %vm3961, 1, 0
        %v4026 = vsel %vm3962, 1, 0
        %v4027 = vsel %vm3963, 1, 0
        %v4028 = vsel %vm3964, 1, 0
        %v4029 = vsel %vm3965, 1, 0
        %v4030 = vsel %vm3966, 1, 0
        %v4031 = vsel %vm3967, 1, 0
        %v4032 = vsel %vm3968, 1, 0
        %v4033 = vsel %vm3969, 1, 0
        %v4034 = vsel %vm3970, 1, 0
        %v4035 = vsel %vm3971, 1, 0
        %v4036 = vsel %vm3972, 1, 0
        %v4037 = vsel %vm3973, 1, 0
        %v4038 = vsel %vm3974, 1, 0
        %v4039 = vsel %vm3975, 1, 0
        %v4040 = vsel %vm3976, 1, 0
        %v4041 = vsel %vm3977, 1, 0
        %v4042 = vsel %vm3978, 1, 0
        %v4043 = vsel %vm3979, 1, 0
        %v4044 = vsel %vm3980, 1, 0
        %v4045 = vsel %vm3981, 1, 0
        %v4046 = vsel %vm3982, 1, 0
        %v4047 = vsel %vm3983, 1, 0
        %v4048 = vsel %vm3984, 1, 0
        %v4049 = vsel %vm3985, 1, 0
        %v4050 = vsel %vm3986, 1, 0
        %v4051 = vsel %vm3987, 1, 0
        %v4052 = vsel %vm3988, 1, 0
        %v4053 = vsel %vm3989, 1, 0
        %v4054 = vsel %vm3990, 1, 0
        %v4055 = vsel %vm3991, 1, 0
        %v4056 = vsel %vm3992, 1, 0
        %v4057 = vsel %vm3993, 1, 0
        %v4058 = vsel %vm3994, 1, 0
        %v4059 = vcvt.s32.f32 %v3995
        %v4060 = vcvt.s32.f32 %v3996
        %v4061 = vcvt.s32.f32 %v3997
        %v4062 = vcvt.s32.f32 %v3998
        %v4063 = vcvt.s32.f32 %v3999
        %v4064 = vcvt.s32.f32 %v4000
        %v4065 = vcvt.s32.f32 %v4001
        %v4066 = vcvt.s32.f32 %v4002
        %v4067 = vcvt.s32.f32 %v4003
        %v4068 = vcvt.s32.f32 %v4004
        %v4069 = vcvt.s32.f32 %v4005
        %v4070 = vcvt.s32.f32 %v4006
        %v4071 = vcvt.s32.f32 %v4007
        %v4072 = vcvt.s32.f32 %v4008
        %v4073 = vcvt.s32.f32 %v4009
        %v4074 = vcvt.s32.f32 %v4010
        %v4075 = vcvt.s32.f32 %v4011
        %v4076 = vcvt.s32.f32 %v4012
        %v4077 = vcvt.s32.f32 %v4013
        %v4078 = vcvt.s32.f32 %v4014
        %v4079 = vcvt.s32.f32 %v4015
        %v4080 = vcvt.s32.f32 %v4016
        %v4081 = vcvt.s32.f32 %v4017
        %v4082 = vcvt.s32.f32 %v4018
        %v4083 = vcvt.s32.f32 %v4019
        %v4084 = vcvt.s32.f32 %v4020
        %v4085 = vcvt.s32.f32 %v4021
        %v4086 = vcvt.s32.f32 %v4022
        %v4087 = vcvt.s32.f32 %v4023
        %v4088 = vcvt.s32.f32 %v4024
        %v4089 = vcvt.s32.f32 %v4025
        %v4090 = vcvt.s32.f32 %v4026
        %v4091 = vcvt.s32.f32 %v4027
        %v4092 = vcvt.s32.f32 %v4028
        %v4093 = vcvt.s32.f32 %v4029
        %v4094 = vcvt.s32.f32 %v4030
        %v4095 = vcvt.s32.f32 %v4031
        %v4096 = vcvt.s32.f32 %v4032
        %v4097 = vcvt.s32.f32 %v4033
        %v4098 = vcvt.s32.f32 %v4034
        %v4099 = vcvt.s32.f32 %v4035
        %v4100 = vcvt.s32.f32 %v4036
        %v4101 = vcvt.s32.f32 %v4037
        %v4102 = vcvt.s32.f32 %v4038
        %v4103 = vcvt.s32.f32 %v4039
        %v4104 = vcvt.s32.f32 %v4040
        %v4105 = vcvt.s32.f32 %v4041
        %v4106 = vcvt.s32.f32 %v4042
        %v4107 = vcvt.s32.f32 %v4043
        %v4108 = vcvt.s32.f32 %v4044
        %v4109 = vcvt.s32.f32 %v4045
        %v4110 = vcvt.s32.f32 %v4046
        %v4111 = vcvt.s32.f32 %v4047
        %v4112 = vcvt.s32.f32 %v4048
        %v4113 = vcvt.s32.f32 %v4049
        %v4114 = vcvt.s32.f32 %v4050
        %v4115 = vcvt.s32.f32 %v4051
        %v4116 = vcvt.s32.f32 %v4052
        %v4117 = vcvt.s32.f32 %v4053
        %v4118 = vcvt.s32.f32 %v4054
        %v4119 = vcvt.s32.f32 %v4055
        %v4120 = vcvt.s32.f32 %v4056
        %v4121 = vcvt.s32.f32 %v4057
        %v4122 = vcvt.s32.f32 %v4058
        %v4123 = vadd.f32 %v3819, %v4059
        %v4124 = vadd.f32 %v3820, %v4060
        %v4125 = vadd.f32 %v3821, %v4061
        %v4126 = vadd.f32 %v3822, %v4062
        %v4127 = vadd.f32 %v3823, %v4063
        %v4128 = vadd.f32 %v3824, %v4064
        %v4129 = vadd.f32 %v3825, %v4065
        %v4130 = vadd.f32 %v3826, %v4066
        %v4131 = vadd.f32 %v3827, %v4067
        %v4132 = vadd.f32 %v3828, %v4068
        %v4133 = vadd.f32 %v3829, %v4069
        %v4134 = vadd.f32 %v3830, %v4070
        %v4135 = vadd.f32 %v3831, %v4071
        %v4136 = vadd.f32 %v3832, %v4072
        %v4137 = vadd.f32 %v3833, %v4073
        %v4138 = vadd.f32 %v3834, %v4074
        %v4139 = vadd.f32 %v3835, %v4075
        %v4140 = vadd.f32 %v3836, %v4076
        %v4141 = vadd.f32 %v3837, %v4077
        %v4142 = vadd.f32 %v3838, %v4078
        %v4143 = vadd.f32 %v3839, %v4079
        %v4144 = vadd.f32 %v3840, %v4080
        %v4145 = vadd.f32 %v3841, %v4081
        %v4146 = vadd.f32 %v3842, %v4082
        %v4147 = vadd.f32 %v3843, %v4083
        %v4148 = vadd.f32 %v3844, %v4084
        %v4149 = vadd.f32 %v3845, %v4085
        %v4150 = vadd.f32 %v3846, %v4086
        %v4151 = vadd.f32 %v3847, %v4087
        %v4152 = vadd.f32 %v3848, %v4088
        %v4153 = vadd.f32 %v3849, %v4089
        %v4154 = vadd.f32 %v3850, %v4090
        %v4155 = vadd.f32 %v3851, %v4091
        %v4156 = vadd.f32 %v3852, %v4092
        %v4157 = vadd.f32 %v3853, %v4093
        %v4158 = vadd.f32 %v3854, %v4094
        %v4159 = vadd.f32 %v3855, %v4095
        %v4160 = vadd.f32 %v3856, %v4096
        %v4161 = vadd.f32 %v3857, %v4097
        %v4162 = vadd.f32 %v3858, %v4098
        %v4163 = vadd.f32 %v3859, %v4099
        %v4164 = vadd.f32 %v3860, %v4100
        %v4165 = vadd.f32 %v3861, %v4101
        %v4166 = vadd.f32 %v3862, %v4102
        %v4167 = vadd.f32 %v3863, %v4103
        %v4168 = vadd.f32 %v3864, %v4104
        %v4169 = vadd.f32 %v3865, %v4105
        %v4170 = vadd.f32 %v3866, %v4106
        %v4171 = vadd.f32 %v3867, %v4107
        %v4172 = vadd.f32 %v3868, %v4108
        %v4173 = vadd.f32 %v3869, %v4109
        %v4174 = vadd.f32 %v3870, %v4110
        %v4175 = vadd.f32 %v3871, %v4111
        %v4176 = vadd.f32 %v3872, %v4112
        %v4177 = vadd.f32 %v3873, %v4113
        %v4178 = vadd.f32 %v3874, %v4114
        %v4179 = vadd.f32 %v3875, %v4115
        %v4180 = vadd.f32 %v3876, %v4116
        %v4181 = vadd.f32 %v3877, %v4117
        %v4182 = vadd.f32 %v3878, %v4118
        %v4183 = vadd.f32 %v3879, %v4119
        %v4184 = vadd.f32 %v3880, %v4120
        %v4185 = vadd.f32 %v3881, %v4121
        %v4186 = vadd.f32 %v3882, %v4122
        %4187 = vset.pattern.permute.xlu0 13
        %4188 = vperm.xlu0 %4187, %v214
        %v4189 = vpop.permute.xlu0 %4188
        %4190 = vset.pattern.permute.xlu0 13
        %4191 = vperm.xlu0 %4190, %v215
        %v4192 = vpop.permute.xlu0 %4191
        %4193 = vset.pattern.permute.xlu0 13
        %4194 = vperm.xlu0 %4193, %v216
        %v4195 = vpop.permute.xlu0 %4194
        %4196 = vset.pattern.permute.xlu0 13
        %4197 = vperm.xlu0 %4196, %v217
        %v4198 = vpop.permute.xlu0 %4197
        %4199 = vset.pattern.permute.xlu0 13
        %4200 = vperm.xlu0 %4199, %v218
        %v4201 = vpop.permute.xlu0 %4200
        %4202 = vset.pattern.permute.xlu0 13
        %4203 = vperm.xlu0 %4202, %v219
        %v4204 = vpop.permute.xlu0 %4203
        %4205 = vset.pattern.permute.xlu0 13
        %4206 = vperm.xlu0 %4205, %v220
        %v4207 = vpop.permute.xlu0 %4206
        %4208 = vset.pattern.permute.xlu0 13
        %4209 = vperm.xlu0 %4208, %v221
        %v4210 = vpop.permute.xlu0 %4209
        %4211 = vset.pattern.permute.xlu0 13
        %4212 = vperm.xlu0 %4211, %v222
        %v4213 = vpop.permute.xlu0 %4212
        %4214 = vset.pattern.permute.xlu0 13
        %4215 = vperm.xlu0 %4214, %v223
        %v4216 = vpop.permute.xlu0 %4215
        %4217 = vset.pattern.permute.xlu0 13
        %4218 = vperm.xlu0 %4217, %v224
        %v4219 = vpop.permute.xlu0 %4218
        %4220 = vset.pattern.permute.xlu0 13
        %4221 = vperm.xlu0 %4220, %v225
        %v4222 = vpop.permute.xlu0 %4221
        %4223 = vset.pattern.permute.xlu0 13
        %4224 = vperm.xlu0 %4223, %v226
        %v4225 = vpop.permute.xlu0 %4224
        %4226 = vset.pattern.permute.xlu0 13
        %4227 = vperm.xlu0 %4226, %v227
        %v4228 = vpop.permute.xlu0 %4227
        %4229 = vset.pattern.permute.xlu0 13
        %4230 = vperm.xlu0 %4229, %v228
        %v4231 = vpop.permute.xlu0 %4230
        %4232 = vset.pattern.permute.xlu0 13
        %4233 = vperm.xlu0 %4232, %v229
        %v4234 = vpop.permute.xlu0 %4233
        %vm4235 = vcmp.eq.s32.totalorder %v4189, %v231
        %vm4236 = vcmp.eq.s32.totalorder %v4189, %v232
        %vm4237 = vcmp.eq.s32.totalorder %v4189, %v233
        %vm4238 = vcmp.eq.s32.totalorder %v4189, %v234
        %vm4239 = vcmp.eq.s32.totalorder %v4192, %v231
        %vm4240 = vcmp.eq.s32.totalorder %v4192, %v232
        %vm4241 = vcmp.eq.s32.totalorder %v4192, %v233
        %vm4242 = vcmp.eq.s32.totalorder %v4192, %v234
        %vm4243 = vcmp.eq.s32.totalorder %v4195, %v231
        %vm4244 = vcmp.eq.s32.totalorder %v4195, %v232
        %vm4245 = vcmp.eq.s32.totalorder %v4195, %v233
        %vm4246 = vcmp.eq.s32.totalorder %v4195, %v234
        %vm4247 = vcmp.eq.s32.totalorder %v4198, %v231
        %vm4248 = vcmp.eq.s32.totalorder %v4198, %v232
        %vm4249 = vcmp.eq.s32.totalorder %v4198, %v233
        %vm4250 = vcmp.eq.s32.totalorder %v4198, %v234
        %vm4251 = vcmp.eq.s32.totalorder %v4201, %v231
        %vm4252 = vcmp.eq.s32.totalorder %v4201, %v232
        %vm4253 = vcmp.eq.s32.totalorder %v4201, %v233
        %vm4254 = vcmp.eq.s32.totalorder %v4201, %v234
        %vm4255 = vcmp.eq.s32.totalorder %v4204, %v231
        %vm4256 = vcmp.eq.s32.totalorder %v4204, %v232
        %vm4257 = vcmp.eq.s32.totalorder %v4204, %v233
        %vm4258 = vcmp.eq.s32.totalorder %v4204, %v234
        %vm4259 = vcmp.eq.s32.totalorder %v4207, %v231
        %vm4260 = vcmp.eq.s32.totalorder %v4207, %v232
        %vm4261 = vcmp.eq.s32.totalorder %v4207, %v233
        %vm4262 = vcmp.eq.s32.totalorder %v4207, %v234
        %vm4263 = vcmp.eq.s32.totalorder %v4210, %v231
        %vm4264 = vcmp.eq.s32.totalorder %v4210, %v232
        %vm4265 = vcmp.eq.s32.totalorder %v4210, %v233
        %vm4266 = vcmp.eq.s32.totalorder %v4210, %v234
        %vm4267 = vcmp.eq.s32.totalorder %v4213, %v231
        %vm4268 = vcmp.eq.s32.totalorder %v4213, %v232
        %vm4269 = vcmp.eq.s32.totalorder %v4213, %v233
        %vm4270 = vcmp.eq.s32.totalorder %v4213, %v234
        %vm4271 = vcmp.eq.s32.totalorder %v4216, %v231
        %vm4272 = vcmp.eq.s32.totalorder %v4216, %v232
        %vm4273 = vcmp.eq.s32.totalorder %v4216, %v233
        %vm4274 = vcmp.eq.s32.totalorder %v4216, %v234
        %vm4275 = vcmp.eq.s32.totalorder %v4219, %v231
        %vm4276 = vcmp.eq.s32.totalorder %v4219, %v232
        %vm4277 = vcmp.eq.s32.totalorder %v4219, %v233
        %vm4278 = vcmp.eq.s32.totalorder %v4219, %v234
        %vm4279 = vcmp.eq.s32.totalorder %v4222, %v231
        %vm4280 = vcmp.eq.s32.totalorder %v4222, %v232
        %vm4281 = vcmp.eq.s32.totalorder %v4222, %v233
        %vm4282 = vcmp.eq.s32.totalorder %v4222, %v234
        %vm4283 = vcmp.eq.s32.totalorder %v4225, %v231
        %vm4284 = vcmp.eq.s32.totalorder %v4225, %v232
        %vm4285 = vcmp.eq.s32.totalorder %v4225, %v233
        %vm4286 = vcmp.eq.s32.totalorder %v4225, %v234
        %vm4287 = vcmp.eq.s32.totalorder %v4228, %v231
        %vm4288 = vcmp.eq.s32.totalorder %v4228, %v232
        %vm4289 = vcmp.eq.s32.totalorder %v4228, %v233
        %vm4290 = vcmp.eq.s32.totalorder %v4228, %v234
        %vm4291 = vcmp.eq.s32.totalorder %v4231, %v231
        %vm4292 = vcmp.eq.s32.totalorder %v4231, %v232
        %vm4293 = vcmp.eq.s32.totalorder %v4231, %v233
        %vm4294 = vcmp.eq.s32.totalorder %v4231, %v234
        %vm4295 = vcmp.eq.s32.totalorder %v4234, %v231
        %vm4296 = vcmp.eq.s32.totalorder %v4234, %v232
        %vm4297 = vcmp.eq.s32.totalorder %v4234, %v233
        %vm4298 = vcmp.eq.s32.totalorder %v4234, %v234
        %v4299 = vsel %vm4235, 1, 0
        %v4300 = vsel %vm4236, 1, 0
        %v4301 = vsel %vm4237, 1, 0
        %v4302 = vsel %vm4238, 1, 0
        %v4303 = vsel %vm4239, 1, 0
        %v4304 = vsel %vm4240, 1, 0
        %v4305 = vsel %vm4241, 1, 0
        %v4306 = vsel %vm4242, 1, 0
        %v4307 = vsel %vm4243, 1, 0
        %v4308 = vsel %vm4244, 1, 0
        %v4309 = vsel %vm4245, 1, 0
        %v4310 = vsel %vm4246, 1, 0
        %v4311 = vsel %vm4247, 1, 0
        %v4312 = vsel %vm4248, 1, 0
        %v4313 = vsel %vm4249, 1, 0
        %v4314 = vsel %vm4250, 1, 0
        %v4315 = vsel %vm4251, 1, 0
        %v4316 = vsel %vm4252, 1, 0
        %v4317 = vsel %vm4253, 1, 0
        %v4318 = vsel %vm4254, 1, 0
        %v4319 = vsel %vm4255, 1, 0
        %v4320 = vsel %vm4256, 1, 0
        %v4321 = vsel %vm4257, 1, 0
        %v4322 = vsel %vm4258, 1, 0
        %v4323 = vsel %vm4259, 1, 0
        %v4324 = vsel %vm4260, 1, 0
        %v4325 = vsel %vm4261, 1, 0
        %v4326 = vsel %vm4262, 1, 0
        %v4327 = vsel %vm4263, 1, 0
        %v4328 = vsel %vm4264, 1, 0
        %v4329 = vsel %vm4265, 1, 0
        %v4330 = vsel %vm4266, 1, 0
        %v4331 = vsel %vm4267, 1, 0
        %v4332 = vsel %vm4268, 1, 0
        %v4333 = vsel %vm4269, 1, 0
        %v4334 = vsel %vm4270, 1, 0
        %v4335 = vsel %vm4271, 1, 0
        %v4336 = vsel %vm4272, 1, 0
        %v4337 = vsel %vm4273, 1, 0
        %v4338 = vsel %vm4274, 1, 0
        %v4339 = vsel %vm4275, 1, 0
        %v4340 = vsel %vm4276, 1, 0
        %v4341 = vsel %vm4277, 1, 0
        %v4342 = vsel %vm4278, 1, 0
        %v4343 = vsel %vm4279, 1, 0
        %v4344 = vsel %vm4280, 1, 0
        %v4345 = vsel %vm4281, 1, 0
        %v4346 = vsel %vm4282, 1, 0
        %v4347 = vsel %vm4283, 1, 0
        %v4348 = vsel %vm4284, 1, 0
        %v4349 = vsel %vm4285, 1, 0
        %v4350 = vsel %vm4286, 1, 0
        %v4351 = vsel %vm4287, 1, 0
        %v4352 = vsel %vm4288, 1, 0
        %v4353 = vsel %vm4289, 1, 0
        %v4354 = vsel %vm4290, 1, 0
        %v4355 = vsel %vm4291, 1, 0
        %v4356 = vsel %vm4292, 1, 0
        %v4357 = vsel %vm4293, 1, 0
        %v4358 = vsel %vm4294, 1, 0
        %v4359 = vsel %vm4295, 1, 0
        %v4360 = vsel %vm4296, 1, 0
        %v4361 = vsel %vm4297, 1, 0
        %v4362 = vsel %vm4298, 1, 0
        %v4363 = vcvt.s32.f32 %v4299
        %v4364 = vcvt.s32.f32 %v4300
        %v4365 = vcvt.s32.f32 %v4301
        %v4366 = vcvt.s32.f32 %v4302
        %v4367 = vcvt.s32.f32 %v4303
        %v4368 = vcvt.s32.f32 %v4304
        %v4369 = vcvt.s32.f32 %v4305
        %v4370 = vcvt.s32.f32 %v4306
        %v4371 = vcvt.s32.f32 %v4307
        %v4372 = vcvt.s32.f32 %v4308
        %v4373 = vcvt.s32.f32 %v4309
        %v4374 = vcvt.s32.f32 %v4310
        %v4375 = vcvt.s32.f32 %v4311
        %v4376 = vcvt.s32.f32 %v4312
        %v4377 = vcvt.s32.f32 %v4313
        %v4378 = vcvt.s32.f32 %v4314
        %v4379 = vcvt.s32.f32 %v4315
        %v4380 = vcvt.s32.f32 %v4316
        %v4381 = vcvt.s32.f32 %v4317
        %v4382 = vcvt.s32.f32 %v4318
        %v4383 = vcvt.s32.f32 %v4319
        %v4384 = vcvt.s32.f32 %v4320
        %v4385 = vcvt.s32.f32 %v4321
        %v4386 = vcvt.s32.f32 %v4322
        %v4387 = vcvt.s32.f32 %v4323
        %v4388 = vcvt.s32.f32 %v4324
        %v4389 = vcvt.s32.f32 %v4325
        %v4390 = vcvt.s32.f32 %v4326
        %v4391 = vcvt.s32.f32 %v4327
        %v4392 = vcvt.s32.f32 %v4328
        %v4393 = vcvt.s32.f32 %v4329
        %v4394 = vcvt.s32.f32 %v4330
        %v4395 = vcvt.s32.f32 %v4331
        %v4396 = vcvt.s32.f32 %v4332
        %v4397 = vcvt.s32.f32 %v4333
        %v4398 = vcvt.s32.f32 %v4334
        %v4399 = vcvt.s32.f32 %v4335
        %v4400 = vcvt.s32.f32 %v4336
        %v4401 = vcvt.s32.f32 %v4337
        %v4402 = vcvt.s32.f32 %v4338
        %v4403 = vcvt.s32.f32 %v4339
        %v4404 = vcvt.s32.f32 %v4340
        %v4405 = vcvt.s32.f32 %v4341
        %v4406 = vcvt.s32.f32 %v4342
        %v4407 = vcvt.s32.f32 %v4343
        %v4408 = vcvt.s32.f32 %v4344
        %v4409 = vcvt.s32.f32 %v4345
        %v4410 = vcvt.s32.f32 %v4346
        %v4411 = vcvt.s32.f32 %v4347
        %v4412 = vcvt.s32.f32 %v4348
        %v4413 = vcvt.s32.f32 %v4349
        %v4414 = vcvt.s32.f32 %v4350
        %v4415 = vcvt.s32.f32 %v4351
        %v4416 = vcvt.s32.f32 %v4352
        %v4417 = vcvt.s32.f32 %v4353
        %v4418 = vcvt.s32.f32 %v4354
        %v4419 = vcvt.s32.f32 %v4355
        %v4420 = vcvt.s32.f32 %v4356
        %v4421 = vcvt.s32.f32 %v4357
        %v4422 = vcvt.s32.f32 %v4358
        %v4423 = vcvt.s32.f32 %v4359
        %v4424 = vcvt.s32.f32 %v4360
        %v4425 = vcvt.s32.f32 %v4361
        %v4426 = vcvt.s32.f32 %v4362
        %v4427 = vadd.f32 %v4123, %v4363
        %v4428 = vadd.f32 %v4124, %v4364
        %v4429 = vadd.f32 %v4125, %v4365
        %v4430 = vadd.f32 %v4126, %v4366
        %v4431 = vadd.f32 %v4127, %v4367
        %v4432 = vadd.f32 %v4128, %v4368
        %v4433 = vadd.f32 %v4129, %v4369
        %v4434 = vadd.f32 %v4130, %v4370
        %v4435 = vadd.f32 %v4131, %v4371
        %v4436 = vadd.f32 %v4132, %v4372
        %v4437 = vadd.f32 %v4133, %v4373
        %v4438 = vadd.f32 %v4134, %v4374
        %v4439 = vadd.f32 %v4135, %v4375
        %v4440 = vadd.f32 %v4136, %v4376
        %v4441 = vadd.f32 %v4137, %v4377
        %v4442 = vadd.f32 %v4138, %v4378
        %v4443 = vadd.f32 %v4139, %v4379
        %v4444 = vadd.f32 %v4140, %v4380
        %v4445 = vadd.f32 %v4141, %v4381
        %v4446 = vadd.f32 %v4142, %v4382
        %v4447 = vadd.f32 %v4143, %v4383
        %v4448 = vadd.f32 %v4144, %v4384
        %v4449 = vadd.f32 %v4145, %v4385
        %v4450 = vadd.f32 %v4146, %v4386
        %v4451 = vadd.f32 %v4147, %v4387
        %v4452 = vadd.f32 %v4148, %v4388
        %v4453 = vadd.f32 %v4149, %v4389
        %v4454 = vadd.f32 %v4150, %v4390
        %v4455 = vadd.f32 %v4151, %v4391
        %v4456 = vadd.f32 %v4152, %v4392
        %v4457 = vadd.f32 %v4153, %v4393
        %v4458 = vadd.f32 %v4154, %v4394
        %v4459 = vadd.f32 %v4155, %v4395
        %v4460 = vadd.f32 %v4156, %v4396
        %v4461 = vadd.f32 %v4157, %v4397
        %v4462 = vadd.f32 %v4158, %v4398
        %v4463 = vadd.f32 %v4159, %v4399
        %v4464 = vadd.f32 %v4160, %v4400
        %v4465 = vadd.f32 %v4161, %v4401
        %v4466 = vadd.f32 %v4162, %v4402
        %v4467 = vadd.f32 %v4163, %v4403
        %v4468 = vadd.f32 %v4164, %v4404
        %v4469 = vadd.f32 %v4165, %v4405
        %v4470 = vadd.f32 %v4166, %v4406
        %v4471 = vadd.f32 %v4167, %v4407
        %v4472 = vadd.f32 %v4168, %v4408
        %v4473 = vadd.f32 %v4169, %v4409
        %v4474 = vadd.f32 %v4170, %v4410
        %v4475 = vadd.f32 %v4171, %v4411
        %v4476 = vadd.f32 %v4172, %v4412
        %v4477 = vadd.f32 %v4173, %v4413
        %v4478 = vadd.f32 %v4174, %v4414
        %v4479 = vadd.f32 %v4175, %v4415
        %v4480 = vadd.f32 %v4176, %v4416
        %v4481 = vadd.f32 %v4177, %v4417
        %v4482 = vadd.f32 %v4178, %v4418
        %v4483 = vadd.f32 %v4179, %v4419
        %v4484 = vadd.f32 %v4180, %v4420
        %v4485 = vadd.f32 %v4181, %v4421
        %v4486 = vadd.f32 %v4182, %v4422
        %v4487 = vadd.f32 %v4183, %v4423
        %v4488 = vadd.f32 %v4184, %v4424
        %v4489 = vadd.f32 %v4185, %v4425
        %v4490 = vadd.f32 %v4186, %v4426
        %4491 = vset.pattern.permute.xlu0 14
        %4492 = vperm.xlu0 %4491, %v214
        %v4493 = vpop.permute.xlu0 %4492
        %4494 = vset.pattern.permute.xlu0 14
        %4495 = vperm.xlu0 %4494, %v215
        %v4496 = vpop.permute.xlu0 %4495
        %4497 = vset.pattern.permute.xlu0 14
        %4498 = vperm.xlu0 %4497, %v216
        %v4499 = vpop.permute.xlu0 %4498
        %4500 = vset.pattern.permute.xlu0 14
        %4501 = vperm.xlu0 %4500, %v217
        %v4502 = vpop.permute.xlu0 %4501
        %4503 = vset.pattern.permute.xlu0 14
        %4504 = vperm.xlu0 %4503, %v218
        %v4505 = vpop.permute.xlu0 %4504
        %4506 = vset.pattern.permute.xlu0 14
        %4507 = vperm.xlu0 %4506, %v219
        %v4508 = vpop.permute.xlu0 %4507
        %4509 = vset.pattern.permute.xlu0 14
        %4510 = vperm.xlu0 %4509, %v220
        %v4511 = vpop.permute.xlu0 %4510
        %4512 = vset.pattern.permute.xlu0 14
        %4513 = vperm.xlu0 %4512, %v221
        %v4514 = vpop.permute.xlu0 %4513
        %4515 = vset.pattern.permute.xlu0 14
        %4516 = vperm.xlu0 %4515, %v222
        %v4517 = vpop.permute.xlu0 %4516
        %4518 = vset.pattern.permute.xlu0 14
        %4519 = vperm.xlu0 %4518, %v223
        %v4520 = vpop.permute.xlu0 %4519
        %4521 = vset.pattern.permute.xlu0 14
        %4522 = vperm.xlu0 %4521, %v224
        %v4523 = vpop.permute.xlu0 %4522
        %4524 = vset.pattern.permute.xlu0 14
        %4525 = vperm.xlu0 %4524, %v225
        %v4526 = vpop.permute.xlu0 %4525
        %4527 = vset.pattern.permute.xlu0 14
        %4528 = vperm.xlu0 %4527, %v226
        %v4529 = vpop.permute.xlu0 %4528
        %4530 = vset.pattern.permute.xlu0 14
        %4531 = vperm.xlu0 %4530, %v227
        %v4532 = vpop.permute.xlu0 %4531
        %4533 = vset.pattern.permute.xlu0 14
        %4534 = vperm.xlu0 %4533, %v228
        %v4535 = vpop.permute.xlu0 %4534
        %4536 = vset.pattern.permute.xlu0 14
        %4537 = vperm.xlu0 %4536, %v229
        %v4538 = vpop.permute.xlu0 %4537
        %vm4539 = vcmp.eq.s32.totalorder %v4493, %v231
        %vm4540 = vcmp.eq.s32.totalorder %v4493, %v232
        %vm4541 = vcmp.eq.s32.totalorder %v4493, %v233
        %vm4542 = vcmp.eq.s32.totalorder %v4493, %v234
        %vm4543 = vcmp.eq.s32.totalorder %v4496, %v231
        %vm4544 = vcmp.eq.s32.totalorder %v4496, %v232
        %vm4545 = vcmp.eq.s32.totalorder %v4496, %v233
        %vm4546 = vcmp.eq.s32.totalorder %v4496, %v234
        %vm4547 = vcmp.eq.s32.totalorder %v4499, %v231
        %vm4548 = vcmp.eq.s32.totalorder %v4499, %v232
        %vm4549 = vcmp.eq.s32.totalorder %v4499, %v233
        %vm4550 = vcmp.eq.s32.totalorder %v4499, %v234
        %vm4551 = vcmp.eq.s32.totalorder %v4502, %v231
        %vm4552 = vcmp.eq.s32.totalorder %v4502, %v232
        %vm4553 = vcmp.eq.s32.totalorder %v4502, %v233
        %vm4554 = vcmp.eq.s32.totalorder %v4502, %v234
        %vm4555 = vcmp.eq.s32.totalorder %v4505, %v231
        %vm4556 = vcmp.eq.s32.totalorder %v4505, %v232
        %vm4557 = vcmp.eq.s32.totalorder %v4505, %v233
        %vm4558 = vcmp.eq.s32.totalorder %v4505, %v234
        %vm4559 = vcmp.eq.s32.totalorder %v4508, %v231
        %vm4560 = vcmp.eq.s32.totalorder %v4508, %v232
        %vm4561 = vcmp.eq.s32.totalorder %v4508, %v233
        %vm4562 = vcmp.eq.s32.totalorder %v4508, %v234
        %vm4563 = vcmp.eq.s32.totalorder %v4511, %v231
        %vm4564 = vcmp.eq.s32.totalorder %v4511, %v232
        %vm4565 = vcmp.eq.s32.totalorder %v4511, %v233
        %vm4566 = vcmp.eq.s32.totalorder %v4511, %v234
        %vm4567 = vcmp.eq.s32.totalorder %v4514, %v231
        %vm4568 = vcmp.eq.s32.totalorder %v4514, %v232
        %vm4569 = vcmp.eq.s32.totalorder %v4514, %v233
        %vm4570 = vcmp.eq.s32.totalorder %v4514, %v234
        %vm4571 = vcmp.eq.s32.totalorder %v4517, %v231
        %vm4572 = vcmp.eq.s32.totalorder %v4517, %v232
        %vm4573 = vcmp.eq.s32.totalorder %v4517, %v233
        %vm4574 = vcmp.eq.s32.totalorder %v4517, %v234
        %vm4575 = vcmp.eq.s32.totalorder %v4520, %v231
        %vm4576 = vcmp.eq.s32.totalorder %v4520, %v232
        %vm4577 = vcmp.eq.s32.totalorder %v4520, %v233
        %vm4578 = vcmp.eq.s32.totalorder %v4520, %v234
        %vm4579 = vcmp.eq.s32.totalorder %v4523, %v231
        %vm4580 = vcmp.eq.s32.totalorder %v4523, %v232
        %vm4581 = vcmp.eq.s32.totalorder %v4523, %v233
        %vm4582 = vcmp.eq.s32.totalorder %v4523, %v234
        %vm4583 = vcmp.eq.s32.totalorder %v4526, %v231
        %vm4584 = vcmp.eq.s32.totalorder %v4526, %v232
        %vm4585 = vcmp.eq.s32.totalorder %v4526, %v233
        %vm4586 = vcmp.eq.s32.totalorder %v4526, %v234
        %vm4587 = vcmp.eq.s32.totalorder %v4529, %v231
        %vm4588 = vcmp.eq.s32.totalorder %v4529, %v232
        %vm4589 = vcmp.eq.s32.totalorder %v4529, %v233
        %vm4590 = vcmp.eq.s32.totalorder %v4529, %v234
        %vm4591 = vcmp.eq.s32.totalorder %v4532, %v231
        %vm4592 = vcmp.eq.s32.totalorder %v4532, %v232
        %vm4593 = vcmp.eq.s32.totalorder %v4532, %v233
        %vm4594 = vcmp.eq.s32.totalorder %v4532, %v234
        %vm4595 = vcmp.eq.s32.totalorder %v4535, %v231
        %vm4596 = vcmp.eq.s32.totalorder %v4535, %v232
        %vm4597 = vcmp.eq.s32.totalorder %v4535, %v233
        %vm4598 = vcmp.eq.s32.totalorder %v4535, %v234
        %vm4599 = vcmp.eq.s32.totalorder %v4538, %v231
        %vm4600 = vcmp.eq.s32.totalorder %v4538, %v232
        %vm4601 = vcmp.eq.s32.totalorder %v4538, %v233
        %vm4602 = vcmp.eq.s32.totalorder %v4538, %v234
        %v4603 = vsel %vm4539, 1, 0
        %v4604 = vsel %vm4540, 1, 0
        %v4605 = vsel %vm4541, 1, 0
        %v4606 = vsel %vm4542, 1, 0
        %v4607 = vsel %vm4543, 1, 0
        %v4608 = vsel %vm4544, 1, 0
        %v4609 = vsel %vm4545, 1, 0
        %v4610 = vsel %vm4546, 1, 0
        %v4611 = vsel %vm4547, 1, 0
        %v4612 = vsel %vm4548, 1, 0
        %v4613 = vsel %vm4549, 1, 0
        %v4614 = vsel %vm4550, 1, 0
        %v4615 = vsel %vm4551, 1, 0
        %v4616 = vsel %vm4552, 1, 0
        %v4617 = vsel %vm4553, 1, 0
        %v4618 = vsel %vm4554, 1, 0
        %v4619 = vsel %vm4555, 1, 0
        %v4620 = vsel %vm4556, 1, 0
        %v4621 = vsel %vm4557, 1, 0
        %v4622 = vsel %vm4558, 1, 0
        %v4623 = vsel %vm4559, 1, 0
        %v4624 = vsel %vm4560, 1, 0
        %v4625 = vsel %vm4561, 1, 0
        %v4626 = vsel %vm4562, 1, 0
        %v4627 = vsel %vm4563, 1, 0
        %v4628 = vsel %vm4564, 1, 0
        %v4629 = vsel %vm4565, 1, 0
        %v4630 = vsel %vm4566, 1, 0
        %v4631 = vsel %vm4567, 1, 0
        %v4632 = vsel %vm4568, 1, 0
        %v4633 = vsel %vm4569, 1, 0
        %v4634 = vsel %vm4570, 1, 0
        %v4635 = vsel %vm4571, 1, 0
        %v4636 = vsel %vm4572, 1, 0
        %v4637 = vsel %vm4573, 1, 0
        %v4638 = vsel %vm4574, 1, 0
        %v4639 = vsel %vm4575, 1, 0
        %v4640 = vsel %vm4576, 1, 0
        %v4641 = vsel %vm4577, 1, 0
        %v4642 = vsel %vm4578, 1, 0
        %v4643 = vsel %vm4579, 1, 0
        %v4644 = vsel %vm4580, 1, 0
        %v4645 = vsel %vm4581, 1, 0
        %v4646 = vsel %vm4582, 1, 0
        %v4647 = vsel %vm4583, 1, 0
        %v4648 = vsel %vm4584, 1, 0
        %v4649 = vsel %vm4585, 1, 0
        %v4650 = vsel %vm4586, 1, 0
        %v4651 = vsel %vm4587, 1, 0
        %v4652 = vsel %vm4588, 1, 0
        %v4653 = vsel %vm4589, 1, 0
        %v4654 = vsel %vm4590, 1, 0
        %v4655 = vsel %vm4591, 1, 0
        %v4656 = vsel %vm4592, 1, 0
        %v4657 = vsel %vm4593, 1, 0
        %v4658 = vsel %vm4594, 1, 0
        %v4659 = vsel %vm4595, 1, 0
        %v4660 = vsel %vm4596, 1, 0
        %v4661 = vsel %vm4597, 1, 0
        %v4662 = vsel %vm4598, 1, 0
        %v4663 = vsel %vm4599, 1, 0
        %v4664 = vsel %vm4600, 1, 0
        %v4665 = vsel %vm4601, 1, 0
        %v4666 = vsel %vm4602, 1, 0
        %v4667 = vcvt.s32.f32 %v4603
        %v4668 = vcvt.s32.f32 %v4604
        %v4669 = vcvt.s32.f32 %v4605
        %v4670 = vcvt.s32.f32 %v4606
        %v4671 = vcvt.s32.f32 %v4607
        %v4672 = vcvt.s32.f32 %v4608
        %v4673 = vcvt.s32.f32 %v4609
        %v4674 = vcvt.s32.f32 %v4610
        %v4675 = vcvt.s32.f32 %v4611
        %v4676 = vcvt.s32.f32 %v4612
        %v4677 = vcvt.s32.f32 %v4613
        %v4678 = vcvt.s32.f32 %v4614
        %v4679 = vcvt.s32.f32 %v4615
        %v4680 = vcvt.s32.f32 %v4616
        %v4681 = vcvt.s32.f32 %v4617
        %v4682 = vcvt.s32.f32 %v4618
        %v4683 = vcvt.s32.f32 %v4619
        %v4684 = vcvt.s32.f32 %v4620
        %v4685 = vcvt.s32.f32 %v4621
        %v4686 = vcvt.s32.f32 %v4622
        %v4687 = vcvt.s32.f32 %v4623
        %v4688 = vcvt.s32.f32 %v4624
        %v4689 = vcvt.s32.f32 %v4625
        %v4690 = vcvt.s32.f32 %v4626
        %v4691 = vcvt.s32.f32 %v4627
        %v4692 = vcvt.s32.f32 %v4628
        %v4693 = vcvt.s32.f32 %v4629
        %v4694 = vcvt.s32.f32 %v4630
        %v4695 = vcvt.s32.f32 %v4631
        %v4696 = vcvt.s32.f32 %v4632
        %v4697 = vcvt.s32.f32 %v4633
        %v4698 = vcvt.s32.f32 %v4634
        %v4699 = vcvt.s32.f32 %v4635
        %v4700 = vcvt.s32.f32 %v4636
        %v4701 = vcvt.s32.f32 %v4637
        %v4702 = vcvt.s32.f32 %v4638
        %v4703 = vcvt.s32.f32 %v4639
        %v4704 = vcvt.s32.f32 %v4640
        %v4705 = vcvt.s32.f32 %v4641
        %v4706 = vcvt.s32.f32 %v4642
        %v4707 = vcvt.s32.f32 %v4643
        %v4708 = vcvt.s32.f32 %v4644
        %v4709 = vcvt.s32.f32 %v4645
        %v4710 = vcvt.s32.f32 %v4646
        %v4711 = vcvt.s32.f32 %v4647
        %v4712 = vcvt.s32.f32 %v4648
        %v4713 = vcvt.s32.f32 %v4649
        %v4714 = vcvt.s32.f32 %v4650
        %v4715 = vcvt.s32.f32 %v4651
        %v4716 = vcvt.s32.f32 %v4652
        %v4717 = vcvt.s32.f32 %v4653
        %v4718 = vcvt.s32.f32 %v4654
        %v4719 = vcvt.s32.f32 %v4655
        %v4720 = vcvt.s32.f32 %v4656
        %v4721 = vcvt.s32.f32 %v4657
        %v4722 = vcvt.s32.f32 %v4658
        %v4723 = vcvt.s32.f32 %v4659
        %v4724 = vcvt.s32.f32 %v4660
        %v4725 = vcvt.s32.f32 %v4661
        %v4726 = vcvt.s32.f32 %v4662
        %v4727 = vcvt.s32.f32 %v4663
        %v4728 = vcvt.s32.f32 %v4664
        %v4729 = vcvt.s32.f32 %v4665
        %v4730 = vcvt.s32.f32 %v4666
        %v4731 = vadd.f32 %v4427, %v4667
        %v4732 = vadd.f32 %v4428, %v4668
        %v4733 = vadd.f32 %v4429, %v4669
        %v4734 = vadd.f32 %v4430, %v4670
        %v4735 = vadd.f32 %v4431, %v4671
        %v4736 = vadd.f32 %v4432, %v4672
        %v4737 = vadd.f32 %v4433, %v4673
        %v4738 = vadd.f32 %v4434, %v4674
        %v4739 = vadd.f32 %v4435, %v4675
        %v4740 = vadd.f32 %v4436, %v4676
        %v4741 = vadd.f32 %v4437, %v4677
        %v4742 = vadd.f32 %v4438, %v4678
        %v4743 = vadd.f32 %v4439, %v4679
        %v4744 = vadd.f32 %v4440, %v4680
        %v4745 = vadd.f32 %v4441, %v4681
        %v4746 = vadd.f32 %v4442, %v4682
        %v4747 = vadd.f32 %v4443, %v4683
        %v4748 = vadd.f32 %v4444, %v4684
        %v4749 = vadd.f32 %v4445, %v4685
        %v4750 = vadd.f32 %v4446, %v4686
        %v4751 = vadd.f32 %v4447, %v4687
        %v4752 = vadd.f32 %v4448, %v4688
        %v4753 = vadd.f32 %v4449, %v4689
        %v4754 = vadd.f32 %v4450, %v4690
        %v4755 = vadd.f32 %v4451, %v4691
        %v4756 = vadd.f32 %v4452, %v4692
        %v4757 = vadd.f32 %v4453, %v4693
        %v4758 = vadd.f32 %v4454, %v4694
        %v4759 = vadd.f32 %v4455, %v4695
        %v4760 = vadd.f32 %v4456, %v4696
        %v4761 = vadd.f32 %v4457, %v4697
        %v4762 = vadd.f32 %v4458, %v4698
        %v4763 = vadd.f32 %v4459, %v4699
        %v4764 = vadd.f32 %v4460, %v4700
        %v4765 = vadd.f32 %v4461, %v4701
        %v4766 = vadd.f32 %v4462, %v4702
        %v4767 = vadd.f32 %v4463, %v4703
        %v4768 = vadd.f32 %v4464, %v4704
        %v4769 = vadd.f32 %v4465, %v4705
        %v4770 = vadd.f32 %v4466, %v4706
        %v4771 = vadd.f32 %v4467, %v4707
        %v4772 = vadd.f32 %v4468, %v4708
        %v4773 = vadd.f32 %v4469, %v4709
        %v4774 = vadd.f32 %v4470, %v4710
        %v4775 = vadd.f32 %v4471, %v4711
        %v4776 = vadd.f32 %v4472, %v4712
        %v4777 = vadd.f32 %v4473, %v4713
        %v4778 = vadd.f32 %v4474, %v4714
        %v4779 = vadd.f32 %v4475, %v4715
        %v4780 = vadd.f32 %v4476, %v4716
        %v4781 = vadd.f32 %v4477, %v4717
        %v4782 = vadd.f32 %v4478, %v4718
        %v4783 = vadd.f32 %v4479, %v4719
        %v4784 = vadd.f32 %v4480, %v4720
        %v4785 = vadd.f32 %v4481, %v4721
        %v4786 = vadd.f32 %v4482, %v4722
        %v4787 = vadd.f32 %v4483, %v4723
        %v4788 = vadd.f32 %v4484, %v4724
        %v4789 = vadd.f32 %v4485, %v4725
        %v4790 = vadd.f32 %v4486, %v4726
        %v4791 = vadd.f32 %v4487, %v4727
        %v4792 = vadd.f32 %v4488, %v4728
        %v4793 = vadd.f32 %v4489, %v4729
        %v4794 = vadd.f32 %v4490, %v4730
        %4795 = vset.pattern.permute.xlu0 15
        %4796 = vperm.xlu0 %4795, %v214
        %v4797 = vpop.permute.xlu0 %4796
        %4798 = vset.pattern.permute.xlu0 15
        %4799 = vperm.xlu0 %4798, %v215
        %v4800 = vpop.permute.xlu0 %4799
        %4801 = vset.pattern.permute.xlu0 15
        %4802 = vperm.xlu0 %4801, %v216
        %v4803 = vpop.permute.xlu0 %4802
        %4804 = vset.pattern.permute.xlu0 15
        %4805 = vperm.xlu0 %4804, %v217
        %v4806 = vpop.permute.xlu0 %4805
        %4807 = vset.pattern.permute.xlu0 15
        %4808 = vperm.xlu0 %4807, %v218
        %v4809 = vpop.permute.xlu0 %4808
        %4810 = vset.pattern.permute.xlu0 15
        %4811 = vperm.xlu0 %4810, %v219
        %v4812 = vpop.permute.xlu0 %4811
        %4813 = vset.pattern.permute.xlu0 15
        %4814 = vperm.xlu0 %4813, %v220
        %v4815 = vpop.permute.xlu0 %4814
        %4816 = vset.pattern.permute.xlu0 15
        %4817 = vperm.xlu0 %4816, %v221
        %v4818 = vpop.permute.xlu0 %4817
        %4819 = vset.pattern.permute.xlu0 15
        %4820 = vperm.xlu0 %4819, %v222
        %v4821 = vpop.permute.xlu0 %4820
        %4822 = vset.pattern.permute.xlu0 15
        %4823 = vperm.xlu0 %4822, %v223
        %v4824 = vpop.permute.xlu0 %4823
        %4825 = vset.pattern.permute.xlu0 15
        %4826 = vperm.xlu0 %4825, %v224
        %v4827 = vpop.permute.xlu0 %4826
        %4828 = vset.pattern.permute.xlu0 15
        %4829 = vperm.xlu0 %4828, %v225
        %v4830 = vpop.permute.xlu0 %4829
        %4831 = vset.pattern.permute.xlu0 15
        %4832 = vperm.xlu0 %4831, %v226
        %v4833 = vpop.permute.xlu0 %4832
        %4834 = vset.pattern.permute.xlu0 15
        %4835 = vperm.xlu0 %4834, %v227
        %v4836 = vpop.permute.xlu0 %4835
        %4837 = vset.pattern.permute.xlu0 15
        %4838 = vperm.xlu0 %4837, %v228
        %v4839 = vpop.permute.xlu0 %4838
        %4840 = vset.pattern.permute.xlu0 15
        %4841 = vperm.xlu0 %4840, %v229
        %v4842 = vpop.permute.xlu0 %4841
        %vm4843 = vcmp.eq.s32.totalorder %v4797, %v231
        %vm4844 = vcmp.eq.s32.totalorder %v4797, %v232
        %vm4845 = vcmp.eq.s32.totalorder %v4797, %v233
        %vm4846 = vcmp.eq.s32.totalorder %v4797, %v234
        %vm4847 = vcmp.eq.s32.totalorder %v4800, %v231
        %vm4848 = vcmp.eq.s32.totalorder %v4800, %v232
        %vm4849 = vcmp.eq.s32.totalorder %v4800, %v233
        %vm4850 = vcmp.eq.s32.totalorder %v4800, %v234
        %vm4851 = vcmp.eq.s32.totalorder %v4803, %v231
        %vm4852 = vcmp.eq.s32.totalorder %v4803, %v232
        %vm4853 = vcmp.eq.s32.totalorder %v4803, %v233
        %vm4854 = vcmp.eq.s32.totalorder %v4803, %v234
        %vm4855 = vcmp.eq.s32.totalorder %v4806, %v231
        %vm4856 = vcmp.eq.s32.totalorder %v4806, %v232
        %vm4857 = vcmp.eq.s32.totalorder %v4806, %v233
        %vm4858 = vcmp.eq.s32.totalorder %v4806, %v234
        %vm4859 = vcmp.eq.s32.totalorder %v4809, %v231
        %vm4860 = vcmp.eq.s32.totalorder %v4809, %v232
        %vm4861 = vcmp.eq.s32.totalorder %v4809, %v233
        %vm4862 = vcmp.eq.s32.totalorder %v4809, %v234
        %vm4863 = vcmp.eq.s32.totalorder %v4812, %v231
        %vm4864 = vcmp.eq.s32.totalorder %v4812, %v232
        %vm4865 = vcmp.eq.s32.totalorder %v4812, %v233
        %vm4866 = vcmp.eq.s32.totalorder %v4812, %v234
        %vm4867 = vcmp.eq.s32.totalorder %v4815, %v231
        %vm4868 = vcmp.eq.s32.totalorder %v4815, %v232
        %vm4869 = vcmp.eq.s32.totalorder %v4815, %v233
        %vm4870 = vcmp.eq.s32.totalorder %v4815, %v234
        %vm4871 = vcmp.eq.s32.totalorder %v4818, %v231
        %vm4872 = vcmp.eq.s32.totalorder %v4818, %v232
        %vm4873 = vcmp.eq.s32.totalorder %v4818, %v233
        %vm4874 = vcmp.eq.s32.totalorder %v4818, %v234
        %vm4875 = vcmp.eq.s32.totalorder %v4821, %v231
        %vm4876 = vcmp.eq.s32.totalorder %v4821, %v232
        %vm4877 = vcmp.eq.s32.totalorder %v4821, %v233
        %vm4878 = vcmp.eq.s32.totalorder %v4821, %v234
        %vm4879 = vcmp.eq.s32.totalorder %v4824, %v231
        %vm4880 = vcmp.eq.s32.totalorder %v4824, %v232
        %vm4881 = vcmp.eq.s32.totalorder %v4824, %v233
        %vm4882 = vcmp.eq.s32.totalorder %v4824, %v234
        %vm4883 = vcmp.eq.s32.totalorder %v4827, %v231
        %vm4884 = vcmp.eq.s32.totalorder %v4827, %v232
        %vm4885 = vcmp.eq.s32.totalorder %v4827, %v233
        %vm4886 = vcmp.eq.s32.totalorder %v4827, %v234
        %vm4887 = vcmp.eq.s32.totalorder %v4830, %v231
        %vm4888 = vcmp.eq.s32.totalorder %v4830, %v232
        %vm4889 = vcmp.eq.s32.totalorder %v4830, %v233
        %vm4890 = vcmp.eq.s32.totalorder %v4830, %v234
        %vm4891 = vcmp.eq.s32.totalorder %v4833, %v231
        %vm4892 = vcmp.eq.s32.totalorder %v4833, %v232
        %vm4893 = vcmp.eq.s32.totalorder %v4833, %v233
        %vm4894 = vcmp.eq.s32.totalorder %v4833, %v234
        %vm4895 = vcmp.eq.s32.totalorder %v4836, %v231
        %vm4896 = vcmp.eq.s32.totalorder %v4836, %v232
        %vm4897 = vcmp.eq.s32.totalorder %v4836, %v233
        %vm4898 = vcmp.eq.s32.totalorder %v4836, %v234
        %vm4899 = vcmp.eq.s32.totalorder %v4839, %v231
        %vm4900 = vcmp.eq.s32.totalorder %v4839, %v232
        %vm4901 = vcmp.eq.s32.totalorder %v4839, %v233
        %vm4902 = vcmp.eq.s32.totalorder %v4839, %v234
        %vm4903 = vcmp.eq.s32.totalorder %v4842, %v231
        %vm4904 = vcmp.eq.s32.totalorder %v4842, %v232
        %vm4905 = vcmp.eq.s32.totalorder %v4842, %v233
        %vm4906 = vcmp.eq.s32.totalorder %v4842, %v234
        %v4907 = vsel %vm4843, 1, 0
        %v4908 = vsel %vm4844, 1, 0
        %v4909 = vsel %vm4845, 1, 0
        %v4910 = vsel %vm4846, 1, 0
        %v4911 = vsel %vm4847, 1, 0
        %v4912 = vsel %vm4848, 1, 0
        %v4913 = vsel %vm4849, 1, 0
        %v4914 = vsel %vm4850, 1, 0
        %v4915 = vsel %vm4851, 1, 0
        %v4916 = vsel %vm4852, 1, 0
        %v4917 = vsel %vm4853, 1, 0
        %v4918 = vsel %vm4854, 1, 0
        %v4919 = vsel %vm4855, 1, 0
        %v4920 = vsel %vm4856, 1, 0
        %v4921 = vsel %vm4857, 1, 0
        %v4922 = vsel %vm4858, 1, 0
        %v4923 = vsel %vm4859, 1, 0
        %v4924 = vsel %vm4860, 1, 0
        %v4925 = vsel %vm4861, 1, 0
        %v4926 = vsel %vm4862, 1, 0
        %v4927 = vsel %vm4863, 1, 0
        %v4928 = vsel %vm4864, 1, 0
        %v4929 = vsel %vm4865, 1, 0
        %v4930 = vsel %vm4866, 1, 0
        %v4931 = vsel %vm4867, 1, 0
        %v4932 = vsel %vm4868, 1, 0
        %v4933 = vsel %vm4869, 1, 0
        %v4934 = vsel %vm4870, 1, 0
        %v4935 = vsel %vm4871, 1, 0
        %v4936 = vsel %vm4872, 1, 0
        %v4937 = vsel %vm4873, 1, 0
        %v4938 = vsel %vm4874, 1, 0
        %v4939 = vsel %vm4875, 1, 0
        %v4940 = vsel %vm4876, 1, 0
        %v4941 = vsel %vm4877, 1, 0
        %v4942 = vsel %vm4878, 1, 0
        %v4943 = vsel %vm4879, 1, 0
        %v4944 = vsel %vm4880, 1, 0
        %v4945 = vsel %vm4881, 1, 0
        %v4946 = vsel %vm4882, 1, 0
        %v4947 = vsel %vm4883, 1, 0
        %v4948 = vsel %vm4884, 1, 0
        %v4949 = vsel %vm4885, 1, 0
        %v4950 = vsel %vm4886, 1, 0
        %v4951 = vsel %vm4887, 1, 0
        %v4952 = vsel %vm4888, 1, 0
        %v4953 = vsel %vm4889, 1, 0
        %v4954 = vsel %vm4890, 1, 0
        %v4955 = vsel %vm4891, 1, 0
        %v4956 = vsel %vm4892, 1, 0
        %v4957 = vsel %vm4893, 1, 0
        %v4958 = vsel %vm4894, 1, 0
        %v4959 = vsel %vm4895, 1, 0
        %v4960 = vsel %vm4896, 1, 0
        %v4961 = vsel %vm4897, 1, 0
        %v4962 = vsel %vm4898, 1, 0
        %v4963 = vsel %vm4899, 1, 0
        %v4964 = vsel %vm4900, 1, 0
        %v4965 = vsel %vm4901, 1, 0
        %v4966 = vsel %vm4902, 1, 0
        %v4967 = vsel %vm4903, 1, 0
        %v4968 = vsel %vm4904, 1, 0
        %v4969 = vsel %vm4905, 1, 0
        %v4970 = vsel %vm4906, 1, 0
        %v4971 = vcvt.s32.f32 %v4907
        %v4972 = vcvt.s32.f32 %v4908
        %v4973 = vcvt.s32.f32 %v4909
        %v4974 = vcvt.s32.f32 %v4910
        %v4975 = vcvt.s32.f32 %v4911
        %v4976 = vcvt.s32.f32 %v4912
        %v4977 = vcvt.s32.f32 %v4913
        %v4978 = vcvt.s32.f32 %v4914
        %v4979 = vcvt.s32.f32 %v4915
        %v4980 = vcvt.s32.f32 %v4916
        %v4981 = vcvt.s32.f32 %v4917
        %v4982 = vcvt.s32.f32 %v4918
        %v4983 = vcvt.s32.f32 %v4919
        %v4984 = vcvt.s32.f32 %v4920
        %v4985 = vcvt.s32.f32 %v4921
        %v4986 = vcvt.s32.f32 %v4922
        %v4987 = vcvt.s32.f32 %v4923
        %v4988 = vcvt.s32.f32 %v4924
        %v4989 = vcvt.s32.f32 %v4925
        %v4990 = vcvt.s32.f32 %v4926
        %v4991 = vcvt.s32.f32 %v4927
        %v4992 = vcvt.s32.f32 %v4928
        %v4993 = vcvt.s32.f32 %v4929
        %v4994 = vcvt.s32.f32 %v4930
        %v4995 = vcvt.s32.f32 %v4931
        %v4996 = vcvt.s32.f32 %v4932
        %v4997 = vcvt.s32.f32 %v4933
        %v4998 = vcvt.s32.f32 %v4934
        %v4999 = vcvt.s32.f32 %v4935
        %v5000 = vcvt.s32.f32 %v4936
        %v5001 = vcvt.s32.f32 %v4937
        %v5002 = vcvt.s32.f32 %v4938
        %v5003 = vcvt.s32.f32 %v4939
        %v5004 = vcvt.s32.f32 %v4940
        %v5005 = vcvt.s32.f32 %v4941
        %v5006 = vcvt.s32.f32 %v4942
        %v5007 = vcvt.s32.f32 %v4943
        %v5008 = vcvt.s32.f32 %v4944
        %v5009 = vcvt.s32.f32 %v4945
        %v5010 = vcvt.s32.f32 %v4946
        %v5011 = vcvt.s32.f32 %v4947
        %v5012 = vcvt.s32.f32 %v4948
        %v5013 = vcvt.s32.f32 %v4949
        %v5014 = vcvt.s32.f32 %v4950
        %v5015 = vcvt.s32.f32 %v4951
        %v5016 = vcvt.s32.f32 %v4952
        %v5017 = vcvt.s32.f32 %v4953
        %v5018 = vcvt.s32.f32 %v4954
        %v5019 = vcvt.s32.f32 %v4955
        %v5020 = vcvt.s32.f32 %v4956
        %v5021 = vcvt.s32.f32 %v4957
        %v5022 = vcvt.s32.f32 %v4958
        %v5023 = vcvt.s32.f32 %v4959
        %v5024 = vcvt.s32.f32 %v4960
        %v5025 = vcvt.s32.f32 %v4961
        %v5026 = vcvt.s32.f32 %v4962
        %v5027 = vcvt.s32.f32 %v4963
        %v5028 = vcvt.s32.f32 %v4964
        %v5029 = vcvt.s32.f32 %v4965
        %v5030 = vcvt.s32.f32 %v4966
        %v5031 = vcvt.s32.f32 %v4967
        %v5032 = vcvt.s32.f32 %v4968
        %v5033 = vcvt.s32.f32 %v4969
        %v5034 = vcvt.s32.f32 %v4970
        %v5035 = vadd.f32 %v4731, %v4971
        %v5036 = vadd.f32 %v4732, %v4972
        %v5037 = vadd.f32 %v4733, %v4973
        %v5038 = vadd.f32 %v4734, %v4974
        %v5039 = vadd.f32 %v4735, %v4975
        %v5040 = vadd.f32 %v4736, %v4976
        %v5041 = vadd.f32 %v4737, %v4977
        %v5042 = vadd.f32 %v4738, %v4978
        %v5043 = vadd.f32 %v4739, %v4979
        %v5044 = vadd.f32 %v4740, %v4980
        %v5045 = vadd.f32 %v4741, %v4981
        %v5046 = vadd.f32 %v4742, %v4982
        %v5047 = vadd.f32 %v4743, %v4983
        %v5048 = vadd.f32 %v4744, %v4984
        %v5049 = vadd.f32 %v4745, %v4985
        %v5050 = vadd.f32 %v4746, %v4986
        %v5051 = vadd.f32 %v4747, %v4987
        %v5052 = vadd.f32 %v4748, %v4988
        %v5053 = vadd.f32 %v4749, %v4989
        %v5054 = vadd.f32 %v4750, %v4990
        %v5055 = vadd.f32 %v4751, %v4991
        %v5056 = vadd.f32 %v4752, %v4992
        %v5057 = vadd.f32 %v4753, %v4993
        %v5058 = vadd.f32 %v4754, %v4994
        %v5059 = vadd.f32 %v4755, %v4995
        %v5060 = vadd.f32 %v4756, %v4996
        %v5061 = vadd.f32 %v4757, %v4997
        %v5062 = vadd.f32 %v4758, %v4998
        %v5063 = vadd.f32 %v4759, %v4999
        %v5064 = vadd.f32 %v4760, %v5000
        %v5065 = vadd.f32 %v4761, %v5001
        %v5066 = vadd.f32 %v4762, %v5002
        %v5067 = vadd.f32 %v4763, %v5003
        %v5068 = vadd.f32 %v4764, %v5004
        %v5069 = vadd.f32 %v4765, %v5005
        %v5070 = vadd.f32 %v4766, %v5006
        %v5071 = vadd.f32 %v4767, %v5007
        %v5072 = vadd.f32 %v4768, %v5008
        %v5073 = vadd.f32 %v4769, %v5009
        %v5074 = vadd.f32 %v4770, %v5010
        %v5075 = vadd.f32 %v4771, %v5011
        %v5076 = vadd.f32 %v4772, %v5012
        %v5077 = vadd.f32 %v4773, %v5013
        %v5078 = vadd.f32 %v4774, %v5014
        %v5079 = vadd.f32 %v4775, %v5015
        %v5080 = vadd.f32 %v4776, %v5016
        %v5081 = vadd.f32 %v4777, %v5017
        %v5082 = vadd.f32 %v4778, %v5018
        %v5083 = vadd.f32 %v4779, %v5019
        %v5084 = vadd.f32 %v4780, %v5020
        %v5085 = vadd.f32 %v4781, %v5021
        %v5086 = vadd.f32 %v4782, %v5022
        %v5087 = vadd.f32 %v4783, %v5023
        %v5088 = vadd.f32 %v4784, %v5024
        %v5089 = vadd.f32 %v4785, %v5025
        %v5090 = vadd.f32 %v4786, %v5026
        %v5091 = vadd.f32 %v4787, %v5027
        %v5092 = vadd.f32 %v4788, %v5028
        %v5093 = vadd.f32 %v4789, %v5029
        %v5094 = vadd.f32 %v4790, %v5030
        %v5095 = vadd.f32 %v4791, %v5031
        %v5096 = vadd.f32 %v4792, %v5032
        %v5097 = vadd.f32 %v4793, %v5033
        %v5098 = vadd.f32 %v4794, %v5034
        %v5099 = vld [vmem:[#allocation2] sm:$0xff]
        %v5100 = vld [vmem:[#allocation2 + $0x8] sm:$0xff]
        %v5101 = vld [vmem:[#allocation2 + $0x10] sm:$0xff]
        %v5102 = vld [vmem:[#allocation2 + $0x18] sm:$0xff]
        %v5103 = vld [vmem:[#allocation2 + $0x20] sm:$0xff]
        %v5104 = vld [vmem:[#allocation2 + $0x28] sm:$0xff]
        %v5105 = vld [vmem:[#allocation2 + $0x30] sm:$0xff]
        %v5106 = vld [vmem:[#allocation2 + $0x38] sm:$0xff]
        %v5107 = vld [vmem:[#allocation2 + $0x40] sm:$0xff]
        %v5108 = vld [vmem:[#allocation2 + $0x48] sm:$0xff]
        %v5109 = vld [vmem:[#allocation2 + $0x50] sm:$0xff]
        %v5110 = vld [vmem:[#allocation2 + $0x58] sm:$0xff]
        %v5111 = vld [vmem:[#allocation2 + $0x60] sm:$0xff]
        %v5112 = vld [vmem:[#allocation2 + $0x68] sm:$0xff]
        %v5113 = vld [vmem:[#allocation2 + $0x70] sm:$0xff]
        %v5114 = vld [vmem:[#allocation2 + $0x78] sm:$0xff]
        %v5115 = vld [vmem:[#allocation2 + $0x80] sm:$0xff]
        %v5116 = vld [vmem:[#allocation2 + $0x88] sm:$0xff]
        %v5117 = vld [vmem:[#allocation2 + $0x90] sm:$0xff]
        %v5118 = vld [vmem:[#allocation2 + $0x98] sm:$0xff]
        %v5119 = vld [vmem:[#allocation2 + $0xa0] sm:$0xff]
        %v5120 = vld [vmem:[#allocation2 + $0xa8] sm:$0xff]
        %v5121 = vld [vmem:[#allocation2 + $0xb0] sm:$0xff]
        %v5122 = vld [vmem:[#allocation2 + $0xb8] sm:$0xff]
        %v5123 = vld [vmem:[#allocation2 + $0xc0] sm:$0xff]
        %v5124 = vld [vmem:[#allocation2 + $0xc8] sm:$0xff]
        %v5125 = vld [vmem:[#allocation2 + $0xd0] sm:$0xff]
        %v5126 = vld [vmem:[#allocation2 + $0xd8] sm:$0xff]
        %v5127 = vld [vmem:[#allocation2 + $0xe0] sm:$0xff]
        %v5128 = vld [vmem:[#allocation2 + $0xe8] sm:$0xff]
        %v5129 = vld [vmem:[#allocation2 + $0xf0] sm:$0xff]
        %v5130 = vld [vmem:[#allocation2 + $0xf8] sm:$0xff]
        %v5131 = vld [vmem:[#allocation2 + $0x100] sm:$0xff]
        %v5132 = vld [vmem:[#allocation2 + $0x108] sm:$0xff]
        %v5133 = vld [vmem:[#allocation2 + $0x110] sm:$0xff]
        %v5134 = vld [vmem:[#allocation2 + $0x118] sm:$0xff]
        %v5135 = vld [vmem:[#allocation2 + $0x120] sm:$0xff]
        %v5136 = vld [vmem:[#allocation2 + $0x128] sm:$0xff]
        %v5137 = vld [vmem:[#allocation2 + $0x130] sm:$0xff]
        %v5138 = vld [vmem:[#allocation2 + $0x138] sm:$0xff]
        %v5139 = vld [vmem:[#allocation2 + $0x140] sm:$0xff]
        %v5140 = vld [vmem:[#allocation2 + $0x148] sm:$0xff]
        %v5141 = vld [vmem:[#allocation2 + $0x150] sm:$0xff]
        %v5142 = vld [vmem:[#allocation2 + $0x158] sm:$0xff]
        %v5143 = vld [vmem:[#allocation2 + $0x160] sm:$0xff]
        %v5144 = vld [vmem:[#allocation2 + $0x168] sm:$0xff]
        %v5145 = vld [vmem:[#allocation2 + $0x170] sm:$0xff]
        %v5146 = vld [vmem:[#allocation2 + $0x178] sm:$0xff]
        %v5147 = vld [vmem:[#allocation2 + $0x180] sm:$0xff]
        %v5148 = vld [vmem:[#allocation2 + $0x188] sm:$0xff]
        %v5149 = vld [vmem:[#allocation2 + $0x190] sm:$0xff]
        %v5150 = vld [vmem:[#allocation2 + $0x198] sm:$0xff]
        %v5151 = vld [vmem:[#allocation2 + $0x1a0] sm:$0xff]
        %v5152 = vld [vmem:[#allocation2 + $0x1a8] sm:$0xff]
        %v5153 = vld [vmem:[#allocation2 + $0x1b0] sm:$0xff]
        %v5154 = vld [vmem:[#allocation2 + $0x1b8] sm:$0xff]
        %v5155 = vld [vmem:[#allocation2 + $0x1c0] sm:$0xff]
        %v5156 = vld [vmem:[#allocation2 + $0x1c8] sm:$0xff]
        %v5157 = vld [vmem:[#allocation2 + $0x1d0] sm:$0xff]
        %v5158 = vld [vmem:[#allocation2 + $0x1d8] sm:$0xff]
        %v5159 = vld [vmem:[#allocation2 + $0x1e0] sm:$0xff]
        %v5160 = vld [vmem:[#allocation2 + $0x1e8] sm:$0xff]
        %v5161 = vld [vmem:[#allocation2 + $0x1f0] sm:$0xff]
        %v5162 = vld [vmem:[#allocation2 + $0x1f8] sm:$0xff]
        %5163 = vmatprep.subr.mxu0 0.0
        %5164 = vmatpush1.msra.mxu0 %v5114
        %5165 = vmatprep.subr.mxu0 0.0
        %5166 = vmatpush1.msra.mxu0 %v5113
        %5167 = vmatprep.subr.mxu0 0.0
        %5168 = vmatpush1.msra.mxu0 %v5112
        %5169 = vmatprep.subr.mxu0 0.0
        %5170 = vmatpush1.msra.mxu0 %v5111
        %5171 = vmatprep.subr.mxu0 0.0
        %5172 = vmatpush1.msra.mxu0 %v5110
        %5173 = vmatprep.subr.mxu0 0.0
        %5174 = vmatpush1.msra.mxu0 %v5109
        %5175 = vmatprep.subr.mxu0 0.0
        %5176 = vmatpush1.msra.mxu0 %v5108
        %5177 = vmatprep.subr.mxu0 0.0
        %5178 = vmatpush1.msra.mxu0 %v5107
        %5179 = vmatprep.subr.mxu0 0.0
        %5180 = vmatpush1.msra.mxu0 %v5106
        %5181 = vmatprep.subr.mxu0 0.0
        %5182 = vmatpush1.msra.mxu0 %v5105
        %5183 = vmatprep.subr.mxu0 0.0
        %5184 = vmatpush1.msra.mxu0 %v5104
        %5185 = vmatprep.subr.mxu0 0.0
        %5186 = vmatpush1.msra.mxu0 %v5103
        %5187 = vmatprep.subr.mxu0 0.0
        %5188 = vmatpush1.msra.mxu0 %v5102
        %5189 = vmatprep.subr.mxu0 0.0
        %5190 = vmatpush1.msra.mxu0 %v5101
        %5191 = vmatprep.subr.mxu0 0.0
        %5192 = vmatpush1.msra.mxu0 %v5100
        %5193 = vmatprep.subr.mxu0 0.0
        %5194 = vmatpush1.msra.mxu0 %v5099
        %5195 = vmatprep.subr.mxu0 0.0
        %5196 = vmatpush2.msra.mxu0 %v5130
        %5197 = vmatprep.subr.mxu0 0.0
        %5198 = vmatpush2.msra.mxu0 %v5129
        %5199 = vmatprep.subr.mxu0 0.0
        %5200 = vmatpush2.msra.mxu0 %v5128
        %5201 = vmatprep.subr.mxu0 0.0
        %5202 = vmatpush2.msra.mxu0 %v5127
        %5203 = vmatprep.subr.mxu0 0.0
        %5204 = vmatpush2.msra.mxu0 %v5126
        %5205 = vmatprep.subr.mxu0 0.0
        %5206 = vmatpush2.msra.mxu0 %v5125
        %5207 = vmatprep.subr.mxu0 0.0
        %5208 = vmatpush2.msra.mxu0 %v5124
        %5209 = vmatprep.subr.mxu0 0.0
        %5210 = vmatpush2.msra.mxu0 %v5123
        %5211 = vmatprep.subr.mxu0 0.0
        %5212 = vmatpush2.msra.mxu0 %v5122
        %5213 = vmatprep.subr.mxu0 0.0
        %5214 = vmatpush2.msra.mxu0 %v5121
        %5215 = vmatprep.subr.mxu0 0.0
        %5216 = vmatpush2.msra.mxu0 %v5120
        %5217 = vmatprep.subr.mxu0 0.0
        %5218 = vmatpush2.msra.mxu0 %v5119
        %5219 = vmatprep.subr.mxu0 0.0
        %5220 = vmatpush2.msra.mxu0 %v5118
        %5221 = vmatprep.subr.mxu0 0.0
        %5222 = vmatpush2.msra.mxu0 %v5117
        %5223 = vmatprep.subr.mxu0 0.0
        %5224 = vmatpush2.msra.mxu0 %v5116
        %5225 = vmatprep.subr.mxu0 0.0
        %5226 = vmatpush2.msra.mxu0 %v5115
        %5227 = vmatprep.mubr.f32.mxu0 %v5036
        %5228 = vmatmul.mubr.f32.gmra.mxu0 %v5035
        %v5229 = vpop.f32.mrf.mxu0
        %v5230 = vadd.f32 0.0, %v5229
        %v5231 = vpop.f32.mrf.mxu0
        %5232 = vmatprep.mubr.f32.mxu0 %v5040
        %5233 = vmatmul.mubr.f32.gmra.mxu0 %v5039
        %v5234 = vpop.f32.mrf.mxu0
        %v5235 = vadd.f32 0.0, %v5234
        %v5236 = vpop.f32.mrf.mxu0
        %5237 = vmatprep.mubr.f32.mxu0 %v5044
        %5238 = vmatmul.mubr.f32.gmra.mxu0 %v5043
        %v5239 = vpop.f32.mrf.mxu0
        %v5240 = vadd.f32 0.0, %v5239
        %v5241 = vpop.f32.mrf.mxu0
        %5242 = vmatprep.mubr.f32.mxu0 %v5048
        %5243 = vmatmul.mubr.f32.gmra.mxu0 %v5047
        %v5244 = vpop.f32.mrf.mxu0
        %v5245 = vadd.f32 0.0, %v5244
        %v5246 = vpop.f32.mrf.mxu0
        %5247 = vmatprep.mubr.f32.mxu0 %v5052
        %5248 = vmatmul.mubr.f32.gmra.mxu0 %v5051
        %v5249 = vpop.f32.mrf.mxu0
        %v5250 = vadd.f32 0.0, %v5249
        %v5251 = vpop.f32.mrf.mxu0
        %5252 = vmatprep.mubr.f32.mxu0 %v5056
        %5253 = vmatmul.mubr.f32.gmra.mxu0 %v5055
        %v5254 = vpop.f32.mrf.mxu0
        %v5255 = vadd.f32 0.0, %v5254
        %v5256 = vpop.f32.mrf.mxu0
        %5257 = vmatprep.mubr.f32.mxu0 %v5060
        %5258 = vmatmul.mubr.f32.gmra.mxu0 %v5059
        %v5259 = vpop.f32.mrf.mxu0
        %v5260 = vadd.f32 0.0, %v5259
        %v5261 = vpop.f32.mrf.mxu0
        %5262 = vmatprep.mubr.f32.mxu0 %v5064
        %5263 = vmatmul.mubr.f32.gmra.mxu0 %v5063
        %v5264 = vpop.f32.mrf.mxu0
        %v5265 = vadd.f32 0.0, %v5264
        %v5266 = vpop.f32.mrf.mxu0
        %5267 = vmatprep.mubr.f32.mxu0 %v5068
        %5268 = vmatmul.mubr.f32.gmra.mxu0 %v5067
        %v5269 = vpop.f32.mrf.mxu0
        %v5270 = vadd.f32 0.0, %v5269
        %v5271 = vpop.f32.mrf.mxu0
        %5272 = vmatprep.mubr.f32.mxu0 %v5072
        %5273 = vmatmul.mubr.f32.gmra.mxu0 %v5071
        %v5274 = vpop.f32.mrf.mxu0
        %v5275 = vadd.f32 0.0, %v5274
        %v5276 = vpop.f32.mrf.mxu0
        %5277 = vmatprep.mubr.f32.mxu0 %v5076
        %5278 = vmatmul.mubr.f32.gmra.mxu0 %v5075
        %v5279 = vpop.f32.mrf.mxu0
        %v5280 = vadd.f32 0.0, %v5279
        %v5281 = vpop.f32.mrf.mxu0
        %5282 = vmatprep.mubr.f32.mxu0 %v5080
        %5283 = vmatmul.mubr.f32.gmra.mxu0 %v5079
        %v5284 = vpop.f32.mrf.mxu0
        %v5285 = vadd.f32 0.0, %v5284
        %v5286 = vpop.f32.mrf.mxu0
        %5287 = vmatprep.mubr.f32.mxu0 %v5084
        %5288 = vmatmul.mubr.f32.gmra.mxu0 %v5083
        %v5289 = vpop.f32.mrf.mxu0
        %v5290 = vadd.f32 0.0, %v5289
        %v5291 = vpop.f32.mrf.mxu0
        %5292 = vmatprep.mubr.f32.mxu0 %v5088
        %5293 = vmatmul.mubr.f32.gmra.mxu0 %v5087
        %v5294 = vpop.f32.mrf.mxu0
        %v5295 = vadd.f32 0.0, %v5294
        %v5296 = vpop.f32.mrf.mxu0
        %5297 = vmatprep.mubr.f32.mxu0 %v5092
        %5298 = vmatmul.mubr.f32.gmra.mxu0 %v5091
        %v5299 = vpop.f32.mrf.mxu0
        %v5300 = vadd.f32 0.0, %v5299
        %v5301 = vpop.f32.mrf.mxu0
        %5302 = vmatprep.mubr.f32.mxu0 %v5096
        %5303 = vmatmul.mubr.f32.gmra.mxu0 %v5095
        %v5304 = vpop.f32.mrf.mxu0
        %v5305 = vadd.f32 0.0, %v5304
        %v5306 = vpop.f32.mrf.mxu0
        %5307 = vdwg.mxu0
        %5308 = vmatprep.subr.mxu0 0.0
        %5309 = vmatpush1.msra.mxu0 %v5146
        %5310 = vmatprep.subr.mxu0 0.0
        %5311 = vmatpush1.msra.mxu0 %v5145
        %5312 = vmatprep.subr.mxu0 0.0
        %5313 = vmatpush1.msra.mxu0 %v5144
        %5314 = vmatprep.subr.mxu0 0.0
        %5315 = vmatpush1.msra.mxu0 %v5143
        %5316 = vmatprep.subr.mxu0 0.0
        %5317 = vmatpush1.msra.mxu0 %v5142
        %5318 = vmatprep.subr.mxu0 0.0
        %5319 = vmatpush1.msra.mxu0 %v5141
        %5320 = vmatprep.subr.mxu0 0.0
        %5321 = vmatpush1.msra.mxu0 %v5140
        %5322 = vmatprep.subr.mxu0 0.0
        %5323 = vmatpush1.msra.mxu0 %v5139
        %5324 = vmatprep.subr.mxu0 0.0
        %5325 = vmatpush1.msra.mxu0 %v5138
        %5326 = vmatprep.subr.mxu0 0.0
        %5327 = vmatpush1.msra.mxu0 %v5137
        %5328 = vmatprep.subr.mxu0 0.0
        %5329 = vmatpush1.msra.mxu0 %v5136
        %5330 = vmatprep.subr.mxu0 0.0
        %5331 = vmatpush1.msra.mxu0 %v5135
        %5332 = vmatprep.subr.mxu0 0.0
        %5333 = vmatpush1.msra.mxu0 %v5134
        %5334 = vmatprep.subr.mxu0 0.0
        %5335 = vmatpush1.msra.mxu0 %v5133
        %5336 = vmatprep.subr.mxu0 0.0
        %5337 = vmatpush1.msra.mxu0 %v5132
        %5338 = vmatprep.subr.mxu0 0.0
        %5339 = vmatpush1.msra.mxu0 %v5131
        %5340 = vmatprep.subr.mxu0 0.0
        %5341 = vmatpush2.msra.mxu0 %v5162
        %5342 = vmatprep.subr.mxu0 0.0
        %5343 = vmatpush2.msra.mxu0 %v5161
        %5344 = vmatprep.subr.mxu0 0.0
        %5345 = vmatpush2.msra.mxu0 %v5160
        %5346 = vmatprep.subr.mxu0 0.0
        %5347 = vmatpush2.msra.mxu0 %v5159
        %5348 = vmatprep.subr.mxu0 0.0
        %5349 = vmatpush2.msra.mxu0 %v5158
        %5350 = vmatprep.subr.mxu0 0.0
        %5351 = vmatpush2.msra.mxu0 %v5157
        %5352 = vmatprep.subr.mxu0 0.0
        %5353 = vmatpush2.msra.mxu0 %v5156
        %5354 = vmatprep.subr.mxu0 0.0
        %5355 = vmatpush2.msra.mxu0 %v5155
        %5356 = vmatprep.subr.mxu0 0.0
        %5357 = vmatpush2.msra.mxu0 %v5154
        %5358 = vmatprep.subr.mxu0 0.0
        %5359 = vmatpush2.msra.mxu0 %v5153
        %5360 = vmatprep.subr.mxu0 0.0
        %5361 = vmatpush2.msra.mxu0 %v5152
        %5362 = vmatprep.subr.mxu0 0.0
        %5363 = vmatpush2.msra.mxu0 %v5151
        %5364 = vmatprep.subr.mxu0 0.0
        %5365 = vmatpush2.msra.mxu0 %v5150
        %5366 = vmatprep.subr.mxu0 0.0
        %5367 = vmatpush2.msra.mxu0 %v5149
        %5368 = vmatprep.subr.mxu0 0.0
        %5369 = vmatpush2.msra.mxu0 %v5148
        %5370 = vmatprep.subr.mxu0 0.0
        %5371 = vmatpush2.msra.mxu0 %v5147
        %5372 = vmatprep.mubr.f32.mxu0 %v5038
        %5373 = vmatmul.mubr.f32.gmra.mxu0 %v5037
        %v5374 = vpop.f32.mrf.mxu0
        %v5375 = vadd.f32 %v5230, %v5374
        %v5376 = vpop.f32.mrf.mxu0
        %5377 = vmatprep.mubr.f32.mxu0 %v5042
        %5378 = vmatmul.mubr.f32.gmra.mxu0 %v5041
        %v5379 = vpop.f32.mrf.mxu0
        %v5380 = vadd.f32 %v5235, %v5379
        %v5381 = vpop.f32.mrf.mxu0
        %5382 = vmatprep.mubr.f32.mxu0 %v5046
        %5383 = vmatmul.mubr.f32.gmra.mxu0 %v5045
        %v5384 = vpop.f32.mrf.mxu0
        %v5385 = vadd.f32 %v5240, %v5384
        %v5386 = vpop.f32.mrf.mxu0
        %5387 = vmatprep.mubr.f32.mxu0 %v5050
        %5388 = vmatmul.mubr.f32.gmra.mxu0 %v5049
        %v5389 = vpop.f32.mrf.mxu0
        %v5390 = vadd.f32 %v5245, %v5389
        %v5391 = vpop.f32.mrf.mxu0
        %5392 = vmatprep.mubr.f32.mxu0 %v5054
        %5393 = vmatmul.mubr.f32.gmra.mxu0 %v5053
        %v5394 = vpop.f32.mrf.mxu0
        %v5395 = vadd.f32 %v5250, %v5394
        %v5396 = vpop.f32.mrf.mxu0
        %5397 = vmatprep.mubr.f32.mxu0 %v5058
        %5398 = vmatmul.mubr.f32.gmra.mxu0 %v5057
        %v5399 = vpop.f32.mrf.mxu0
        %v5400 = vadd.f32 %v5255, %v5399
        %v5401 = vpop.f32.mrf.mxu0
        %5402 = vmatprep.mubr.f32.mxu0 %v5062
        %5403 = vmatmul.mubr.f32.gmra.mxu0 %v5061
        %v5404 = vpop.f32.mrf.mxu0
        %v5405 = vadd.f32 %v5260, %v5404
        %v5406 = vpop.f32.mrf.mxu0
        %5407 = vmatprep.mubr.f32.mxu0 %v5066
        %5408 = vmatmul.mubr.f32.gmra.mxu0 %v5065
        %v5409 = vpop.f32.mrf.mxu0
        %v5410 = vadd.f32 %v5265, %v5409
        %v5411 = vpop.f32.mrf.mxu0
        %5412 = vmatprep.mubr.f32.mxu0 %v5070
        %5413 = vmatmul.mubr.f32.gmra.mxu0 %v5069
        %v5414 = vpop.f32.mrf.mxu0
        %v5415 = vadd.f32 %v5270, %v5414
        %v5416 = vpop.f32.mrf.mxu0
        %5417 = vmatprep.mubr.f32.mxu0 %v5074
        %5418 = vmatmul.mubr.f32.gmra.mxu0 %v5073
        %v5419 = vpop.f32.mrf.mxu0
        %v5420 = vadd.f32 %v5275, %v5419
        %v5421 = vpop.f32.mrf.mxu0
        %5422 = vmatprep.mubr.f32.mxu0 %v5078
        %5423 = vmatmul.mubr.f32.gmra.mxu0 %v5077
        %v5424 = vpop.f32.mrf.mxu0
        %v5425 = vadd.f32 %v5280, %v5424
        %v5426 = vpop.f32.mrf.mxu0
        %5427 = vmatprep.mubr.f32.mxu0 %v5082
        %5428 = vmatmul.mubr.f32.gmra.mxu0 %v5081
        %v5429 = vpop.f32.mrf.mxu0
        %v5430 = vadd.f32 %v5285, %v5429
        %v5431 = vpop.f32.mrf.mxu0
        %5432 = vmatprep.mubr.f32.mxu0 %v5086
        %5433 = vmatmul.mubr.f32.gmra.mxu0 %v5085
        %v5434 = vpop.f32.mrf.mxu0
        %v5435 = vadd.f32 %v5290, %v5434
        %v5436 = vpop.f32.mrf.mxu0
        %5437 = vmatprep.mubr.f32.mxu0 %v5090
        %5438 = vmatmul.mubr.f32.gmra.mxu0 %v5089
        %v5439 = vpop.f32.mrf.mxu0
        %v5440 = vadd.f32 %v5295, %v5439
        %v5441 = vpop.f32.mrf.mxu0
        %5442 = vmatprep.mubr.f32.mxu0 %v5094
        %5443 = vmatmul.mubr.f32.gmra.mxu0 %v5093
        %v5444 = vpop.f32.mrf.mxu0
        %v5445 = vadd.f32 %v5300, %v5444
        %v5446 = vpop.f32.mrf.mxu0
        %5447 = vmatprep.mubr.f32.mxu0 %v5098
        %5448 = vmatmul.mubr.f32.gmra.mxu0 %v5097
        %v5449 = vpop.f32.mrf.mxu0
        %v5450 = vadd.f32 %v5305, %v5449
        %v5451 = vpop.f32.mrf.mxu0
        %5452 = vdwg.mxu0
        %v5453 = vmul.f32 %v5375, 0.0625
        %v5454 = vmul.f32 %v5380, 0.0625
        %v5455 = vmul.f32 %v5385, 0.0625
        %v5456 = vmul.f32 %v5390, 0.0625
        %v5457 = vmul.f32 %v5395, 0.0625
        %v5458 = vmul.f32 %v5400, 0.0625
        %v5459 = vmul.f32 %v5405, 0.0625
        %v5460 = vmul.f32 %v5410, 0.0625
        %v5461 = vmul.f32 %v5415, 0.0625
        %v5462 = vmul.f32 %v5420, 0.0625
        %v5463 = vmul.f32 %v5425, 0.0625
        %v5464 = vmul.f32 %v5430, 0.0625
        %v5465 = vmul.f32 %v5435, 0.0625
        %v5466 = vmul.f32 %v5440, 0.0625
        %v5467 = vmul.f32 %v5445, 0.0625
        %v5468 = vmul.f32 %v5450, 0.0625
        %v5469 = vld [vmem:[%s2] sm:$0xff]
        %v5470 = vld [vmem:[%s2 + $0x8] sm:$0xff]
        %v5471 = vld [vmem:[%s2 + $0x10] sm:$0xff]
        %v5472 = vld [vmem:[%s2 + $0x18] sm:$0xff]
        %v5473 = vld [vmem:[%s2 + $0x20] sm:$0xff]
        %v5474 = vld [vmem:[%s2 + $0x28] sm:$0xff]
        %v5475 = vld [vmem:[%s2 + $0x30] sm:$0xff]
        %v5476 = vld [vmem:[%s2 + $0x38] sm:$0xff]
        %v5477 = vld [vmem:[%s2 + $0x40] sm:$0xff]
        %v5478 = vld [vmem:[%s2 + $0x48] sm:$0xff]
        %v5479 = vld [vmem:[%s2 + $0x50] sm:$0xff]
        %v5480 = vld [vmem:[%s2 + $0x58] sm:$0xff]
        %v5481 = vld [vmem:[%s2 + $0x60] sm:$0xff]
        %v5482 = vld [vmem:[%s2 + $0x68] sm:$0xff]
        %v5483 = vld [vmem:[%s2 + $0x70] sm:$0xff]
        %v5484 = vld [vmem:[%s2 + $0x78] sm:$0xff]
        %v5485 = vld [vmem:[%s3] sm:$0x1]
        %v5487 = vlaneseq
        %v5488 = vshrl.u32 %v5487, 7
        %v5489 = vsub.s32 0, %v5488
        %v5490 = vrot.slane %v5485, %v5489
        %5492 = vmatprep.subr.mxu0 0.0
        %5493 = vmatpush1.msra.mxu0 %v5484
        %5494 = vmatprep.subr.mxu0 0.0
        %5495 = vmatpush1.msra.mxu0 %v5483
        %5496 = vmatprep.subr.mxu0 0.0
        %5497 = vmatpush1.msra.mxu0 %v5482
        %5498 = vmatprep.subr.mxu0 0.0
        %5499 = vmatpush1.msra.mxu0 %v5481
        %5500 = vmatprep.subr.mxu0 0.0
        %5501 = vmatpush1.msra.mxu0 %v5480
        %5502 = vmatprep.subr.mxu0 0.0
        %5503 = vmatpush1.msra.mxu0 %v5479
        %5504 = vmatprep.subr.mxu0 0.0
        %5505 = vmatpush1.msra.mxu0 %v5478
        %5506 = vmatprep.subr.mxu0 0.0
        %5507 = vmatpush1.msra.mxu0 %v5477
        %5508 = vmatprep.subr.mxu0 0.0
        %5509 = vmatpush1.msra.mxu0 %v5476
        %5510 = vmatprep.subr.mxu0 0.0
        %5511 = vmatpush1.msra.mxu0 %v5475
        %5512 = vmatprep.subr.mxu0 0.0
        %5513 = vmatpush1.msra.mxu0 %v5474
        %5514 = vmatprep.subr.mxu0 0.0
        %5515 = vmatpush1.msra.mxu0 %v5473
        %5516 = vmatprep.subr.mxu0 0.0
        %5517 = vmatpush1.msra.mxu0 %v5472
        %5518 = vmatprep.subr.mxu0 0.0
        %5519 = vmatpush1.msra.mxu0 %v5471
        %5520 = vmatprep.subr.mxu0 0.0
        %5521 = vmatpush1.msra.mxu0 %v5470
        %5522 = vmatprep.subr.mxu0 0.0
        %5523 = vmatpush1.msra.mxu0 %v5469
        %5524 = vmatprep.subr.mxu0 0.0
        %5525 = vmatpush2.msra.mxu0 0.0
        %5526 = vmatprep.subr.mxu0 0.0
        %5527 = vmatpush2.msra.mxu0 0.0
        %5528 = vmatprep.subr.mxu0 0.0
        %5529 = vmatpush2.msra.mxu0 0.0
        %5530 = vmatprep.subr.mxu0 0.0
        %5531 = vmatpush2.msra.mxu0 0.0
        %5532 = vmatprep.subr.mxu0 0.0
        %5533 = vmatpush2.msra.mxu0 0.0
        %5534 = vmatprep.subr.mxu0 0.0
        %5535 = vmatpush2.msra.mxu0 0.0
        %5536 = vmatprep.subr.mxu0 0.0
        %5537 = vmatpush2.msra.mxu0 0.0
        %5538 = vmatprep.subr.mxu0 0.0
        %5539 = vmatpush2.msra.mxu0 0.0
        %5540 = vmatprep.subr.mxu0 0.0
        %5541 = vmatpush2.msra.mxu0 0.0
        %5542 = vmatprep.subr.mxu0 0.0
        %5543 = vmatpush2.msra.mxu0 0.0
        %5544 = vmatprep.subr.mxu0 0.0
        %5545 = vmatpush2.msra.mxu0 0.0
        %5546 = vmatprep.subr.mxu0 0.0
        %5547 = vmatpush2.msra.mxu0 0.0
        %5548 = vmatprep.subr.mxu0 0.0
        %5549 = vmatpush2.msra.mxu0 0.0
        %5550 = vmatprep.subr.mxu0 0.0
        %5551 = vmatpush2.msra.mxu0 0.0
        %5552 = vmatprep.subr.mxu0 0.0
        %5553 = vmatpush2.msra.mxu0 0.0
        %5554 = vmatprep.subr.mxu0 0.0
        %5555 = vmatpush2.msra.mxu0 0.0
        %5556 = vmatprep.mubr.f32.mxu0 0.0
        %5557 = vmatmul.mubr.f32.gmra.mxu0 %v5453
        %v5558 = vpop.f32.mrf.mxu0
        %v5559 = vadd.f32 %v5490, %v5558
        %v5560 = vpop.f32.mrf.mxu0
        %5561 = vmatprep.mubr.f32.mxu0 0.0
        %5562 = vmatmul.mubr.f32.gmra.mxu0 %v5454
        %v5563 = vpop.f32.mrf.mxu0
        %v5564 = vadd.f32 %v5490, %v5563
        %v5565 = vpop.f32.mrf.mxu0
        %5566 = vmatprep.mubr.f32.mxu0 0.0
        %5567 = vmatmul.mubr.f32.gmra.mxu0 %v5455
        %v5568 = vpop.f32.mrf.mxu0
        %v5569 = vadd.f32 %v5490, %v5568
        %v5570 = vpop.f32.mrf.mxu0
        %5571 = vmatprep.mubr.f32.mxu0 0.0
        %5572 = vmatmul.mubr.f32.gmra.mxu0 %v5456
        %v5573 = vpop.f32.mrf.mxu0
        %v5574 = vadd.f32 %v5490, %v5573
        %v5575 = vpop.f32.mrf.mxu0
        %5576 = vmatprep.mubr.f32.mxu0 0.0
        %5577 = vmatmul.mubr.f32.gmra.mxu0 %v5457
        %v5578 = vpop.f32.mrf.mxu0
        %v5579 = vadd.f32 %v5490, %v5578
        %v5580 = vpop.f32.mrf.mxu0
        %5581 = vmatprep.mubr.f32.mxu0 0.0
        %5582 = vmatmul.mubr.f32.gmra.mxu0 %v5458
        %v5583 = vpop.f32.mrf.mxu0
        %v5584 = vadd.f32 %v5490, %v5583
        %v5585 = vpop.f32.mrf.mxu0
        %5586 = vmatprep.mubr.f32.mxu0 0.0
        %5587 = vmatmul.mubr.f32.gmra.mxu0 %v5459
        %v5588 = vpop.f32.mrf.mxu0
        %v5589 = vadd.f32 %v5490, %v5588
        %v5590 = vpop.f32.mrf.mxu0
        %5591 = vmatprep.mubr.f32.mxu0 0.0
        %5592 = vmatmul.mubr.f32.gmra.mxu0 %v5460
        %v5593 = vpop.f32.mrf.mxu0
        %v5594 = vadd.f32 %v5490, %v5593
        %v5595 = vpop.f32.mrf.mxu0
        %5596 = vmatprep.mubr.f32.mxu0 0.0
        %5597 = vmatmul.mubr.f32.gmra.mxu0 %v5461
        %v5598 = vpop.f32.mrf.mxu0
        %v5599 = vadd.f32 %v5490, %v5598
        %v5600 = vpop.f32.mrf.mxu0
        %5601 = vmatprep.mubr.f32.mxu0 0.0
        %5602 = vmatmul.mubr.f32.gmra.mxu0 %v5462
        %v5603 = vpop.f32.mrf.mxu0
        %v5604 = vadd.f32 %v5490, %v5603
        %v5605 = vpop.f32.mrf.mxu0
        %5606 = vmatprep.mubr.f32.mxu0 0.0
        %5607 = vmatmul.mubr.f32.gmra.mxu0 %v5463
        %v5608 = vpop.f32.mrf.mxu0
        %v5609 = vadd.f32 %v5490, %v5608
        %v5610 = vpop.f32.mrf.mxu0
        %5611 = vmatprep.mubr.f32.mxu0 0.0
        %5612 = vmatmul.mubr.f32.gmra.mxu0 %v5464
        %v5613 = vpop.f32.mrf.mxu0
        %v5614 = vadd.f32 %v5490, %v5613
        %v5615 = vpop.f32.mrf.mxu0
        %5616 = vmatprep.mubr.f32.mxu0 0.0
        %5617 = vmatmul.mubr.f32.gmra.mxu0 %v5465
        %v5618 = vpop.f32.mrf.mxu0
        %v5619 = vadd.f32 %v5490, %v5618
        %v5620 = vpop.f32.mrf.mxu0
        %5621 = vmatprep.mubr.f32.mxu0 0.0
        %5622 = vmatmul.mubr.f32.gmra.mxu0 %v5466
        %v5623 = vpop.f32.mrf.mxu0
        %v5624 = vadd.f32 %v5490, %v5623
        %v5625 = vpop.f32.mrf.mxu0
        %5626 = vmatprep.mubr.f32.mxu0 0.0
        %5627 = vmatmul.mubr.f32.gmra.mxu0 %v5467
        %v5628 = vpop.f32.mrf.mxu0
        %v5629 = vadd.f32 %v5490, %v5628
        %v5630 = vpop.f32.mrf.mxu0
        %5631 = vmatprep.mubr.f32.mxu0 0.0
        %5632 = vmatmul.mubr.f32.gmra.mxu0 %v5468
        %v5633 = vpop.f32.mrf.mxu0
        %v5634 = vadd.f32 %v5490, %v5633
        %v5635 = vpop.f32.mrf.mxu0
        %5636 = vdwg.mxu0
        %5637 = vmax.xlane.f32.xlu0 %v5559
        %v5638 = vpop.xlane.xlu0 %5637
        %5639 = vmax.xlane.f32.xlu0 %v5564
        %v5640 = vpop.xlane.xlu0 %5639
        %5641 = vmax.xlane.f32.xlu0 %v5569
        %v5642 = vpop.xlane.xlu0 %5641
        %5643 = vmax.xlane.f32.xlu0 %v5574
        %v5644 = vpop.xlane.xlu0 %5643
        %5645 = vmax.xlane.f32.xlu0 %v5579
        %v5646 = vpop.xlane.xlu0 %5645
        %5647 = vmax.xlane.f32.xlu0 %v5584
        %v5648 = vpop.xlane.xlu0 %5647
        %5649 = vmax.xlane.f32.xlu0 %v5589
        %v5650 = vpop.xlane.xlu0 %5649
        %5651 = vmax.xlane.f32.xlu0 %v5594
        %v5652 = vpop.xlane.xlu0 %5651
        %5653 = vmax.xlane.f32.xlu0 %v5599
        %v5654 = vpop.xlane.xlu0 %5653
        %5655 = vmax.xlane.f32.xlu0 %v5604
        %v5656 = vpop.xlane.xlu0 %5655
        %5657 = vmax.xlane.f32.xlu0 %v5609
        %v5658 = vpop.xlane.xlu0 %5657
        %5659 = vmax.xlane.f32.xlu0 %v5614
        %v5660 = vpop.xlane.xlu0 %5659
        %5661 = vmax.xlane.f32.xlu0 %v5619
        %v5662 = vpop.xlane.xlu0 %5661
        %5663 = vmax.xlane.f32.xlu0 %v5624
        %v5664 = vpop.xlane.xlu0 %5663
        %5665 = vmax.xlane.f32.xlu0 %v5629
        %v5666 = vpop.xlane.xlu0 %5665
        %5667 = vmax.xlane.f32.xlu0 %v5634
        %v5668 = vpop.xlane.xlu0 %5667
        %v5669 = vsub.f32 %v5559, %v5638
        %v5670 = vsub.f32 %v5564, %v5640
        %v5671 = vsub.f32 %v5569, %v5642
        %v5672 = vsub.f32 %v5574, %v5644
        %v5673 = vsub.f32 %v5579, %v5646
        %v5674 = vsub.f32 %v5584, %v5648
        %v5675 = vsub.f32 %v5589, %v5650
        %v5676 = vsub.f32 %v5594, %v5652
        %v5677 = vsub.f32 %v5599, %v5654
        %v5678 = vsub.f32 %v5604, %v5656
        %v5679 = vsub.f32 %v5609, %v5658
        %v5680 = vsub.f32 %v5614, %v5660
        %v5681 = vsub.f32 %v5619, %v5662
        %v5682 = vsub.f32 %v5624, %v5664
        %v5683 = vsub.f32 %v5629, %v5666
        %v5684 = vsub.f32 %v5634, %v5668
        %v5685 = vmul.f32 %v5669, 1.442695
        %v5686 = vpow.pop %v5685
        %v5687 = vmul.f32 %v5670, 1.442695
        %v5688 = vpow.pop %v5687
        %v5689 = vmul.f32 %v5671, 1.442695
        %v5690 = vpow.pop %v5689
        %v5691 = vmul.f32 %v5672, 1.442695
        %v5692 = vpow.pop %v5691
        %v5693 = vmul.f32 %v5673, 1.442695
        %v5694 = vpow.pop %v5693
        %v5695 = vmul.f32 %v5674, 1.442695
        %v5696 = vpow.pop %v5695
        %v5697 = vmul.f32 %v5675, 1.442695
        %v5698 = vpow.pop %v5697
        %v5699 = vmul.f32 %v5676, 1.442695
        %v5700 = vpow.pop %v5699
        %v5701 = vmul.f32 %v5677, 1.442695
        %v5702 = vpow.pop %v5701
        %v5703 = vmul.f32 %v5678, 1.442695
        %v5704 = vpow.pop %v5703
        %v5705 = vmul.f32 %v5679, 1.442695
        %v5706 = vpow.pop %v5705
        %v5707 = vmul.f32 %v5680, 1.442695
        %v5708 = vpow.pop %v5707
        %v5709 = vmul.f32 %v5681, 1.442695
        %v5710 = vpow.pop %v5709
        %v5711 = vmul.f32 %v5682, 1.442695
        %v5712 = vpow.pop %v5711
        %v5713 = vmul.f32 %v5683, 1.442695
        %v5714 = vpow.pop %v5713
        %v5715 = vmul.f32 %v5684, 1.442695
        %v5716 = vpow.pop %v5715
        %5717 = vadd.xlane.f32.xlu0 %v5686
        %v5718 = vpop.xlane.xlu0 %5717
        %5719 = vadd.xlane.f32.xlu0 %v5688
        %v5720 = vpop.xlane.xlu0 %5719
        %5721 = vadd.xlane.f32.xlu0 %v5690
        %v5722 = vpop.xlane.xlu0 %5721
        %5723 = vadd.xlane.f32.xlu0 %v5692
        %v5724 = vpop.xlane.xlu0 %5723
        %5725 = vadd.xlane.f32.xlu0 %v5694
        %v5726 = vpop.xlane.xlu0 %5725
        %5727 = vadd.xlane.f32.xlu0 %v5696
        %v5728 = vpop.xlane.xlu0 %5727
        %5729 = vadd.xlane.f32.xlu0 %v5698
        %v5730 = vpop.xlane.xlu0 %5729
        %5731 = vadd.xlane.f32.xlu0 %v5700
        %v5732 = vpop.xlane.xlu0 %5731
        %5733 = vadd.xlane.f32.xlu0 %v5702
        %v5734 = vpop.xlane.xlu0 %5733
        %5735 = vadd.xlane.f32.xlu0 %v5704
        %v5736 = vpop.xlane.xlu0 %5735
        %5737 = vadd.xlane.f32.xlu0 %v5706
        %v5738 = vpop.xlane.xlu0 %5737
        %5739 = vadd.xlane.f32.xlu0 %v5708
        %v5740 = vpop.xlane.xlu0 %5739
        %5741 = vadd.xlane.f32.xlu0 %v5710
        %v5742 = vpop.xlane.xlu0 %5741
        %5743 = vadd.xlane.f32.xlu0 %v5712
        %v5744 = vpop.xlane.xlu0 %5743
        %5745 = vadd.xlane.f32.xlu0 %v5714
        %v5746 = vpop.xlane.xlu0 %5745
        %5747 = vadd.xlane.f32.xlu0 %v5716
        %v5748 = vpop.xlane.xlu0 %5747
        %v5749 = vlog2.pop %v5718
        %v5750 = vmul.f32 %v5749, 0.6931472
        %v5751 = vlog2.pop %v5720
        %v5752 = vmul.f32 %v5751, 0.6931472
        %v5753 = vlog2.pop %v5722
        %v5754 = vmul.f32 %v5753, 0.6931472
        %v5755 = vlog2.pop %v5724
        %v5756 = vmul.f32 %v5755, 0.6931472
        %v5757 = vlog2.pop %v5726
        %v5758 = vmul.f32 %v5757, 0.6931472
        %v5759 = vlog2.pop %v5728
        %v5760 = vmul.f32 %v5759, 0.6931472
        %v5761 = vlog2.pop %v5730
        %v5762 = vmul.f32 %v5761, 0.6931472
        %v5763 = vlog2.pop %v5732
        %v5764 = vmul.f32 %v5763, 0.6931472
        %v5765 = vlog2.pop %v5734
        %v5766 = vmul.f32 %v5765, 0.6931472
        %v5767 = vlog2.pop %v5736
        %v5768 = vmul.f32 %v5767, 0.6931472
        %v5769 = vlog2.pop %v5738
        %v5770 = vmul.f32 %v5769, 0.6931472
        %v5771 = vlog2.pop %v5740
        %v5772 = vmul.f32 %v5771, 0.6931472
        %v5773 = vlog2.pop %v5742
        %v5774 = vmul.f32 %v5773, 0.6931472
        %v5775 = vlog2.pop %v5744
        %v5776 = vmul.f32 %v5775, 0.6931472
        %v5777 = vlog2.pop %v5746
        %v5778 = vmul.f32 %v5777, 0.6931472
        %v5779 = vlog2.pop %v5748
        %v5780 = vmul.f32 %v5779, 0.6931472
        %v5781 = vsub.f32 %v5669, %v5750
        %v5782 = vsub.f32 %v5670, %v5752
        %v5783 = vsub.f32 %v5671, %v5754
        %v5784 = vsub.f32 %v5672, %v5756
        %v5785 = vsub.f32 %v5673, %v5758
        %v5786 = vsub.f32 %v5674, %v5760
        %v5787 = vsub.f32 %v5675, %v5762
        %v5788 = vsub.f32 %v5676, %v5764
        %v5789 = vsub.f32 %v5677, %v5766
        %v5790 = vsub.f32 %v5678, %v5768
        %v5791 = vsub.f32 %v5679, %v5770
        %v5792 = vsub.f32 %v5680, %v5772
        %v5793 = vsub.f32 %v5681, %v5774
        %v5794 = vsub.f32 %v5682, %v5776
        %v5795 = vsub.f32 %v5683, %v5778
        %v5796 = vsub.f32 %v5684, %v5780
        %5797 = vst [vmem:[%s206] sm:$0xff] %v5781
        %5798 = vst [vmem:[%s206 + $0x8] sm:$0xff] %v5782
        %5799 = vst [vmem:[%s206 + $0x10] sm:$0xff] %v5783
        %5800 = vst [vmem:[%s206 + $0x18] sm:$0xff] %v5784
        %5801 = vst [vmem:[%s206 + $0x20] sm:$0xff] %v5785
        %5802 = vst [vmem:[%s206 + $0x28] sm:$0xff] %v5786
        %5803 = vst [vmem:[%s206 + $0x30] sm:$0xff] %v5787
        %5804 = vst [vmem:[%s206 + $0x38] sm:$0xff] %v5788
        %5805 = vst [vmem:[%s206 + $0x40] sm:$0xff] %v5789
        %5806 = vst [vmem:[%s206 + $0x48] sm:$0xff] %v5790
        %5807 = vst [vmem:[%s206 + $0x50] sm:$0xff] %v5791
        %5808 = vst [vmem:[%s206 + $0x58] sm:$0xff] %v5792
        %5809 = vst [vmem:[%s206 + $0x60] sm:$0xff] %v5793
        %5810 = vst [vmem:[%s206 + $0x68] sm:$0xff] %v5794
        %5811 = vst [vmem:[%s206 + $0x70] sm:$0xff] %v5795
        %5812 = vst [vmem:[%s206 + $0x78] sm:$0xff] %v5796
        %s5813 = sand.u32 %s116, 1
        %s5814 = scalar_lea.sflag [#allocation4], %s5813
        %s5815 = sand.u32 %s116, 1
        %s5816 = smul.addr %s5815, 128
        %s5817 = scalar_lea.vmem [#allocation5], %s5816
        // Predicated region
        $region41: #{tpu_custom_call.1} parent=35 // pred_check
          %p5818 = pneg %p126
        $region42: #{tpu_custom_call.1} parent=35 // pred_check_branch
          %5820 = sbr.rel (%p5818) target = $region44
        $region43: #{tpu_custom_call.1} parent=35 // pred_region
          %s5821 = smul.u32 16, %s19
          %s5823 = ssub.s32 2048, 2048
          %5824 = vsyncadd %s5814, %s5823
          %s5825 = smul.addr %s5821, 128
          %s5826 = scalar_lea.hbm %s4, %s5825
          %s5827 = sshll.u32 %s5817, 4
          %s5828 = int_to_ptr.vmem [resolvable:$true] %s5827
          %5833 = dma.vmem_to_hbm [thread:$0]  %s5828, 2048, %s5826, %s5814, 128, 128, 8
        $region44: #{tpu_custom_call.1} parent=35 // pred_fallthru
          _
      $region36: #{tpu_custom_call.1} parent=5 // pred_fallthru
        _
      %p5834 = scmp.le.s32.totalorder 2, %s14
      // Predicated region
      $region45: #{tpu_custom_call.1} parent=5 // pred_check
        %p5835 = pneg %p5834
      $region46: #{tpu_custom_call.1} parent=5 // pred_check_branch
        %5837 = sbr.rel (%p5835) target = $region48
      $region47: #{tpu_custom_call.1} parent=5 // pred_region
        %s5838 = ssub.s32 %s14, 2
        // Predicated region
        $region49: #{tpu_custom_call.1} parent=47 // pred_check
          %p5839 = pneg %p132
        $region50: #{tpu_custom_call.1} parent=47 // pred_check_branch
          %5841 = sbr.rel (%p5839) target = $region52
        $region51: #{tpu_custom_call.1} parent=47 // pred_region
          %s5842 = sand.u32 %s117, 1
          %s5843 = scalar_lea.sflag [#allocation4], %s5842
          %s5844 = sand.u32 %s117, 1
          %s5845 = smul.addr %s5844, 128
          %s5846 = scalar_lea.vmem [#allocation5], %s5845
          %5847 = dma.done %s5843, 2048
        $region52: #{tpu_custom_call.1} parent=47 // pred_fallthru
          _
      $region48: #{tpu_custom_call.1} parent=5 // pred_fallthru
        _
    $region6: #{tpu_custom_call.1} parent=1 // loop_footer
      %s18 = sadd.s32 1, %s14
    $region7: #{tpu_custom_call.1} parent=1 // loop_footer_branch
      %13 = sbr.rel target = $region3
    $region8: #{tpu_custom_call.1} parent=1 // loop_exit
      _
    %5848 = vsyncpa [#allocation3], 1
    %s5849 = scalar_lea.sflag [#allocation3], 1
    %5850 = vsyncpa %s5849, 1
    %5851 = vsyncpa [#allocation4], 1
    %s5852 = scalar_lea.sflag [#allocation4], 1
    %5853 = vsyncpa %s5852, 1

</llo_original>
